<compile_context>
chip_gen: v6e
topology: v6e:2x2x1
jax: 0.10.0
libtpu: 0.0.40
codegen_flags: <defaults>
</compile_context>

<pallas_src>
import functools

import jax
import jax.numpy as jnp
from jax.experimental import pallas as pl
from jax.experimental.pallas import tpu as pltpu


def _round_up(x, m):
    return ((x + m - 1) // m) * m


def _round_down_128(x):
    return max(128, (x // 128) * 128)


def _triplet_kernel(emb_row_ref, embT_col_ref, hsq_row_ref, hsq_col_ref,
                    lab_row_ref, lab_col_ref, out_ref,
                    gram_acc, hp_acc, hn_acc, *, margin, n_valid):
    i = pl.program_id(0)
    j = pl.program_id(1)
    k = pl.program_id(2)
    ncb = pl.num_programs(1)
    nkb = pl.num_programs(2)

    @pl.when((j == 0) & (k == 0))
    def _init_row_state():
        hp_acc[...] = jnp.full(hp_acc.shape, -jnp.inf, jnp.float32)
        hn_acc[...] = jnp.full(hn_acc.shape, jnp.inf, jnp.float32)

    @pl.when(k == 0)
    def _init_gram():
        gram_acc[...] = jnp.zeros(gram_acc.shape, jnp.float32)

    # (tm, tk) x (tk, tn) on the MXU (operands already in their streaming dtype:
    # f32 or bf16, cast in the wrapper), f32 accumulation.
    gram_acc[...] += jax.lax.dot_general(
        emb_row_ref[...], embT_col_ref[...],
        (((1,), (0,)), ((), ())),
        preferred_element_type=jnp.float32)

    @pl.when(k == nkb - 1)
    def _mine():
        # Monotone surrogate of squared distance (row-constant term added later).
        # Padded columns carry hsq_col = +inf, so they can never win the negative
        # min; padded-column labels are a sentinel so they never match a valid
        # row for the positive max.
        t = hsq_col_ref[...] - gram_acc[...]                      # (tm, tn)
        sim = lab_row_ref[...] == lab_col_ref[...]                # (tm, tn) bool
        hp_acc[...] = jnp.maximum(
            hp_acc[...],
            jnp.max(jnp.where(sim, t, -jnp.inf), axis=1, keepdims=True))
        hn_acc[...] = jnp.minimum(
            hn_acc[...],
            jnp.min(jnp.where(sim, jnp.inf, t), axis=1, keepdims=True))

    @pl.when((j == ncb - 1) & (k == nkb - 1))
    def _finalize():
        tm = hp_acc.shape[0]
        hsq_i = hsq_row_ref[...]                                  # (tm,1) = 0.5*||x||^2
        hard_p = jnp.sqrt(jnp.maximum(2.0 * (hsq_i + hp_acc[...]), 1e-12))
        hard_n = jnp.sqrt(jnp.maximum(2.0 * (hsq_i + hn_acc[...]), 1e-12))

        row_ids = i * tm + jax.lax.broadcasted_iota(jnp.int32, (tm, 1), 0)
        row_valid = row_ids < n_valid                             # mask padded rows

        # MarginRankingLoss(margin)(hard_n, hard_p, y=1) summed over valid rows,
        # plus the count of hard_n > hard_p (precision).  Use where (not *mask)
        # so padded rows (hard_p = +inf) never produce inf*0 = NaN.
        per_loss = jnp.where(row_valid,
                             jnp.maximum(margin - (hard_n - hard_p), 0.0), 0.0)
        per_prec = jnp.where(row_valid & (hard_n > hard_p), 1.0, 0.0)

        loss_sum = jnp.sum(per_loss)
        prec_sum = jnp.sum(per_prec)

        sub = jax.lax.broadcasted_iota(jnp.int32, out_ref.shape, 1)
        out_ref[...] = jnp.where(sub == 0, loss_sum,
                                 jnp.where(sub == 1, prec_sum, 0.0))


def triplet_loss_pallas(emb, label, margin=0.3, normalize_feature=False,
                        block_m=512, block_n=1024, block_k=2048,
                        use_bf16_gram=False, row_single_buffer=True,
                        vmem_limit_bytes=None):
    """emb: (N, D) float, label: (N,) int.  Returns (loss, prec) scalars."""
    emb = jnp.asarray(emb, jnp.float32)
    label = jnp.asarray(label, jnp.int32)
    if normalize_feature:
        emb = emb / jnp.maximum(jnp.linalg.norm(emb, axis=1, keepdims=True), 1e-12)

    n, d = emb.shape
    n128 = _round_up(n, 128)
    d128 = _round_up(d, 128)
    esize = 2 if use_bf16_gram else 4

    # --- generation-aware VMEM budget (v7x: 64 MiB, v5e/v6e: 128 MiB) -----------
    if vmem_limit_bytes is None:
        try:
            cap = int(getattr(pltpu.get_tpu_info(), "vmem_capacity_bytes", 0) or 0)
        except Exception:
            cap = 0
        if cap <= 0:
            cap = 64 * 1024 * 1024          # conservative (v7x-sized) fallback
        vmem_limit_bytes = (cap * 3) // 4   # leave 25% headroom
    budget = int(vmem_limit_bytes)

    tm = _round_down_128(min(block_m, n128))
    tn = _round_down_128(min(block_n, n128))
    tk = _round_down_128(min(block_k, d128))

    def _cost(tm_, tn_, tk_):
        nkb_ = -(-d128 // tk_)
        row_buf = 1 if (row_single_buffer and nkb_ == 1) else 2
        c = tm_ * tk_ * esize * row_buf          # emb row tile
        c += tk_ * tn_ * esize * 2               # emb^T col tile (double buffered)
        c += tm_ * tn_ * 4                       # f32 gram accumulator
        c += 2 * tm_ * 4                         # hp / hn running extrema
        c += 2 * 2 * (tm_ + tn_) * 4             # hsq / label row & col tiles
        c += 2 * 8 * 128 * 4                     # lane-dense output block
        return c

    def _halve(v):
        return max(128, ((v // 2) // 128) * 128)

    # Shrink tn first (keeps the tm that sets arithmetic intensity), then tk, then tm.
    while _cost(tm, tn, tk) > budget:
        if tn > 128:
            tn = _halve(tn)
        elif tk > 128:
            tk = _halve(tk)
        elif tm > 128:
            tm = _halve(tm)
        else:
            break

    # Make the larger of (tm, tn) a multiple of the smaller so a single N pad
    # divides both (no lcm blow-up).
    if tn >= tm:
        tn = max(tm, (tn // tm) * tm)
    else:
        tm = max(tn, (tm // tn) * tn)

    n_pad = _round_up(n, max(tm, tn))
    nrb = n_pad // tm
    # Best effort: even number of row blocks so the "parallel" axis splits across
    # both v7x TensorCores (no-op on single-TC v5e/v6e).
    if nrb > 1 and nrb % 2 == 1 and tm % 256 == 0:
        tm //= 2
        nrb = n_pad // tm
    ncb = n_pad // tn

    # Minimal-padding contraction tiling: d_pad = nkb * tk >= d, tk multiple of 128.
    nkb = -(-d128 // tk)
    tk = _round_up(-(-d128 // nkb), 128)
    d_pad = nkb * tk

    # --- operand preparation -----------------------------------------------------
    emb_p = jnp.zeros((n_pad, d_pad), jnp.float32).at[:n, :d].set(emb)
    half_sq = 0.5 * jnp.sum(emb_p * emb_p, axis=1)               # always from f32 source
    col_valid = jnp.arange(n_pad) < n
    half_sq_col = jnp.where(col_valid, half_sq, jnp.inf)         # poison padded columns

    pad_lab = jnp.min(label) - 1                                  # never matches a real id
    lab_p = jnp.full((n_pad,), 0, jnp.int32) * 0 + pad_lab
    lab_p = lab_p.at[:n].set(label)

    mxu_dtype = jnp.bfloat16 if use_bf16_gram else jnp.float32
    emb_s = emb_p.astype(mxu_dtype)                               # streamed row operand
    emb_sT = emb_s.T                                              # pre-transposed col operand

    kernel = functools.partial(_triplet_kernel, margin=float(margin), n_valid=n)

    def _bspec(shape, index_map, buffer_count=None):
        if buffer_count is not None and hasattr(pl, "Buffered"):
            try:
                return pl.BlockSpec(shape, index_map,
                                    pipeline_mode=pl.Buffered(buffer_count))
            except Exception:
                pass
        return pl.BlockSpec(shape, index_map)

    def _run(single_buffer_rows):
        rb = 1 if single_buffer_rows else None
        emb_rb = rb if nkb == 1 else None   # row emb tile also moves with k when nkb > 1
        in_specs = [
            _bspec((tm, tk), lambda i, j, k: (i, k), emb_rb),     # emb rows
            _bspec((tk, tn), lambda i, j, k: (k, j)),             # emb^T cols
            _bspec((tm, 1), lambda i, j, k: (i, 0), rb),          # 0.5*||x||^2 rows
            _bspec((1, tn), lambda i, j, k: (0, j)),              # 0.5*||y||^2 cols (+inf pad)
            _bspec((tm, 1), lambda i, j, k: (i, 0), rb),          # labels rows
            _bspec((1, tn), lambda i, j, k: (0, j)),              # labels cols
        ]
        return pl.pallas_call(
            kernel,
            out_shape=jax.ShapeDtypeStruct((nrb, 8, 128), jnp.float32),
            grid_spec=pltpu.PrefetchScalarGridSpec(
                num_scalar_prefetch=0,
                grid=(nrb, ncb, nkb),
                in_specs=in_specs,
                out_specs=pl.BlockSpec((1, 8, 128), lambda i, j, k: (i, 0, 0)),
                scratch_shapes=[pltpu.VMEM((tm, tn), jnp.float32),   # gram accumulator
                                pltpu.VMEM((tm, 1), jnp.float32),    # running max (pos)
                                pltpu.VMEM((tm, 1), jnp.float32)],   # running min (neg)
            ),
            compiler_params=pltpu.CompilerParams(
                dimension_semantics=("parallel", "arbitrary", "arbitrary"),
                vmem_limit_bytes=int(vmem_limit_bytes)),
        )(emb_s, emb_sT,
          half_sq.reshape(n_pad, 1), half_sq_col.reshape(1, n_pad),
          lab_p.reshape(n_pad, 1), lab_p.reshape(1, n_pad))

    if row_single_buffer:
        try:
            parts = _run(True)
        except Exception:
            # jax version without Buffered(1) support: fall back to default buffering.
            parts = _run(False)
    else:
        parts = _run(False)

    loss = jnp.sum(parts[:, 0, 0]) / n
    prec = jnp.sum(parts[:, 1, 0]) / n
    return loss, prec


def _triplet_loss_ref(emb, label, margin):
    """Pure-JAX reference mirroring the PyTorch module."""
    emb = emb.astype(jnp.float32)
    sq = jnp.sum(emb * emb, axis=1)
    gram = jnp.dot(emb, emb.T, precision=jax.lax.Precision.HIGHEST)
    dist2 = sq[:, None] + sq[None, :] - 2.0 * gram
    dist = jnp.sqrt(jnp.maximum(dist2, 1e-12))
    sim = (label[:, None] == label[None, :]).astype(jnp.float32)
    hard_p = jnp.max(dist - 9999999.0 * (1.0 - sim), axis=1)
    hard_n = jnp.min(dist + 9999999.0 * sim, axis=1)
    loss = jnp.mean(jnp.maximum(margin - (hard_n - hard_p), 0.0))
    prec = jnp.mean((hard_n > hard_p).astype(jnp.float32))
    return loss, prec


if __name__ == "__main__":
    MARGIN = 0.3
    key = jax.random.PRNGKey(0)
    k1, k2, k3 = jax.random.split(key, 3)

    # Test 1: tiny shapes from the original module usage (single grid block, heavy padding).
    emb1 = jax.random.normal(k1, (8, 32), dtype=jnp.float32)
    lab1 = jnp.array([0, 0, 1, 1, 2, 2, 3, 3], dtype=jnp.int32)
    loss1, prec1 = jax.block_until_ready(triplet_loss_pallas(emb1, lab1, margin=MARGIN))
    rl1, rp1 = _triplet_loss_ref(emb1, lab1, MARGIN)
    assert jnp.allclose(loss1, rl1, rtol=1e-5, atol=1e-5), (loss1, rl1)
    assert jnp.allclose(prec1, rp1, rtol=1e-5, atol=1e-5), (prec1, rp1)

    # Test 2: 2x2 row/col grid, N padding, row/col masking, even-nrb path.
    n2, d2 = 200, 48
    emb2 = jax.random.normal(k2, (n2, d2), dtype=jnp.float32)
    lab2 = jnp.arange(n2, dtype=jnp.int32) // 5          # 40 identities x 5 samples
    loss2, prec2 = jax.block_until_ready(
        triplet_loss_pallas(emb2, lab2, margin=MARGIN, block_m=128, block_n=128))
    rl2, rp2 = _triplet_loss_ref(emb2, lab2, MARGIN)
    assert jnp.allclose(loss2, rl2, rtol=1e-5, atol=1e-5), (loss2, rl2)
    assert jnp.allclose(prec2, rp2, rtol=1e-5, atol=1e-5), (prec2, rp2)

    # Test 3: bf16 streaming of the gram operands (norm terms stay f32), loose tolerance.
    loss3, prec3 = jax.block_until_ready(
        triplet_loss_pallas(emb2, lab2, margin=MARGIN, block_m=128, block_n=128,
                            use_bf16_gram=True))
    assert jnp.allclose(loss3, rl2, rtol=5e-2, atol=5e-2), (loss3, rl2)
    assert jnp.allclose(prec3, rp2, atol=1e-1), (prec3, rp2)

    # Test 4: contraction (D) tiling — d_pad=384 split into 3 k-blocks with a VMEM
    # gram accumulator.
    n4, d4 = 96, 320
    emb4 = jax.random.normal(k3, (n4, d4), dtype=jnp.float32)
    lab4 = jnp.arange(n4, dtype=jnp.int32) // 4
    loss4, prec4 = jax.block_until_ready(
        triplet_loss_pallas(emb4, lab4, margin=MARGIN, block_k=128))
    rl4, rp4 = _triplet_loss_ref(emb4, lab4, MARGIN)
    assert jnp.allclose(loss4, rl4, rtol=1e-4, atol=1e-4), (loss4, rl4)
    assert jnp.allclose(prec4, rp4, rtol=1e-4, atol=1e-4), (prec4, rp4)

    print("KERNEL_OK")
</pallas_src>

<mosaic_0001>
module attributes {stable_mosaic.version = 11 : i64} {
  func.func @_triplet_kernel(%arg0: i32, %arg1: i32, %arg2: i32, %arg3: memref<128x128xf32, #tpu.memory_space<vmem>>, %arg4: memref<128x128xf32, #tpu.memory_space<vmem>>, %arg5: memref<128x1xf32, #tpu.memory_space<vmem>>, %arg6: memref<1x128xf32, #tpu.memory_space<vmem>>, %arg7: memref<128x1xi32, #tpu.memory_space<vmem>>, %arg8: memref<1x128xi32, #tpu.memory_space<vmem>>, %arg9: memref<1x8x128xf32, #tpu.memory_space<vmem>>, %arg10: memref<128x128xf32, #tpu.memory_space<vmem>>, %arg11: memref<128x1xf32, #tpu.memory_space<vmem>>, %arg12: memref<128x1xf32, #tpu.memory_space<vmem>>) attributes {dimension_semantics = [#tpu.dimension_semantics<parallel>, #tpu.dimension_semantics<arbitrary>, #tpu.dimension_semantics<arbitrary>], iteration_bounds = array<i64: 1, 1, 1>, scalar_prefetch = 0 : i64, scratch_operands = 3 : i64, tpu.core_type = #tpu.core_type<tc>, window_params = [{pipeline_mode = #tpu.pipeline_mode<synchronous>, transform_indices = @transform_0, window_bounds = array<i64: 128, 128>}, {transform_indices = @transform_1, window_bounds = array<i64: 128, 128>}, {pipeline_mode = #tpu.pipeline_mode<synchronous>, transform_indices = @transform_2, window_bounds = array<i64: 128, 1>}, {transform_indices = @transform_3, window_bounds = array<i64: 1, 128>}, {pipeline_mode = #tpu.pipeline_mode<synchronous>, transform_indices = @transform_4, window_bounds = array<i64: 128, 1>}, {transform_indices = @transform_5, window_bounds = array<i64: 1, 128>}, {transform_indices = @transform_6, window_bounds = array<i64: 1, 8, 128>}]} {
    %c0_i32 = arith.constant 0 : i32
    %0 = arith.cmpi eq, %arg1, %c0_i32 : i32
    %c0_i32_0 = arith.constant 0 : i32
    %1 = arith.cmpi eq, %arg2, %c0_i32_0 : i32
    %2 = arith.andi %0, %1 : i1
    %3 = arith.extui %2 : i1 to i32
    %c0_i32_1 = arith.constant 0 : i32
    %4 = arith.cmpi ne, %3, %c0_i32_1 : i32
    scf.if %4 {
      %cst_16 = arith.constant 0xFF800000 : f32
      %22 = vector.broadcast %cst_16 : f32 to vector<128x1xf32>
      %c0_17 = arith.constant 0 : index
      %c0_18 = arith.constant 0 : index
      %23 = vector.load %arg11[%c0_17, %c0_18] : memref<128x1xf32, #tpu.memory_space<vmem>>, vector<128x1xf32>
      tpu.vector_store %arg11[%c0_17, %c0_18], %22 {strides = array<i32>} : memref<128x1xf32, #tpu.memory_space<vmem>>, vector<128x1xf32>,
      %cst_19 = arith.constant 0x7F800000 : f32
      %24 = vector.broadcast %cst_19 : f32 to vector<128x1xf32>
      %c0_20 = arith.constant 0 : index
      %c0_21 = arith.constant 0 : index
      %25 = vector.load %arg12[%c0_20, %c0_21] : memref<128x1xf32, #tpu.memory_space<vmem>>, vector<128x1xf32>
      tpu.vector_store %arg12[%c0_20, %c0_21], %24 {strides = array<i32>} : memref<128x1xf32, #tpu.memory_space<vmem>>, vector<128x1xf32>,
    } else {
    }
    %c0_i32_2 = arith.constant 0 : i32
    %5 = arith.cmpi eq, %arg2, %c0_i32_2 : i32
    %6 = arith.extui %5 : i1 to i32
    %c0_i32_3 = arith.constant 0 : i32
    %7 = arith.cmpi ne, %6, %c0_i32_3 : i32
    scf.if %7 {
      %cst_16 = arith.constant 0.000000e+00 : f32
      %22 = vector.broadcast %cst_16 : f32 to vector<128x128xf32>
      %c0_17 = arith.constant 0 : index
      %c0_18 = arith.constant 0 : index
      %23 = vector.load %arg10[%c0_17, %c0_18] : memref<128x128xf32, #tpu.memory_space<vmem>>, vector<128x128xf32>
      tpu.vector_store %arg10[%c0_17, %c0_18], %22 {strides = array<i32>} : memref<128x128xf32, #tpu.memory_space<vmem>>, vector<128x128xf32>,
    } else {
    }
    %c0 = arith.constant 0 : index
    %c0_4 = arith.constant 0 : index
    %8 = vector.load %arg10[%c0, %c0_4] : memref<128x128xf32, #tpu.memory_space<vmem>>, vector<128x128xf32>
    %c0_5 = arith.constant 0 : index
    %c0_6 = arith.constant 0 : index
    %9 = vector.load %arg3[%c0_5, %c0_6] : memref<128x128xf32, #tpu.memory_space<vmem>>, vector<128x128xf32>
    %c0_7 = arith.constant 0 : index
    %c0_8 = arith.constant 0 : index
    %10 = vector.load %arg4[%c0_7, %c0_8] : memref<128x128xf32, #tpu.memory_space<vmem>>, vector<128x128xf32>
    %cst = arith.constant dense<0.000000e+00> : vector<128x128xf32>
    %11 = tpu.matmul %9, %10, %cst {dimension_numbers = #tpu.dot_dimension_numbers<[1], [0], [0], [1], [0, 0, 1, 1], [], []>} : vector<128x128xf32>, vector<128x128xf32>, vector<128x128xf32> -> vector<128x128xf32>
    %12 = arith.addf %8, %11 : vector<128x128xf32>
    %c0_9 = arith.constant 0 : index
    %c0_10 = arith.constant 0 : index
    %13 = vector.load %arg10[%c0_9, %c0_10] : memref<128x128xf32, #tpu.memory_space<vmem>>, vector<128x128xf32>
    tpu.vector_store %arg10[%c0_9, %c0_10], %12 {strides = array<i32>} : memref<128x128xf32, #tpu.memory_space<vmem>>, vector<128x128xf32>,
    %c0_i32_11 = arith.constant 0 : i32
    %14 = arith.cmpi eq, %arg2, %c0_i32_11 : i32
    %15 = arith.extui %14 : i1 to i32
    %c0_i32_12 = arith.constant 0 : i32
    %16 = arith.cmpi ne, %15, %c0_i32_12 : i32
    scf.if %16 {
      %c0_16 = arith.constant 0 : index
      %c0_17 = arith.constant 0 : index
      %22 = vector.load %arg6[%c0_16, %c0_17] : memref<1x128xf32, #tpu.memory_space<vmem>>, vector<1x128xf32>
      %c0_18 = arith.constant 0 : index
      %c0_19 = arith.constant 0 : index
      %23 = vector.load %arg10[%c0_18, %c0_19] : memref<128x128xf32, #tpu.memory_space<vmem>>, vector<128x128xf32>
      %24 = vector.broadcast %22 : vector<1x128xf32> to vector<128x128xf32>
      %25 = arith.subf %24, %23 : vector<128x128xf32>
      %c0_20 = arith.constant 0 : index
      %c0_21 = arith.constant 0 : index
      %26 = vector.load %arg7[%c0_20, %c0_21] : memref<128x1xi32, #tpu.memory_space<vmem>>, vector<128x1xi32>
      %c0_22 = arith.constant 0 : index
      %c0_23 = arith.constant 0 : index
      %27 = vector.load %arg8[%c0_22, %c0_23] : memref<1x128xi32, #tpu.memory_space<vmem>>, vector<1x128xi32>
      %28 = vector.broadcast %26 : vector<128x1xi32> to vector<128x128xi32>
      %29 = vector.broadcast %27 : vector<1x128xi32> to vector<128x128xi32>
      %30 = arith.cmpi eq, %28, %29 : vector<128x128xi32>
      %c0_24 = arith.constant 0 : index
      %c0_25 = arith.constant 0 : index
      %31 = vector.load %arg11[%c0_24, %c0_25] : memref<128x1xf32, #tpu.memory_space<vmem>>, vector<128x1xf32>
      %cst_26 = arith.constant 0xFF800000 : f32
      %32 = vector.broadcast %cst_26 : f32 to vector<128x128xf32>
      %33 = arith.select %30, %25, %32 : vector<128x128xi1>, vector<128x128xf32>
      %cst_27 = arith.constant dense<0xFF800000> : vector<128xf32>
      %34 = vector.multi_reduction <maximumf>, %33, %cst_27 [1] : vector<128x128xf32> to vector<128xf32>
      %35 = vector.shape_cast %34 : vector<128xf32> to vector<128x1xf32>
      %36 = arith.maximumf %31, %35 : vector<128x1xf32>
      %c0_28 = arith.constant 0 : index
      %c0_29 = arith.constant 0 : index
      %37 = vector.load %arg11[%c0_28, %c0_29] : memref<128x1xf32, #tpu.memory_space<vmem>>, vector<128x1xf32>
      tpu.vector_store %arg11[%c0_28, %c0_29], %36 {strides = array<i32>} : memref<128x1xf32, #tpu.memory_space<vmem>>, vector<128x1xf32>,
      %c0_30 = arith.constant 0 : index
      %c0_31 = arith.constant 0 : index
      %38 = vector.load %arg12[%c0_30, %c0_31] : memref<128x1xf32, #tpu.memory_space<vmem>>, vector<128x1xf32>
      %cst_32 = arith.constant 0x7F800000 : f32
      %39 = vector.broadcast %cst_32 : f32 to vector<128x128xf32>
      %40 = arith.select %30, %39, %25 : vector<128x128xi1>, vector<128x128xf32>
      %cst_33 = arith.constant dense<0x7F800000> : vector<128xf32>
      %41 = vector.multi_reduction <minimumf>, %40, %cst_33 [1] : vector<128x128xf32> to vector<128xf32>
      %42 = vector.shape_cast %41 : vector<128xf32> to vector<128x1xf32>
      %43 = arith.minimumf %38, %42 : vector<128x1xf32>
      %c0_34 = arith.constant 0 : index
      %c0_35 = arith.constant 0 : index
      %44 = vector.load %arg12[%c0_34, %c0_35] : memref<128x1xf32, #tpu.memory_space<vmem>>, vector<128x1xf32>
      tpu.vector_store %arg12[%c0_34, %c0_35], %43 {strides = array<i32>} : memref<128x1xf32, #tpu.memory_space<vmem>>, vector<128x1xf32>,
    } else {
    }
    %c0_i32_13 = arith.constant 0 : i32
    %17 = arith.cmpi eq, %arg1, %c0_i32_13 : i32
    %c0_i32_14 = arith.constant 0 : i32
    %18 = arith.cmpi eq, %arg2, %c0_i32_14 : i32
    %19 = arith.andi %17, %18 : i1
    %20 = arith.extui %19 : i1 to i32
    %c0_i32_15 = arith.constant 0 : i32
    %21 = arith.cmpi ne, %20, %c0_i32_15 : i32
    scf.if %21 {
      %c0_16 = arith.constant 0 : index
      %c0_17 = arith.constant 0 : index
      %22 = vector.load %arg5[%c0_16, %c0_17] : memref<128x1xf32, #tpu.memory_space<vmem>>, vector<128x1xf32>
      %c0_18 = arith.constant 0 : index
      %c0_19 = arith.constant 0 : index
      %23 = vector.load %arg11[%c0_18, %c0_19] : memref<128x1xf32, #tpu.memory_space<vmem>>, vector<128x1xf32>
      %24 = arith.addf %22, %23 : vector<128x1xf32>
      %cst_20 = arith.constant 2.000000e+00 : f32
      %25 = vector.broadcast %cst_20 : f32 to vector<128x1xf32>
      %26 = arith.mulf %25, %24 : vector<128x1xf32>
      %cst_21 = arith.constant 9.99999996E-13 : f32
      %27 = vector.broadcast %cst_21 : f32 to vector<128x1xf32>
      %28 = arith.maximumf %26, %27 : vector<128x1xf32>
      %29 = math.sqrt %28 : vector<128x1xf32>
      %c0_22 = arith.constant 0 : index
      %c0_23 = arith.constant 0 : index
      %30 = vector.load %arg12[%c0_22, %c0_23] : memref<128x1xf32, #tpu.memory_space<vmem>>, vector<128x1xf32>
      %31 = arith.addf %22, %30 : vector<128x1xf32>
      %cst_24 = arith.constant 2.000000e+00 : f32
      %32 = vector.broadcast %cst_24 : f32 to vector<128x1xf32>
      %33 = arith.mulf %32, %31 : vector<128x1xf32>
      %cst_25 = arith.constant 9.99999996E-13 : f32
      %34 = vector.broadcast %cst_25 : f32 to vector<128x1xf32>
      %35 = arith.maximumf %33, %34 : vector<128x1xf32>
      %36 = math.sqrt %35 : vector<128x1xf32>
      %c128_i32 = arith.constant 128 : i32
      %37 = arith.muli %arg0, %c128_i32 : i32
      %38 = tpu.iota {dimensions = array<i32: 0>} : vector<128x1xi32>
      %39 = vector.broadcast %37 : i32 to vector<128x1xi32>
      %40 = arith.addi %39, %38 : vector<128x1xi32>
      %c8_i32 = arith.constant 8 : i32
      %41 = vector.broadcast %c8_i32 : i32 to vector<128x1xi32>
      %42 = arith.cmpi slt, %40, %41 : vector<128x1xi32>
      %43 = arith.subf %36, %29 : vector<128x1xf32>
      %cst_26 = arith.constant 3.000000e-01 : f32
      %44 = vector.broadcast %cst_26 : f32 to vector<128x1xf32>
      %45 = arith.subf %44, %43 : vector<128x1xf32>
      %cst_27 = arith.constant 0.000000e+00 : f32
      %46 = vector.broadcast %cst_27 : f32 to vector<128x1xf32>
      %47 = arith.maximumf %45, %46 : vector<128x1xf32>
      %cst_28 = arith.constant 0.000000e+00 : f32
      %48 = vector.broadcast %cst_28 : f32 to vector<128x1xf32>
      %49 = arith.select %42, %47, %48 : vector<128x1xi1>, vector<128x1xf32>
      %50 = arith.cmpf ogt, %36, %29 : vector<128x1xf32>
      %51 = arith.andi %42, %50 : vector<128x1xi1>
      %cst_29 = arith.constant 1.000000e+00 : f32
      %cst_30 = arith.constant 0.000000e+00 : f32
      %52 = vector.broadcast %cst_29 : f32 to vector<128x1xf32>
      %53 = vector.broadcast %cst_30 : f32 to vector<128x1xf32>
      %54 = arith.select %51, %52, %53 : vector<128x1xi1>, vector<128x1xf32>
      %55 = vector.shape_cast %49 : vector<128x1xf32> to vector<1x128x1xf32>
      %cst_31 = arith.constant dense<0.000000e+00> : vector<1xf32>
      %56 = vector.multi_reduction <add>, %55, %cst_31 [1, 2] : vector<1x128x1xf32> to vector<1xf32>
      %57 = vector.shape_cast %56 : vector<1xf32> to vector<1x1x1xf32>
      %58 = vector.extract %57[0, 0, 0] : f32 from vector<1x1x1xf32>
      %59 = vector.shape_cast %54 : vector<128x1xf32> to vector<1x128x1xf32>
      %cst_32 = arith.constant dense<0.000000e+00> : vector<1xf32>
      %60 = vector.multi_reduction <add>, %59, %cst_32 [1, 2] : vector<1x128x1xf32> to vector<1xf32>
      %61 = vector.shape_cast %60 : vector<1xf32> to vector<1x1x1xf32>
      %62 = vector.extract %61[0, 0, 0] : f32 from vector<1x1x1xf32>
      %63 = tpu.iota {dimensions = array<i32: 1>} : vector<1x8x128xi32>
      %c0_i32_33 = arith.constant 0 : i32
      %64 = vector.broadcast %c0_i32_33 : i32 to vector<1x8x128xi32>
      %65 = arith.cmpi eq, %63, %64 : vector<1x8x128xi32>
      %c1_i32 = arith.constant 1 : i32
      %66 = vector.broadcast %c1_i32 : i32 to vector<1x8x128xi32>
      %67 = arith.cmpi eq, %63, %66 : vector<1x8x128xi32>
      %cst_34 = arith.constant 0.000000e+00 : f32
      %68 = vector.broadcast %62 : f32 to vector<1x8x128xf32>
      %69 = vector.broadcast %cst_34 : f32 to vector<1x8x128xf32>
      %70 = arith.select %67, %68, %69 : vector<1x8x128xi1>, vector<1x8x128xf32>
      %71 = vector.broadcast %58 : f32 to vector<1x8x128xf32>
      %72 = arith.select %65, %71, %70 : vector<1x8x128xi1>, vector<1x8x128xf32>
      %c0_35 = arith.constant 0 : index
      %c0_36 = arith.constant 0 : index
      %c0_37 = arith.constant 0 : index
      %73 = vector.load %arg9[%c0_35, %c0_36, %c0_37] : memref<1x8x128xf32, #tpu.memory_space<vmem>>, vector<1x8x128xf32>
      tpu.vector_store %arg9[%c0_35, %c0_36, %c0_37], %72 {strides = array<i32>} : memref<1x8x128xf32, #tpu.memory_space<vmem>>, vector<1x8x128xf32>,
    } else {
    }
    return
  }
  func.func @transform_0(%arg0: i32, %arg1: i32, %arg2: i32) -> (i32, i32) {
    %c0_i32 = arith.constant 0 : i32
    return %arg0, %arg2 : i32, i32
  }
  func.func @transform_1(%arg0: i32, %arg1: i32, %arg2: i32) -> (i32, i32) {
    %c0_i32 = arith.constant 0 : i32
    return %arg2, %arg1 : i32, i32
  }
  func.func @transform_2(%arg0: i32, %arg1: i32, %arg2: i32) -> (i32, i32) {
    %c0_i32 = arith.constant 0 : i32
    %c0_i32_0 = arith.constant 0 : i32
    return %arg0, %c0_i32 : i32, i32
  }
  func.func @transform_3(%arg0: i32, %arg1: i32, %arg2: i32) -> (i32, i32) {
    %c0_i32 = arith.constant 0 : i32
    %c0_i32_0 = arith.constant 0 : i32
    return %c0_i32, %arg1 : i32, i32
  }
  func.func @transform_4(%arg0: i32, %arg1: i32, %arg2: i32) -> (i32, i32) {
    %c0_i32 = arith.constant 0 : i32
    %c0_i32_0 = arith.constant 0 : i32
    return %arg0, %c0_i32 : i32, i32
  }
  func.func @transform_5(%arg0: i32, %arg1: i32, %arg2: i32) -> (i32, i32) {
    %c0_i32 = arith.constant 0 : i32
    %c0_i32_0 = arith.constant 0 : i32
    return %c0_i32, %arg1 : i32, i32
  }
  func.func @transform_6(%arg0: i32, %arg1: i32, %arg2: i32) -> (i32, i32, i32) {
    %c0_i32 = arith.constant 0 : i32
    %c0_i32_0 = arith.constant 0 : i32
    %c0_i32_1 = arith.constant 0 : i32
    return %arg0, %c0_i32, %c0_i32_0 : i32, i32, i32
  }
}

module attributes {stable_mosaic.version = 11 : i64} {
  func.func @_triplet_kernel(%arg0: i32, %arg1: i32, %arg2: i32, %arg3: memref<128x128xf32, #tpu.memory_space<vmem>>, %arg4: memref<128x128xf32, #tpu.memory_space<vmem>>, %arg5: memref<128x1xf32, #tpu.memory_space<vmem>>, %arg6: memref<1x128xf32, #tpu.memory_space<vmem>>, %arg7: memref<128x1xi32, #tpu.memory_space<vmem>>, %arg8: memref<1x128xi32, #tpu.memory_space<vmem>>, %arg9: memref<1x8x128xf32, #tpu.memory_space<vmem>>, %arg10: memref<128x128xf32, #tpu.memory_space<vmem>>, %arg11: memref<128x1xf32, #tpu.memory_space<vmem>>, %arg12: memref<128x1xf32, #tpu.memory_space<vmem>>) attributes {dimension_semantics = [#tpu.dimension_semantics<parallel>, #tpu.dimension_semantics<arbitrary>, #tpu.dimension_semantics<arbitrary>], iteration_bounds = array<i64: 1, 1, 1>, scalar_prefetch = 0 : i64, scratch_operands = 3 : i64, tpu.core_type = #tpu.core_type<tc>, window_params = [{transform_indices = @transform_0, window_bounds = array<i64: 128, 128>}, {transform_indices = @transform_1, window_bounds = array<i64: 128, 128>}, {transform_indices = @transform_2, window_bounds = array<i64: 128, 1>}, {transform_indices = @transform_3, window_bounds = array<i64: 1, 128>}, {transform_indices = @transform_4, window_bounds = array<i64: 128, 1>}, {transform_indices = @transform_5, window_bounds = array<i64: 1, 128>}, {transform_indices = @transform_6, window_bounds = array<i64: 1, 8, 128>}]} {
    %c0_i32 = arith.constant 0 : i32
    %0 = arith.cmpi eq, %arg1, %c0_i32 : i32
    %c0_i32_0 = arith.constant 0 : i32
    %1 = arith.cmpi eq, %arg2, %c0_i32_0 : i32
    %2 = arith.andi %0, %1 : i1
    %3 = arith.extui %2 : i1 to i32
    %c0_i32_1 = arith.constant 0 : i32
    %4 = arith.cmpi ne, %3, %c0_i32_1 : i32
    scf.if %4 {
      %cst_16 = arith.constant 0xFF800000 : f32
      %22 = vector.broadcast %cst_16 : f32 to vector<128x1xf32>
      %c0_17 = arith.constant 0 : index
      %c0_18 = arith.constant 0 : index
      %23 = vector.load %arg11[%c0_17, %c0_18] : memref<128x1xf32, #tpu.memory_space<vmem>>, vector<128x1xf32>
      tpu.vector_store %arg11[%c0_17, %c0_18], %22 {strides = array<i32>} : memref<128x1xf32, #tpu.memory_space<vmem>>, vector<128x1xf32>,
      %cst_19 = arith.constant 0x7F800000 : f32
      %24 = vector.broadcast %cst_19 : f32 to vector<128x1xf32>
      %c0_20 = arith.constant 0 : index
      %c0_21 = arith.constant 0 : index
      %25 = vector.load %arg12[%c0_20, %c0_21] : memref<128x1xf32, #tpu.memory_space<vmem>>, vector<128x1xf32>
      tpu.vector_store %arg12[%c0_20, %c0_21], %24 {strides = array<i32>} : memref<128x1xf32, #tpu.memory_space<vmem>>, vector<128x1xf32>,
    } else {
    }
    %c0_i32_2 = arith.constant 0 : i32
    %5 = arith.cmpi eq, %arg2, %c0_i32_2 : i32
    %6 = arith.extui %5 : i1 to i32
    %c0_i32_3 = arith.constant 0 : i32
    %7 = arith.cmpi ne, %6, %c0_i32_3 : i32
    scf.if %7 {
      %cst_16 = arith.constant 0.000000e+00 : f32
      %22 = vector.broadcast %cst_16 : f32 to vector<128x128xf32>
      %c0_17 = arith.constant 0 : index
      %c0_18 = arith.constant 0 : index
      %23 = vector.load %arg10[%c0_17, %c0_18] : memref<128x128xf32, #tpu.memory_space<vmem>>, vector<128x128xf32>
      tpu.vector_store %arg10[%c0_17, %c0_18], %22 {strides = array<i32>} : memref<128x128xf32, #tpu.memory_space<vmem>>, vector<128x128xf32>,
    } else {
    }
    %c0 = arith.constant 0 : index
    %c0_4 = arith.constant 0 : index
    %8 = vector.load %arg10[%c0, %c0_4] : memref<128x128xf32, #tpu.memory_space<vmem>>, vector<128x128xf32>
    %c0_5 = arith.constant 0 : index
    %c0_6 = arith.constant 0 : index
    %9 = vector.load %arg3[%c0_5, %c0_6] : memref<128x128xf32, #tpu.memory_space<vmem>>, vector<128x128xf32>
    %c0_7 = arith.constant 0 : index
    %c0_8 = arith.constant 0 : index
    %10 = vector.load %arg4[%c0_7, %c0_8] : memref<128x128xf32, #tpu.memory_space<vmem>>, vector<128x128xf32>
    %cst = arith.constant dense<0.000000e+00> : vector<128x128xf32>
    %11 = tpu.matmul %9, %10, %cst {dimension_numbers = #tpu.dot_dimension_numbers<[1], [0], [0], [1], [0, 0, 1, 1], [], []>} : vector<128x128xf32>, vector<128x128xf32>, vector<128x128xf32> -> vector<128x128xf32>
    %12 = arith.addf %8, %11 : vector<128x128xf32>
    %c0_9 = arith.constant 0 : index
    %c0_10 = arith.constant 0 : index
    %13 = vector.load %arg10[%c0_9, %c0_10] : memref<128x128xf32, #tpu.memory_space<vmem>>, vector<128x128xf32>
    tpu.vector_store %arg10[%c0_9, %c0_10], %12 {strides = array<i32>} : memref<128x128xf32, #tpu.memory_space<vmem>>, vector<128x128xf32>,
    %c0_i32_11 = arith.constant 0 : i32
    %14 = arith.cmpi eq, %arg2, %c0_i32_11 : i32
    %15 = arith.extui %14 : i1 to i32
    %c0_i32_12 = arith.constant 0 : i32
    %16 = arith.cmpi ne, %15, %c0_i32_12 : i32
    scf.if %16 {
      %c0_16 = arith.constant 0 : index
      %c0_17 = arith.constant 0 : index
      %22 = vector.load %arg6[%c0_16, %c0_17] : memref<1x128xf32, #tpu.memory_space<vmem>>, vector<1x128xf32>
      %c0_18 = arith.constant 0 : index
      %c0_19 = arith.constant 0 : index
      %23 = vector.load %arg10[%c0_18, %c0_19] : memref<128x128xf32, #tpu.memory_space<vmem>>, vector<128x128xf32>
      %24 = vector.broadcast %22 : vector<1x128xf32> to vector<128x128xf32>
      %25 = arith.subf %24, %23 : vector<128x128xf32>
      %c0_20 = arith.constant 0 : index
      %c0_21 = arith.constant 0 : index
      %26 = vector.load %arg7[%c0_20, %c0_21] : memref<128x1xi32, #tpu.memory_space<vmem>>, vector<128x1xi32>
      %c0_22 = arith.constant 0 : index
      %c0_23 = arith.constant 0 : index
      %27 = vector.load %arg8[%c0_22, %c0_23] : memref<1x128xi32, #tpu.memory_space<vmem>>, vector<1x128xi32>
      %28 = vector.broadcast %26 : vector<128x1xi32> to vector<128x128xi32>
      %29 = vector.broadcast %27 : vector<1x128xi32> to vector<128x128xi32>
      %30 = arith.cmpi eq, %28, %29 : vector<128x128xi32>
      %c0_24 = arith.constant 0 : index
      %c0_25 = arith.constant 0 : index
      %31 = vector.load %arg11[%c0_24, %c0_25] : memref<128x1xf32, #tpu.memory_space<vmem>>, vector<128x1xf32>
      %cst_26 = arith.constant 0xFF800000 : f32
      %32 = vector.broadcast %cst_26 : f32 to vector<128x128xf32>
      %33 = arith.select %30, %25, %32 : vector<128x128xi1>, vector<128x128xf32>
      %cst_27 = arith.constant dense<0xFF800000> : vector<128xf32>
      %34 = vector.multi_reduction <maximumf>, %33, %cst_27 [1] : vector<128x128xf32> to vector<128xf32>
      %35 = vector.shape_cast %34 : vector<128xf32> to vector<128x1xf32>
      %36 = arith.maximumf %31, %35 : vector<128x1xf32>
      %c0_28 = arith.constant 0 : index
      %c0_29 = arith.constant 0 : index
      %37 = vector.load %arg11[%c0_28, %c0_29] : memref<128x1xf32, #tpu.memory_space<vmem>>, vector<128x1xf32>
      tpu.vector_store %arg11[%c0_28, %c0_29], %36 {strides = array<i32>} : memref<128x1xf32, #tpu.memory_space<vmem>>, vector<128x1xf32>,
      %c0_30 = arith.constant 0 : index
      %c0_31 = arith.constant 0 : index
      %38 = vector.load %arg12[%c0_30, %c0_31] : memref<128x1xf32, #tpu.memory_space<vmem>>, vector<128x1xf32>
      %cst_32 = arith.constant 0x7F800000 : f32
      %39 = vector.broadcast %cst_32 : f32 to vector<128x128xf32>
      %40 = arith.select %30, %39, %25 : vector<128x128xi1>, vector<128x128xf32>
      %cst_33 = arith.constant dense<0x7F800000> : vector<128xf32>
      %41 = vector.multi_reduction <minimumf>, %40, %cst_33 [1] : vector<128x128xf32> to vector<128xf32>
      %42 = vector.shape_cast %41 : vector<128xf32> to vector<128x1xf32>
      %43 = arith.minimumf %38, %42 : vector<128x1xf32>
      %c0_34 = arith.constant 0 : index
      %c0_35 = arith.constant 0 : index
      %44 = vector.load %arg12[%c0_34, %c0_35] : memref<128x1xf32, #tpu.memory_space<vmem>>, vector<128x1xf32>
      tpu.vector_store %arg12[%c0_34, %c0_35], %43 {strides = array<i32>} : memref<128x1xf32, #tpu.memory_space<vmem>>, vector<128x1xf32>,
    } else {
    }
    %c0_i32_13 = arith.constant 0 : i32
    %17 = arith.cmpi eq, %arg1, %c0_i32_13 : i32
    %c0_i32_14 = arith.constant 0 : i32
    %18 = arith.cmpi eq, %arg2, %c0_i32_14 : i32
    %19 = arith.andi %17, %18 : i1
    %20 = arith.extui %19 : i1 to i32
    %c0_i32_15 = arith.constant 0 : i32
    %21 = arith.cmpi ne, %20, %c0_i32_15 : i32
    scf.if %21 {
      %c0_16 = arith.constant 0 : index
      %c0_17 = arith.constant 0 : index
      %22 = vector.load %arg5[%c0_16, %c0_17] : memref<128x1xf32, #tpu.memory_space<vmem>>, vector<128x1xf32>
      %c0_18 = arith.constant 0 : index
      %c0_19 = arith.constant 0 : index
      %23 = vector.load %arg11[%c0_18, %c0_19] : memref<128x1xf32, #tpu.memory_space<vmem>>, vector<128x1xf32>
      %24 = arith.addf %22, %23 : vector<128x1xf32>
      %cst_20 = arith.constant 2.000000e+00 : f32
      %25 = vector.broadcast %cst_20 : f32 to vector<128x1xf32>
      %26 = arith.mulf %25, %24 : vector<128x1xf32>
      %cst_21 = arith.constant 9.99999996E-13 : f32
      %27 = vector.broadcast %cst_21 : f32 to vector<128x1xf32>
      %28 = arith.maximumf %26, %27 : vector<128x1xf32>
      %29 = math.sqrt %28 : vector<128x1xf32>
      %c0_22 = arith.constant 0 : index
      %c0_23 = arith.constant 0 : index
      %30 = vector.load %arg12[%c0_22, %c0_23] : memref<128x1xf32, #tpu.memory_space<vmem>>, vector<128x1xf32>
      %31 = arith.addf %22, %30 : vector<128x1xf32>
      %cst_24 = arith.constant 2.000000e+00 : f32
      %32 = vector.broadcast %cst_24 : f32 to vector<128x1xf32>
      %33 = arith.mulf %32, %31 : vector<128x1xf32>
      %cst_25 = arith.constant 9.99999996E-13 : f32
      %34 = vector.broadcast %cst_25 : f32 to vector<128x1xf32>
      %35 = arith.maximumf %33, %34 : vector<128x1xf32>
      %36 = math.sqrt %35 : vector<128x1xf32>
      %c128_i32 = arith.constant 128 : i32
      %37 = arith.muli %arg0, %c128_i32 : i32
      %38 = tpu.iota {dimensions = array<i32: 0>} : vector<128x1xi32>
      %39 = vector.broadcast %37 : i32 to vector<128x1xi32>
      %40 = arith.addi %39, %38 : vector<128x1xi32>
      %c8_i32 = arith.constant 8 : i32
      %41 = vector.broadcast %c8_i32 : i32 to vector<128x1xi32>
      %42 = arith.cmpi slt, %40, %41 : vector<128x1xi32>
      %43 = arith.subf %36, %29 : vector<128x1xf32>
      %cst_26 = arith.constant 3.000000e-01 : f32
      %44 = vector.broadcast %cst_26 : f32 to vector<128x1xf32>
      %45 = arith.subf %44, %43 : vector<128x1xf32>
      %cst_27 = arith.constant 0.000000e+00 : f32
      %46 = vector.broadcast %cst_27 : f32 to vector<128x1xf32>
      %47 = arith.maximumf %45, %46 : vector<128x1xf32>
      %cst_28 = arith.constant 0.000000e+00 : f32
      %48 = vector.broadcast %cst_28 : f32 to vector<128x1xf32>
      %49 = arith.select %42, %47, %48 : vector<128x1xi1>, vector<128x1xf32>
      %50 = arith.cmpf ogt, %36, %29 : vector<128x1xf32>
      %51 = arith.andi %42, %50 : vector<128x1xi1>
      %cst_29 = arith.constant 1.000000e+00 : f32
      %cst_30 = arith.constant 0.000000e+00 : f32
      %52 = vector.broadcast %cst_29 : f32 to vector<128x1xf32>
      %53 = vector.broadcast %cst_30 : f32 to vector<128x1xf32>
      %54 = arith.select %51, %52, %53 : vector<128x1xi1>, vector<128x1xf32>
      %55 = vector.shape_cast %49 : vector<128x1xf32> to vector<1x128x1xf32>
      %cst_31 = arith.constant dense<0.000000e+00> : vector<1xf32>
      %56 = vector.multi_reduction <add>, %55, %cst_31 [1, 2] : vector<1x128x1xf32> to vector<1xf32>
      %57 = vector.shape_cast %56 : vector<1xf32> to vector<1x1x1xf32>
      %58 = vector.extract %57[0, 0, 0] : f32 from vector<1x1x1xf32>
      %59 = vector.shape_cast %54 : vector<128x1xf32> to vector<1x128x1xf32>
      %cst_32 = arith.constant dense<0.000000e+00> : vector<1xf32>
      %60 = vector.multi_reduction <add>, %59, %cst_32 [1, 2] : vector<1x128x1xf32> to vector<1xf32>
      %61 = vector.shape_cast %60 : vector<1xf32> to vector<1x1x1xf32>
      %62 = vector.extract %61[0, 0, 0] : f32 from vector<1x1x1xf32>
      %63 = tpu.iota {dimensions = array<i32: 1>} : vector<1x8x128xi32>
      %c0_i32_33 = arith.constant 0 : i32
      %64 = vector.broadcast %c0_i32_33 : i32 to vector<1x8x128xi32>
      %65 = arith.cmpi eq, %63, %64 : vector<1x8x128xi32>
      %c1_i32 = arith.constant 1 : i32
      %66 = vector.broadcast %c1_i32 : i32 to vector<1x8x128xi32>
      %67 = arith.cmpi eq, %63, %66 : vector<1x8x128xi32>
      %cst_34 = arith.constant 0.000000e+00 : f32
      %68 = vector.broadcast %62 : f32 to vector<1x8x128xf32>
      %69 = vector.broadcast %cst_34 : f32 to vector<1x8x128xf32>
      %70 = arith.select %67, %68, %69 : vector<1x8x128xi1>, vector<1x8x128xf32>
      %71 = vector.broadcast %58 : f32 to vector<1x8x128xf32>
      %72 = arith.select %65, %71, %70 : vector<1x8x128xi1>, vector<1x8x128xf32>
      %c0_35 = arith.constant 0 : index
      %c0_36 = arith.constant 0 : index
      %c0_37 = arith.constant 0 : index
      %73 = vector.load %arg9[%c0_35, %c0_36, %c0_37] : memref<1x8x128xf32, #tpu.memory_space<vmem>>, vector<1x8x128xf32>
      tpu.vector_store %arg9[%c0_35, %c0_36, %c0_37], %72 {strides = array<i32>} : memref<1x8x128xf32, #tpu.memory_space<vmem>>, vector<1x8x128xf32>,
    } else {
    }
    return
  }
  func.func @transform_0(%arg0: i32, %arg1: i32, %arg2: i32) -> (i32, i32) {
    %c0_i32 = arith.constant 0 : i32
    return %arg0, %arg2 : i32, i32
  }
  func.func @transform_1(%arg0: i32, %arg1: i32, %arg2: i32) -> (i32, i32) {
    %c0_i32 = arith.constant 0 : i32
    return %arg2, %arg1 : i32, i32
  }
  func.func @transform_2(%arg0: i32, %arg1: i32, %arg2: i32) -> (i32, i32) {
    %c0_i32 = arith.constant 0 : i32
    %c0_i32_0 = arith.constant 0 : i32
    return %arg0, %c0_i32 : i32, i32
  }
  func.func @transform_3(%arg0: i32, %arg1: i32, %arg2: i32) -> (i32, i32) {
    %c0_i32 = arith.constant 0 : i32
    %c0_i32_0 = arith.constant 0 : i32
    return %c0_i32, %arg1 : i32, i32
  }
  func.func @transform_4(%arg0: i32, %arg1: i32, %arg2: i32) -> (i32, i32) {
    %c0_i32 = arith.constant 0 : i32
    %c0_i32_0 = arith.constant 0 : i32
    return %arg0, %c0_i32 : i32, i32
  }
  func.func @transform_5(%arg0: i32, %arg1: i32, %arg2: i32) -> (i32, i32) {
    %c0_i32 = arith.constant 0 : i32
    %c0_i32_0 = arith.constant 0 : i32
    return %c0_i32, %arg1 : i32, i32
  }
  func.func @transform_6(%arg0: i32, %arg1: i32, %arg2: i32) -> (i32, i32, i32) {
    %c0_i32 = arith.constant 0 : i32
    %c0_i32_0 = arith.constant 0 : i32
    %c0_i32_1 = arith.constant 0 : i32
    return %arg0, %c0_i32, %c0_i32_0 : i32, i32, i32
  }
}

</mosaic_0001>

<llo_original>
// kernel: tpu_custom_call.1
$region0: #{tpu_custom_call.1}
  #allocation0 [shape = 'u32[]', space=smem, size = 0x4, offset = 0x4, fixed_abs, tag = 'smem constant byte address 0x4 - core index']
  #allocation1 [shape = 'u32[144,128]{1,0:T(1,128)}', space=vmem, size = 0x12000, scoped, tag = 'internal scratch']
  #allocation2 [shape = 'f32[128,128]{1,0:T(8,128)}', space=vmem, size = 0x10000, scoped, tag = 'scratch operand']
  #allocation3 [shape = 'f32[128,1]{1,0:T(8,128)}', space=vmem, size = 0x10000, scoped, tag = 'scratch operand']
  #allocation4 [shape = 'f32[128,1]{1,0:T(8,128)}', space=vmem, size = 0x10000, scoped, tag = 'scratch operand']
  %s0 = inlined_call_operand.vmem [shape: f32[128,128], index: 0, kind: input, shape index: {}]
  %s1 = inlined_call_operand.vmem [shape: f32[128,128], index: 1, kind: input, shape index: {}]
  %s2 = inlined_call_operand.vmem [shape: f32[128,1], index: 2, kind: input, shape index: {}]
  %s3 = inlined_call_operand.vmem [shape: f32[1,128], index: 3, kind: input, shape index: {}]
  %s4 = inlined_call_operand.vmem [shape: s32[128,1], index: 4, kind: input, shape index: {}]
  %s5 = inlined_call_operand.vmem [shape: s32[1,128], index: 5, kind: input, shape index: {}]
  %s6 = inlined_call_operand.hbm [shape: f32[1,8,128], index: 6, kind: output, shape index: {}]
  %s7 = sld [smem:[#allocation0]]
  $region50: #{tpu_custom_call.1} parent=0
    _
  %s9 = ssub.s32 1, %s7
  %s10 = scalar_select 0, %s9, %s7
  $region1: #{tpu_custom_call.1} parent=0
    #allocation5 [shape = 'u8[4096]{0}', space=vmem, size = 0x1000, scoped, tag = 'output window, operand 0, single buffered']
    #allocation6 [shape = 's32[1]{0}', space=sflag, size = 0x4, scoped, tag = 'scoped memory for tpu_custom_call.1']
    %11 = vsyncpa [#allocation6], 0
    // Predicated region
    $region2: #{tpu_custom_call.1} parent=1 // pred_check
      _
    $region3: #{tpu_custom_call.1} parent=1 // pred_check_branch
      %13 = sbr.rel (0) target = $region5
    $region4: #{tpu_custom_call.1} parent=1 // pred_region
      _
    $region5: #{tpu_custom_call.1} parent=1 // pred_fallthru
      _
    // Predicated region
    $region6: #{tpu_custom_call.1} parent=1 // pred_check
      _
    $region7: #{tpu_custom_call.1} parent=1 // pred_check_branch
      %15 = sbr.rel (0) target = $region9
    $region8: #{tpu_custom_call.1} parent=1 // pred_region
      _
    $region9: #{tpu_custom_call.1} parent=1 // pred_fallthru
      _
    // Predicated region
    $region10: #{tpu_custom_call.1} parent=1 // pred_check
      _
    $region11: #{tpu_custom_call.1} parent=1 // pred_check_branch
      %17 = sbr.rel (0) target = $region13
    $region12: #{tpu_custom_call.1} parent=1 // pred_region
      _
    $region13: #{tpu_custom_call.1} parent=1 // pred_fallthru
      _
    // Predicated region
    $region14: #{tpu_custom_call.1} parent=1 // pred_check
      _
    $region15: #{tpu_custom_call.1} parent=1 // pred_check_branch
      %19 = sbr.rel (0) target = $region17
    $region16: #{tpu_custom_call.1} parent=1 // pred_region
      _
    $region17: #{tpu_custom_call.1} parent=1 // pred_fallthru
      _
    // Predicated region
    $region18: #{tpu_custom_call.1} parent=1 // pred_check
      _
    $region19: #{tpu_custom_call.1} parent=1 // pred_check_branch
      %21 = sbr.rel (0) target = $region21
    $region20: #{tpu_custom_call.1} parent=1 // pred_region
      _
    $region21: #{tpu_custom_call.1} parent=1 // pred_fallthru
      _
    // Predicated region
    $region22: #{tpu_custom_call.1} parent=1 // pred_check
      _
    $region23: #{tpu_custom_call.1} parent=1 // pred_check_branch
      %23 = sbr.rel (0) target = $region25
    $region24: #{tpu_custom_call.1} parent=1 // pred_region
      _
    $region25: #{tpu_custom_call.1} parent=1 // pred_fallthru
      _
    %p24 = scmp.eq.s32.totalorder 0, 0
    %p25 = scmp.eq.s32.totalorder 0, 0
    %p26 = pnand %p24, %p25
    %p27 = pneg %p26
    // Predicated region
    $region26: #{tpu_custom_call.1} parent=1 // pred_check
      _
    $region27: #{tpu_custom_call.1} parent=1 // pred_check_branch
      %29 = sbr.rel (%p26) target = $region29
    $region28: #{tpu_custom_call.1} parent=1 // pred_region
      %vm30 = vcmask 7168
      %31 = vst.msk [vmem:[#allocation3] sm:$0xff] %vm30, -inf
      %32 = vst.msk [vmem:[#allocation3 + $0x8] sm:$0xff] %vm30, -inf
      %33 = vst.msk [vmem:[#allocation3 + $0x10] sm:$0xff] %vm30, -inf
      %34 = vst.msk [vmem:[#allocation3 + $0x18] sm:$0xff] %vm30, -inf
      %35 = vst.msk [vmem:[#allocation3 + $0x20] sm:$0xff] %vm30, -inf
      %36 = vst.msk [vmem:[#allocation3 + $0x28] sm:$0xff] %vm30, -inf
      %37 = vst.msk [vmem:[#allocation3 + $0x30] sm:$0xff] %vm30, -inf
      %38 = vst.msk [vmem:[#allocation3 + $0x38] sm:$0xff] %vm30, -inf
      %39 = vst.msk [vmem:[#allocation3 + $0x40] sm:$0xff] %vm30, -inf
      %40 = vst.msk [vmem:[#allocation3 + $0x48] sm:$0xff] %vm30, -inf
      %41 = vst.msk [vmem:[#allocation3 + $0x50] sm:$0xff] %vm30, -inf
      %42 = vst.msk [vmem:[#allocation3 + $0x58] sm:$0xff] %vm30, -inf
      %43 = vst.msk [vmem:[#allocation3 + $0x60] sm:$0xff] %vm30, -inf
      %44 = vst.msk [vmem:[#allocation3 + $0x68] sm:$0xff] %vm30, -inf
      %45 = vst.msk [vmem:[#allocation3 + $0x70] sm:$0xff] %vm30, -inf
      %46 = vst.msk [vmem:[#allocation3 + $0x78] sm:$0xff] %vm30, -inf
      %47 = vst.msk [vmem:[#allocation4] sm:$0xff] %vm30, inf
      %48 = vst.msk [vmem:[#allocation4 + $0x8] sm:$0xff] %vm30, inf
      %49 = vst.msk [vmem:[#allocation4 + $0x10] sm:$0xff] %vm30, inf
      %50 = vst.msk [vmem:[#allocation4 + $0x18] sm:$0xff] %vm30, inf
      %51 = vst.msk [vmem:[#allocation4 + $0x20] sm:$0xff] %vm30, inf
      %52 = vst.msk [vmem:[#allocation4 + $0x28] sm:$0xff] %vm30, inf
      %53 = vst.msk [vmem:[#allocation4 + $0x30] sm:$0xff] %vm30, inf
      %54 = vst.msk [vmem:[#allocation4 + $0x38] sm:$0xff] %vm30, inf
      %55 = vst.msk [vmem:[#allocation4 + $0x40] sm:$0xff] %vm30, inf
      %56 = vst.msk [vmem:[#allocation4 + $0x48] sm:$0xff] %vm30, inf
      %57 = vst.msk [vmem:[#allocation4 + $0x50] sm:$0xff] %vm30, inf
      %58 = vst.msk [vmem:[#allocation4 + $0x58] sm:$0xff] %vm30, inf
      %59 = vst.msk [vmem:[#allocation4 + $0x60] sm:$0xff] %vm30, inf
      %60 = vst.msk [vmem:[#allocation4 + $0x68] sm:$0xff] %vm30, inf
      %61 = vst.msk [vmem:[#allocation4 + $0x70] sm:$0xff] %vm30, inf
      %62 = vst.msk [vmem:[#allocation4 + $0x78] sm:$0xff] %vm30, inf
    $region29: #{tpu_custom_call.1} parent=1 // pred_fallthru
      _
    // Predicated region
    $region30: #{tpu_custom_call.1} parent=1 // pred_check
      %p63 = pneg %p25
    $region31: #{tpu_custom_call.1} parent=1 // pred_check_branch
      %65 = sbr.rel (%p63) target = $region33
    $region32: #{tpu_custom_call.1} parent=1 // pred_region
      %66 = vst [vmem:[#allocation2] sm:$0xff] 0.0
      %67 = vst [vmem:[#allocation2 + $0x8] sm:$0xff] 0.0
      %68 = vst [vmem:[#allocation2 + $0x10] sm:$0xff] 0.0
      %69 = vst [vmem:[#allocation2 + $0x18] sm:$0xff] 0.0
      %70 = vst [vmem:[#allocation2 + $0x20] sm:$0xff] 0.0
      %71 = vst [vmem:[#allocation2 + $0x28] sm:$0xff] 0.0
      %72 = vst [vmem:[#allocation2 + $0x30] sm:$0xff] 0.0
      %73 = vst [vmem:[#allocation2 + $0x38] sm:$0xff] 0.0
      %74 = vst [vmem:[#allocation2 + $0x40] sm:$0xff] 0.0
      %75 = vst [vmem:[#allocation2 + $0x48] sm:$0xff] 0.0
      %76 = vst [vmem:[#allocation2 + $0x50] sm:$0xff] 0.0
      %77 = vst [vmem:[#allocation2 + $0x58] sm:$0xff] 0.0
      %78 = vst [vmem:[#allocation2 + $0x60] sm:$0xff] 0.0
      %79 = vst [vmem:[#allocation2 + $0x68] sm:$0xff] 0.0
      %80 = vst [vmem:[#allocation2 + $0x70] sm:$0xff] 0.0
      %81 = vst [vmem:[#allocation2 + $0x78] sm:$0xff] 0.0
    $region33: #{tpu_custom_call.1} parent=1 // pred_fallthru
      _
    %v82 = vld [vmem:[#allocation2] sm:$0xff]
    %v83 = vld [vmem:[#allocation2 + $0x8] sm:$0xff]
    %v84 = vld [vmem:[#allocation2 + $0x10] sm:$0xff]
    %v85 = vld [vmem:[#allocation2 + $0x18] sm:$0xff]
    %v86 = vld [vmem:[#allocation2 + $0x20] sm:$0xff]
    %v87 = vld [vmem:[#allocation2 + $0x28] sm:$0xff]
    %v88 = vld [vmem:[#allocation2 + $0x30] sm:$0xff]
    %v89 = vld [vmem:[#allocation2 + $0x38] sm:$0xff]
    %v90 = vld [vmem:[#allocation2 + $0x40] sm:$0xff]
    %v91 = vld [vmem:[#allocation2 + $0x48] sm:$0xff]
    %v92 = vld [vmem:[#allocation2 + $0x50] sm:$0xff]
    %v93 = vld [vmem:[#allocation2 + $0x58] sm:$0xff]
    %v94 = vld [vmem:[#allocation2 + $0x60] sm:$0xff]
    %v95 = vld [vmem:[#allocation2 + $0x68] sm:$0xff]
    %v96 = vld [vmem:[#allocation2 + $0x70] sm:$0xff]
    %v97 = vld [vmem:[#allocation2 + $0x78] sm:$0xff]
    %v98 = vld [vmem:[%s0] sm:$0xff]
    %v99 = vld [vmem:[%s0 + $0x8] sm:$0xff]
    %v100 = vld [vmem:[%s0 + $0x10] sm:$0xff]
    %v101 = vld [vmem:[%s0 + $0x18] sm:$0xff]
    %v102 = vld [vmem:[%s0 + $0x20] sm:$0xff]
    %v103 = vld [vmem:[%s0 + $0x28] sm:$0xff]
    %v104 = vld [vmem:[%s0 + $0x30] sm:$0xff]
    %v105 = vld [vmem:[%s0 + $0x38] sm:$0xff]
    %v106 = vld [vmem:[%s0 + $0x40] sm:$0xff]
    %v107 = vld [vmem:[%s0 + $0x48] sm:$0xff]
    %v108 = vld [vmem:[%s0 + $0x50] sm:$0xff]
    %v109 = vld [vmem:[%s0 + $0x58] sm:$0xff]
    %v110 = vld [vmem:[%s0 + $0x60] sm:$0xff]
    %v111 = vld [vmem:[%s0 + $0x68] sm:$0xff]
    %v112 = vld [vmem:[%s0 + $0x70] sm:$0xff]
    %v113 = vld [vmem:[%s0 + $0x78] sm:$0xff]
    %v114 = vld [vmem:[%s1] sm:$0xff]
    %v115 = vld [vmem:[%s1 + $0x8] sm:$0xff]
    %v116 = vld [vmem:[%s1 + $0x10] sm:$0xff]
    %v117 = vld [vmem:[%s1 + $0x18] sm:$0xff]
    %v118 = vld [vmem:[%s1 + $0x20] sm:$0xff]
    %v119 = vld [vmem:[%s1 + $0x28] sm:$0xff]
    %v120 = vld [vmem:[%s1 + $0x30] sm:$0xff]
    %v121 = vld [vmem:[%s1 + $0x38] sm:$0xff]
    %v122 = vld [vmem:[%s1 + $0x40] sm:$0xff]
    %v123 = vld [vmem:[%s1 + $0x48] sm:$0xff]
    %v124 = vld [vmem:[%s1 + $0x50] sm:$0xff]
    %v125 = vld [vmem:[%s1 + $0x58] sm:$0xff]
    %v126 = vld [vmem:[%s1 + $0x60] sm:$0xff]
    %v127 = vld [vmem:[%s1 + $0x68] sm:$0xff]
    %v128 = vld [vmem:[%s1 + $0x70] sm:$0xff]
    %v129 = vld [vmem:[%s1 + $0x78] sm:$0xff]
    %130 = vmatprep.subr.mxu0 0.0
    %131 = vmatpush1.msra.mxu0 %v129
    %132 = vmatprep.subr.mxu0 0.0
    %133 = vmatpush1.msra.mxu0 %v128
    %134 = vmatprep.subr.mxu0 0.0
    %135 = vmatpush1.msra.mxu0 %v127
    %136 = vmatprep.subr.mxu0 0.0
    %137 = vmatpush1.msra.mxu0 %v126
    %138 = vmatprep.subr.mxu0 0.0
    %139 = vmatpush1.msra.mxu0 %v125
    %140 = vmatprep.subr.mxu0 0.0
    %141 = vmatpush1.msra.mxu0 %v124
    %142 = vmatprep.subr.mxu0 0.0
    %143 = vmatpush1.msra.mxu0 %v123
    %144 = vmatprep.subr.mxu0 0.0
    %145 = vmatpush1.msra.mxu0 %v122
    %146 = vmatprep.subr.mxu0 0.0
    %147 = vmatpush1.msra.mxu0 %v121
    %148 = vmatprep.subr.mxu0 0.0
    %149 = vmatpush1.msra.mxu0 %v120
    %150 = vmatprep.subr.mxu0 0.0
    %151 = vmatpush1.msra.mxu0 %v119
    %152 = vmatprep.subr.mxu0 0.0
    %153 = vmatpush1.msra.mxu0 %v118
    %154 = vmatprep.subr.mxu0 0.0
    %155 = vmatpush1.msra.mxu0 %v117
    %156 = vmatprep.subr.mxu0 0.0
    %157 = vmatpush1.msra.mxu0 %v116
    %158 = vmatprep.subr.mxu0 0.0
    %159 = vmatpush1.msra.mxu0 %v115
    %160 = vmatprep.subr.mxu0 0.0
    %161 = vmatpush1.msra.mxu0 %v114
    %162 = vmatprep.subr.mxu0 0.0
    %163 = vmatpush2.msra.mxu0 0.0
    %164 = vmatprep.subr.mxu0 0.0
    %165 = vmatpush2.msra.mxu0 0.0
    %166 = vmatprep.subr.mxu0 0.0
    %167 = vmatpush2.msra.mxu0 0.0
    %168 = vmatprep.subr.mxu0 0.0
    %169 = vmatpush2.msra.mxu0 0.0
    %170 = vmatprep.subr.mxu0 0.0
    %171 = vmatpush2.msra.mxu0 0.0
    %172 = vmatprep.subr.mxu0 0.0
    %173 = vmatpush2.msra.mxu0 0.0
    %174 = vmatprep.subr.mxu0 0.0
    %175 = vmatpush2.msra.mxu0 0.0
    %176 = vmatprep.subr.mxu0 0.0
    %177 = vmatpush2.msra.mxu0 0.0
    %178 = vmatprep.subr.mxu0 0.0
    %179 = vmatpush2.msra.mxu0 0.0
    %180 = vmatprep.subr.mxu0 0.0
    %181 = vmatpush2.msra.mxu0 0.0
    %182 = vmatprep.subr.mxu0 0.0
    %183 = vmatpush2.msra.mxu0 0.0
    %184 = vmatprep.subr.mxu0 0.0
    %185 = vmatpush2.msra.mxu0 0.0
    %186 = vmatprep.subr.mxu0 0.0
    %187 = vmatpush2.msra.mxu0 0.0
    %188 = vmatprep.subr.mxu0 0.0
    %189 = vmatpush2.msra.mxu0 0.0
    %190 = vmatprep.subr.mxu0 0.0
    %191 = vmatpush2.msra.mxu0 0.0
    %192 = vmatprep.subr.mxu0 0.0
    %193 = vmatpush2.msra.mxu0 0.0
    %194 = vmatprep.mubr.f32.mxu0 0.0
    %195 = vmatmul.mubr.f32.gmra.mxu0 %v98
    %v196 = vpop.f32.mrf.mxu0
    %v197 = vadd.f32 0.0, %v196
    %v198 = vpop.f32.mrf.mxu0
    %199 = vmatprep.mubr.f32.mxu0 0.0
    %200 = vmatmul.mubr.f32.gmra.mxu0 %v99
    %v201 = vpop.f32.mrf.mxu0
    %v202 = vadd.f32 0.0, %v201
    %v203 = vpop.f32.mrf.mxu0
    %204 = vmatprep.mubr.f32.mxu0 0.0
    %205 = vmatmul.mubr.f32.gmra.mxu0 %v100
    %v206 = vpop.f32.mrf.mxu0
    %v207 = vadd.f32 0.0, %v206
    %v208 = vpop.f32.mrf.mxu0
    %209 = vmatprep.mubr.f32.mxu0 0.0
    %210 = vmatmul.mubr.f32.gmra.mxu0 %v101
    %v211 = vpop.f32.mrf.mxu0
    %v212 = vadd.f32 0.0, %v211
    %v213 = vpop.f32.mrf.mxu0
    %214 = vmatprep.mubr.f32.mxu0 0.0
    %215 = vmatmul.mubr.f32.gmra.mxu0 %v102
    %v216 = vpop.f32.mrf.mxu0
    %v217 = vadd.f32 0.0, %v216
    %v218 = vpop.f32.mrf.mxu0
    %219 = vmatprep.mubr.f32.mxu0 0.0
    %220 = vmatmul.mubr.f32.gmra.mxu0 %v103
    %v221 = vpop.f32.mrf.mxu0
    %v222 = vadd.f32 0.0, %v221
    %v223 = vpop.f32.mrf.mxu0
    %224 = vmatprep.mubr.f32.mxu0 0.0
    %225 = vmatmul.mubr.f32.gmra.mxu0 %v104
    %v226 = vpop.f32.mrf.mxu0
    %v227 = vadd.f32 0.0, %v226
    %v228 = vpop.f32.mrf.mxu0
    %229 = vmatprep.mubr.f32.mxu0 0.0
    %230 = vmatmul.mubr.f32.gmra.mxu0 %v105
    %v231 = vpop.f32.mrf.mxu0
    %v232 = vadd.f32 0.0, %v231
    %v233 = vpop.f32.mrf.mxu0
    %234 = vmatprep.mubr.f32.mxu0 0.0
    %235 = vmatmul.mubr.f32.gmra.mxu0 %v106
    %v236 = vpop.f32.mrf.mxu0
    %v237 = vadd.f32 0.0, %v236
    %v238 = vpop.f32.mrf.mxu0
    %239 = vmatprep.mubr.f32.mxu0 0.0
    %240 = vmatmul.mubr.f32.gmra.mxu0 %v107
    %v241 = vpop.f32.mrf.mxu0
    %v242 = vadd.f32 0.0, %v241
    %v243 = vpop.f32.mrf.mxu0
    %244 = vmatprep.mubr.f32.mxu0 0.0
    %245 = vmatmul.mubr.f32.gmra.mxu0 %v108
    %v246 = vpop.f32.mrf.mxu0
    %v247 = vadd.f32 0.0, %v246
    %v248 = vpop.f32.mrf.mxu0
    %249 = vmatprep.mubr.f32.mxu0 0.0
    %250 = vmatmul.mubr.f32.gmra.mxu0 %v109
    %v251 = vpop.f32.mrf.mxu0
    %v252 = vadd.f32 0.0, %v251
    %v253 = vpop.f32.mrf.mxu0
    %254 = vmatprep.mubr.f32.mxu0 0.0
    %255 = vmatmul.mubr.f32.gmra.mxu0 %v110
    %v256 = vpop.f32.mrf.mxu0
    %v257 = vadd.f32 0.0, %v256
    %v258 = vpop.f32.mrf.mxu0
    %259 = vmatprep.mubr.f32.mxu0 0.0
    %260 = vmatmul.mubr.f32.gmra.mxu0 %v111
    %v261 = vpop.f32.mrf.mxu0
    %v262 = vadd.f32 0.0, %v261
    %v263 = vpop.f32.mrf.mxu0
    %264 = vmatprep.mubr.f32.mxu0 0.0
    %265 = vmatmul.mubr.f32.gmra.mxu0 %v112
    %v266 = vpop.f32.mrf.mxu0
    %v267 = vadd.f32 0.0, %v266
    %v268 = vpop.f32.mrf.mxu0
    %269 = vmatprep.mubr.f32.mxu0 0.0
    %270 = vmatmul.mubr.f32.gmra.mxu0 %v113
    %v271 = vpop.f32.mrf.mxu0
    %v272 = vadd.f32 0.0, %v271
    %v273 = vpop.f32.mrf.mxu0
    %274 = vdwg.mxu0
    %v275 = vadd.f32 %v82, %v197
    %v276 = vadd.f32 %v83, %v202
    %v277 = vadd.f32 %v84, %v207
    %v278 = vadd.f32 %v85, %v212
    %v279 = vadd.f32 %v86, %v217
    %v280 = vadd.f32 %v87, %v222
    %v281 = vadd.f32 %v88, %v227
    %v282 = vadd.f32 %v89, %v232
    %v283 = vadd.f32 %v90, %v237
    %v284 = vadd.f32 %v91, %v242
    %v285 = vadd.f32 %v92, %v247
    %v286 = vadd.f32 %v93, %v252
    %v287 = vadd.f32 %v94, %v257
    %v288 = vadd.f32 %v95, %v262
    %v289 = vadd.f32 %v96, %v267
    %v290 = vadd.f32 %v97, %v272
    %291 = vst [vmem:[#allocation2] sm:$0xff] %v275
    %292 = vst [vmem:[#allocation2 + $0x8] sm:$0xff] %v276
    %293 = vst [vmem:[#allocation2 + $0x10] sm:$0xff] %v277
    %294 = vst [vmem:[#allocation2 + $0x18] sm:$0xff] %v278
    %295 = vst [vmem:[#allocation2 + $0x20] sm:$0xff] %v279
    %296 = vst [vmem:[#allocation2 + $0x28] sm:$0xff] %v280
    %297 = vst [vmem:[#allocation2 + $0x30] sm:$0xff] %v281
    %298 = vst [vmem:[#allocation2 + $0x38] sm:$0xff] %v282
    %299 = vst [vmem:[#allocation2 + $0x40] sm:$0xff] %v283
    %300 = vst [vmem:[#allocation2 + $0x48] sm:$0xff] %v284
    %301 = vst [vmem:[#allocation2 + $0x50] sm:$0xff] %v285
    %302 = vst [vmem:[#allocation2 + $0x58] sm:$0xff] %v286
    %303 = vst [vmem:[#allocation2 + $0x60] sm:$0xff] %v287
    %304 = vst [vmem:[#allocation2 + $0x68] sm:$0xff] %v288
    %305 = vst [vmem:[#allocation2 + $0x70] sm:$0xff] %v289
    %306 = vst [vmem:[#allocation2 + $0x78] sm:$0xff] %v290
    // Predicated region
    $region34: #{tpu_custom_call.1} parent=1 // pred_check
      %p307 = pneg %p25
    $region35: #{tpu_custom_call.1} parent=1 // pred_check_branch
      %309 = sbr.rel (%p307) target = $region37
    $region36: #{tpu_custom_call.1} parent=1 // pred_region
      %v310 = vld [vmem:[%s3] sm:$0x1]
      %v311 = vld [vmem:[#allocation2] sm:$0xff]
      %v312 = vld [vmem:[#allocation2 + $0x8] sm:$0xff]
      %v313 = vld [vmem:[#allocation2 + $0x10] sm:$0xff]
      %v314 = vld [vmem:[#allocation2 + $0x18] sm:$0xff]
      %v315 = vld [vmem:[#allocation2 + $0x20] sm:$0xff]
      %v316 = vld [vmem:[#allocation2 + $0x28] sm:$0xff]
      %v317 = vld [vmem:[#allocation2 + $0x30] sm:$0xff]
      %v318 = vld [vmem:[#allocation2 + $0x38] sm:$0xff]
      %v319 = vld [vmem:[#allocation2 + $0x40] sm:$0xff]
      %v320 = vld [vmem:[#allocation2 + $0x48] sm:$0xff]
      %v321 = vld [vmem:[#allocation2 + $0x50] sm:$0xff]
      %v322 = vld [vmem:[#allocation2 + $0x58] sm:$0xff]
      %v323 = vld [vmem:[#allocation2 + $0x60] sm:$0xff]
      %v324 = vld [vmem:[#allocation2 + $0x68] sm:$0xff]
      %v325 = vld [vmem:[#allocation2 + $0x70] sm:$0xff]
      %v326 = vld [vmem:[#allocation2 + $0x78] sm:$0xff]
      %v328 = vlaneseq
      %v329 = vshrl.u32 %v328, 7
      %v330 = vsub.s32 0, %v329
      %v331 = vrot.slane %v310, %v330
      %v333 = vsub.f32 %v331, %v311
      %v334 = vsub.f32 %v331, %v312
      %v335 = vsub.f32 %v331, %v313
      %v336 = vsub.f32 %v331, %v314
      %v337 = vsub.f32 %v331, %v315
      %v338 = vsub.f32 %v331, %v316
      %v339 = vsub.f32 %v331, %v317
      %v340 = vsub.f32 %v331, %v318
      %v341 = vsub.f32 %v331, %v319
      %v342 = vsub.f32 %v331, %v320
      %v343 = vsub.f32 %v331, %v321
      %v344 = vsub.f32 %v331, %v322
      %v345 = vsub.f32 %v331, %v323
      %v346 = vsub.f32 %v331, %v324
      %v347 = vsub.f32 %v331, %v325
      %v348 = vsub.f32 %v331, %v326
      %v349 = vld [vmem:[%s4] sm:$0xff]
      %v350 = vld [vmem:[%s4 + $0x8] sm:$0xff]
      %v351 = vld [vmem:[%s4 + $0x10] sm:$0xff]
      %v352 = vld [vmem:[%s4 + $0x18] sm:$0xff]
      %v353 = vld [vmem:[%s4 + $0x20] sm:$0xff]
      %v354 = vld [vmem:[%s4 + $0x28] sm:$0xff]
      %v355 = vld [vmem:[%s4 + $0x30] sm:$0xff]
      %v356 = vld [vmem:[%s4 + $0x38] sm:$0xff]
      %v357 = vld [vmem:[%s4 + $0x40] sm:$0xff]
      %v358 = vld [vmem:[%s4 + $0x48] sm:$0xff]
      %v359 = vld [vmem:[%s4 + $0x50] sm:$0xff]
      %v360 = vld [vmem:[%s4 + $0x58] sm:$0xff]
      %v361 = vld [vmem:[%s4 + $0x60] sm:$0xff]
      %v362 = vld [vmem:[%s4 + $0x68] sm:$0xff]
      %v363 = vld [vmem:[%s4 + $0x70] sm:$0xff]
      %v364 = vld [vmem:[%s4 + $0x78] sm:$0xff]
      %v365 = vld [vmem:[%s5] sm:$0x1]
      %366 = vset.pattern.permute.xlu0 0
      %367 = vperm.xlu0 %366, %v349
      %v368 = vpop.permute.xlu0 %367
      %369 = vset.pattern.permute.xlu0 0
      %370 = vperm.xlu0 %369, %v350
      %v371 = vpop.permute.xlu0 %370
      %372 = vset.pattern.permute.xlu0 0
      %373 = vperm.xlu0 %372, %v351
      %v374 = vpop.permute.xlu0 %373
      %375 = vset.pattern.permute.xlu0 0
      %376 = vperm.xlu0 %375, %v352
      %v377 = vpop.permute.xlu0 %376
      %378 = vset.pattern.permute.xlu0 0
      %379 = vperm.xlu0 %378, %v353
      %v380 = vpop.permute.xlu0 %379
      %381 = vset.pattern.permute.xlu0 0
      %382 = vperm.xlu0 %381, %v354
      %v383 = vpop.permute.xlu0 %382
      %384 = vset.pattern.permute.xlu0 0
      %385 = vperm.xlu0 %384, %v355
      %v386 = vpop.permute.xlu0 %385
      %387 = vset.pattern.permute.xlu0 0
      %388 = vperm.xlu0 %387, %v356
      %v389 = vpop.permute.xlu0 %388
      %390 = vset.pattern.permute.xlu0 0
      %391 = vperm.xlu0 %390, %v357
      %v392 = vpop.permute.xlu0 %391
      %393 = vset.pattern.permute.xlu0 0
      %394 = vperm.xlu0 %393, %v358
      %v395 = vpop.permute.xlu0 %394
      %396 = vset.pattern.permute.xlu0 0
      %397 = vperm.xlu0 %396, %v359
      %v398 = vpop.permute.xlu0 %397
      %399 = vset.pattern.permute.xlu0 0
      %400 = vperm.xlu0 %399, %v360
      %v401 = vpop.permute.xlu0 %400
      %402 = vset.pattern.permute.xlu0 0
      %403 = vperm.xlu0 %402, %v361
      %v404 = vpop.permute.xlu0 %403
      %405 = vset.pattern.permute.xlu0 0
      %406 = vperm.xlu0 %405, %v362
      %v407 = vpop.permute.xlu0 %406
      %408 = vset.pattern.permute.xlu0 0
      %409 = vperm.xlu0 %408, %v363
      %v410 = vpop.permute.xlu0 %409
      %411 = vset.pattern.permute.xlu0 0
      %412 = vperm.xlu0 %411, %v364
      %v413 = vpop.permute.xlu0 %412
      %v414 = vlaneseq
      %v415 = vshrl.u32 %v414, 7
      %v416 = vsub.s32 0, %v415
      %v417 = vrot.slane %v365, %v416
      %vm418 = vcmp.eq.s32.totalorder %v368, %v417
      %vm419 = vcmp.eq.s32.totalorder %v371, %v417
      %vm420 = vcmp.eq.s32.totalorder %v374, %v417
      %vm421 = vcmp.eq.s32.totalorder %v377, %v417
      %vm422 = vcmp.eq.s32.totalorder %v380, %v417
      %vm423 = vcmp.eq.s32.totalorder %v383, %v417
      %vm424 = vcmp.eq.s32.totalorder %v386, %v417
      %vm425 = vcmp.eq.s32.totalorder %v389, %v417
      %vm426 = vcmp.eq.s32.totalorder %v392, %v417
      %vm427 = vcmp.eq.s32.totalorder %v395, %v417
      %vm428 = vcmp.eq.s32.totalorder %v398, %v417
      %vm429 = vcmp.eq.s32.totalorder %v401, %v417
      %vm430 = vcmp.eq.s32.totalorder %v404, %v417
      %vm431 = vcmp.eq.s32.totalorder %v407, %v417
      %vm432 = vcmp.eq.s32.totalorder %v410, %v417
      %vm433 = vcmp.eq.s32.totalorder %v413, %v417
      %v434 = vld [vmem:[#allocation3] sm:$0xff]
      %v435 = vld [vmem:[#allocation3 + $0x8] sm:$0xff]
      %v436 = vld [vmem:[#allocation3 + $0x10] sm:$0xff]
      %v437 = vld [vmem:[#allocation3 + $0x18] sm:$0xff]
      %v438 = vld [vmem:[#allocation3 + $0x20] sm:$0xff]
      %v439 = vld [vmem:[#allocation3 + $0x28] sm:$0xff]
      %v440 = vld [vmem:[#allocation3 + $0x30] sm:$0xff]
      %v441 = vld [vmem:[#allocation3 + $0x38] sm:$0xff]
      %v442 = vld [vmem:[#allocation3 + $0x40] sm:$0xff]
      %v443 = vld [vmem:[#allocation3 + $0x48] sm:$0xff]
      %v444 = vld [vmem:[#allocation3 + $0x50] sm:$0xff]
      %v445 = vld [vmem:[#allocation3 + $0x58] sm:$0xff]
      %v446 = vld [vmem:[#allocation3 + $0x60] sm:$0xff]
      %v447 = vld [vmem:[#allocation3 + $0x68] sm:$0xff]
      %v448 = vld [vmem:[#allocation3 + $0x70] sm:$0xff]
      %v449 = vld [vmem:[#allocation3 + $0x78] sm:$0xff]
      %v450 = vsel %vm418, %v333, -inf
      %v451 = vsel %vm419, %v334, -inf
      %v452 = vsel %vm420, %v335, -inf
      %v453 = vsel %vm421, %v336, -inf
      %v454 = vsel %vm422, %v337, -inf
      %v455 = vsel %vm423, %v338, -inf
      %v456 = vsel %vm424, %v339, -inf
      %v457 = vsel %vm425, %v340, -inf
      %v458 = vsel %vm426, %v341, -inf
      %v459 = vsel %vm427, %v342, -inf
      %v460 = vsel %vm428, %v343, -inf
      %v461 = vsel %vm429, %v344, -inf
      %v462 = vsel %vm430, %v345, -inf
      %v463 = vsel %vm431, %v346, -inf
      %v464 = vsel %vm432, %v347, -inf
      %v465 = vsel %vm433, %v348, -inf
      %466 = vmax.xlane.f32.xlu0 %v450
      %v467 = vpop.xlane.xlu0 %466
      %468 = vmax.xlane.f32.xlu0 %v451
      %v469 = vpop.xlane.xlu0 %468
      %470 = vmax.xlane.f32.xlu0 %v452
      %v471 = vpop.xlane.xlu0 %470
      %472 = vmax.xlane.f32.xlu0 %v453
      %v473 = vpop.xlane.xlu0 %472
      %474 = vmax.xlane.f32.xlu0 %v454
      %v475 = vpop.xlane.xlu0 %474
      %476 = vmax.xlane.f32.xlu0 %v455
      %v477 = vpop.xlane.xlu0 %476
      %478 = vmax.xlane.f32.xlu0 %v456
      %v479 = vpop.xlane.xlu0 %478
      %480 = vmax.xlane.f32.xlu0 %v457
      %v481 = vpop.xlane.xlu0 %480
      %482 = vmax.xlane.f32.xlu0 %v458
      %v483 = vpop.xlane.xlu0 %482
      %484 = vmax.xlane.f32.xlu0 %v459
      %v485 = vpop.xlane.xlu0 %484
      %486 = vmax.xlane.f32.xlu0 %v460
      %v487 = vpop.xlane.xlu0 %486
      %488 = vmax.xlane.f32.xlu0 %v461
      %v489 = vpop.xlane.xlu0 %488
      %490 = vmax.xlane.f32.xlu0 %v462
      %v491 = vpop.xlane.xlu0 %490
      %492 = vmax.xlane.f32.xlu0 %v463
      %v493 = vpop.xlane.xlu0 %492
      %494 = vmax.xlane.f32.xlu0 %v464
      %v495 = vpop.xlane.xlu0 %494
      %496 = vmax.xlane.f32.xlu0 %v465
      %v497 = vpop.xlane.xlu0 %496
      %v498 = vmax.f32 %v434, %v467
      %v499 = vmax.f32 %v435, %v469
      %v500 = vmax.f32 %v436, %v471
      %v501 = vmax.f32 %v437, %v473
      %v502 = vmax.f32 %v438, %v475
      %v503 = vmax.f32 %v439, %v477
      %v504 = vmax.f32 %v440, %v479
      %v505 = vmax.f32 %v441, %v481
      %v506 = vmax.f32 %v442, %v483
      %v507 = vmax.f32 %v443, %v485
      %v508 = vmax.f32 %v444, %v487
      %v509 = vmax.f32 %v445, %v489
      %v510 = vmax.f32 %v446, %v491
      %v511 = vmax.f32 %v447, %v493
      %v512 = vmax.f32 %v448, %v495
      %v513 = vmax.f32 %v449, %v497
      %vm514 = vcmask 7168
      %515 = vst.msk [vmem:[#allocation3] sm:$0xff] %vm514, %v498
      %516 = vst.msk [vmem:[#allocation3 + $0x8] sm:$0xff] %vm514, %v499
      %517 = vst.msk [vmem:[#allocation3 + $0x10] sm:$0xff] %vm514, %v500
      %518 = vst.msk [vmem:[#allocation3 + $0x18] sm:$0xff] %vm514, %v501
      %519 = vst.msk [vmem:[#allocation3 + $0x20] sm:$0xff] %vm514, %v502
      %520 = vst.msk [vmem:[#allocation3 + $0x28] sm:$0xff] %vm514, %v503
      %521 = vst.msk [vmem:[#allocation3 + $0x30] sm:$0xff] %vm514, %v504
      %522 = vst.msk [vmem:[#allocation3 + $0x38] sm:$0xff] %vm514, %v505
      %523 = vst.msk [vmem:[#allocation3 + $0x40] sm:$0xff] %vm514, %v506
      %524 = vst.msk [vmem:[#allocation3 + $0x48] sm:$0xff] %vm514, %v507
      %525 = vst.msk [vmem:[#allocation3 + $0x50] sm:$0xff] %vm514, %v508
      %526 = vst.msk [vmem:[#allocation3 + $0x58] sm:$0xff] %vm514, %v509
      %527 = vst.msk [vmem:[#allocation3 + $0x60] sm:$0xff] %vm514, %v510
      %528 = vst.msk [vmem:[#allocation3 + $0x68] sm:$0xff] %vm514, %v511
      %529 = vst.msk [vmem:[#allocation3 + $0x70] sm:$0xff] %vm514, %v512
      %530 = vst.msk [vmem:[#allocation3 + $0x78] sm:$0xff] %vm514, %v513
      %v531 = vld [vmem:[#allocation4] sm:$0xff]
      %v532 = vld [vmem:[#allocation4 + $0x8] sm:$0xff]
      %v533 = vld [vmem:[#allocation4 + $0x10] sm:$0xff]
      %v534 = vld [vmem:[#allocation4 + $0x18] sm:$0xff]
      %v535 = vld [vmem:[#allocation4 + $0x20] sm:$0xff]
      %v536 = vld [vmem:[#allocation4 + $0x28] sm:$0xff]
      %v537 = vld [vmem:[#allocation4 + $0x30] sm:$0xff]
      %v538 = vld [vmem:[#allocation4 + $0x38] sm:$0xff]
      %v539 = vld [vmem:[#allocation4 + $0x40] sm:$0xff]
      %v540 = vld [vmem:[#allocation4 + $0x48] sm:$0xff]
      %v541 = vld [vmem:[#allocation4 + $0x50] sm:$0xff]
      %v542 = vld [vmem:[#allocation4 + $0x58] sm:$0xff]
      %v543 = vld [vmem:[#allocation4 + $0x60] sm:$0xff]
      %v544 = vld [vmem:[#allocation4 + $0x68] sm:$0xff]
      %v545 = vld [vmem:[#allocation4 + $0x70] sm:$0xff]
      %v546 = vld [vmem:[#allocation4 + $0x78] sm:$0xff]
      %v547 = vsel %vm418, inf, %v333
      %v548 = vsel %vm419, inf, %v334
      %v549 = vsel %vm420, inf, %v335
      %v550 = vsel %vm421, inf, %v336
      %v551 = vsel %vm422, inf, %v337
      %v552 = vsel %vm423, inf, %v338
      %v553 = vsel %vm424, inf, %v339
      %v554 = vsel %vm425, inf, %v340
      %v555 = vsel %vm426, inf, %v341
      %v556 = vsel %vm427, inf, %v342
      %v557 = vsel %vm428, inf, %v343
      %v558 = vsel %vm429, inf, %v344
      %v559 = vsel %vm430, inf, %v345
      %v560 = vsel %vm431, inf, %v346
      %v561 = vsel %vm432, inf, %v347
      %v562 = vsel %vm433, inf, %v348
      %563 = vmin.xlane.f32.xlu0 %v547
      %v564 = vpop.xlane.xlu0 %563
      %565 = vmin.xlane.f32.xlu0 %v548
      %v566 = vpop.xlane.xlu0 %565
      %567 = vmin.xlane.f32.xlu0 %v549
      %v568 = vpop.xlane.xlu0 %567
      %569 = vmin.xlane.f32.xlu0 %v550
      %v570 = vpop.xlane.xlu0 %569
      %571 = vmin.xlane.f32.xlu0 %v551
      %v572 = vpop.xlane.xlu0 %571
      %573 = vmin.xlane.f32.xlu0 %v552
      %v574 = vpop.xlane.xlu0 %573
      %575 = vmin.xlane.f32.xlu0 %v553
      %v576 = vpop.xlane.xlu0 %575
      %577 = vmin.xlane.f32.xlu0 %v554
      %v578 = vpop.xlane.xlu0 %577
      %579 = vmin.xlane.f32.xlu0 %v555
      %v580 = vpop.xlane.xlu0 %579
      %581 = vmin.xlane.f32.xlu0 %v556
      %v582 = vpop.xlane.xlu0 %581
      %583 = vmin.xlane.f32.xlu0 %v557
      %v584 = vpop.xlane.xlu0 %583
      %585 = vmin.xlane.f32.xlu0 %v558
      %v586 = vpop.xlane.xlu0 %585
      %587 = vmin.xlane.f32.xlu0 %v559
      %v588 = vpop.xlane.xlu0 %587
      %589 = vmin.xlane.f32.xlu0 %v560
      %v590 = vpop.xlane.xlu0 %589
      %591 = vmin.xlane.f32.xlu0 %v561
      %v592 = vpop.xlane.xlu0 %591
      %593 = vmin.xlane.f32.xlu0 %v562
      %v594 = vpop.xlane.xlu0 %593
      %v595 = vmin.f32 %v531, %v564
      %v596 = vmin.f32 %v532, %v566
      %v597 = vmin.f32 %v533, %v568
      %v598 = vmin.f32 %v534, %v570
      %v599 = vmin.f32 %v535, %v572
      %v600 = vmin.f32 %v536, %v574
      %v601 = vmin.f32 %v537, %v576
      %v602 = vmin.f32 %v538, %v578
      %v603 = vmin.f32 %v539, %v580
      %v604 = vmin.f32 %v540, %v582
      %v605 = vmin.f32 %v541, %v584
      %v606 = vmin.f32 %v542, %v586
      %v607 = vmin.f32 %v543, %v588
      %v608 = vmin.f32 %v544, %v590
      %v609 = vmin.f32 %v545, %v592
      %v610 = vmin.f32 %v546, %v594
      %611 = vst.msk [vmem:[#allocation4] sm:$0xff] %vm514, %v595
      %612 = vst.msk [vmem:[#allocation4 + $0x8] sm:$0xff] %vm514, %v596
      %613 = vst.msk [vmem:[#allocation4 + $0x10] sm:$0xff] %vm514, %v597
      %614 = vst.msk [vmem:[#allocation4 + $0x18] sm:$0xff] %vm514, %v598
      %615 = vst.msk [vmem:[#allocation4 + $0x20] sm:$0xff] %vm514, %v599
      %616 = vst.msk [vmem:[#allocation4 + $0x28] sm:$0xff] %vm514, %v600
      %617 = vst.msk [vmem:[#allocation4 + $0x30] sm:$0xff] %vm514, %v601
      %618 = vst.msk [vmem:[#allocation4 + $0x38] sm:$0xff] %vm514, %v602
      %619 = vst.msk [vmem:[#allocation4 + $0x40] sm:$0xff] %vm514, %v603
      %620 = vst.msk [vmem:[#allocation4 + $0x48] sm:$0xff] %vm514, %v604
      %621 = vst.msk [vmem:[#allocation4 + $0x50] sm:$0xff] %vm514, %v605
      %622 = vst.msk [vmem:[#allocation4 + $0x58] sm:$0xff] %vm514, %v606
      %623 = vst.msk [vmem:[#allocation4 + $0x60] sm:$0xff] %vm514, %v607
      %624 = vst.msk [vmem:[#allocation4 + $0x68] sm:$0xff] %vm514, %v608
      %625 = vst.msk [vmem:[#allocation4 + $0x70] sm:$0xff] %vm514, %v609
      %626 = vst.msk [vmem:[#allocation4 + $0x78] sm:$0xff] %vm514, %v610
    $region37: #{tpu_custom_call.1} parent=1 // pred_fallthru
      _
    // Predicated region
    $region38: #{tpu_custom_call.1} parent=1 // pred_check
      _
    $region39: #{tpu_custom_call.1} parent=1 // pred_check_branch
      %628 = sbr.rel (%p26) target = $region41
    $region40: #{tpu_custom_call.1} parent=1 // pred_region
      %v629 = vld [vmem:[%s2] sm:$0xff]
      %v630 = vld [vmem:[%s2 + $0x8] sm:$0xff]
      %v631 = vld [vmem:[%s2 + $0x10] sm:$0xff]
      %v632 = vld [vmem:[%s2 + $0x18] sm:$0xff]
      %v633 = vld [vmem:[%s2 + $0x20] sm:$0xff]
      %v634 = vld [vmem:[%s2 + $0x28] sm:$0xff]
      %v635 = vld [vmem:[%s2 + $0x30] sm:$0xff]
      %v636 = vld [vmem:[%s2 + $0x38] sm:$0xff]
      %v637 = vld [vmem:[%s2 + $0x40] sm:$0xff]
      %v638 = vld [vmem:[%s2 + $0x48] sm:$0xff]
      %v639 = vld [vmem:[%s2 + $0x50] sm:$0xff]
      %v640 = vld [vmem:[%s2 + $0x58] sm:$0xff]
      %v641 = vld [vmem:[%s2 + $0x60] sm:$0xff]
      %v642 = vld [vmem:[%s2 + $0x68] sm:$0xff]
      %v643 = vld [vmem:[%s2 + $0x70] sm:$0xff]
      %v644 = vld [vmem:[%s2 + $0x78] sm:$0xff]
      %v645 = vld [vmem:[#allocation3] sm:$0xff]
      %v646 = vld [vmem:[#allocation3 + $0x8] sm:$0xff]
      %v647 = vld [vmem:[#allocation3 + $0x10] sm:$0xff]
      %v648 = vld [vmem:[#allocation3 + $0x18] sm:$0xff]
      %v649 = vld [vmem:[#allocation3 + $0x20] sm:$0xff]
      %v650 = vld [vmem:[#allocation3 + $0x28] sm:$0xff]
      %v651 = vld [vmem:[#allocation3 + $0x30] sm:$0xff]
      %v652 = vld [vmem:[#allocation3 + $0x38] sm:$0xff]
      %v653 = vld [vmem:[#allocation3 + $0x40] sm:$0xff]
      %v654 = vld [vmem:[#allocation3 + $0x48] sm:$0xff]
      %v655 = vld [vmem:[#allocation3 + $0x50] sm:$0xff]
      %v656 = vld [vmem:[#allocation3 + $0x58] sm:$0xff]
      %v657 = vld [vmem:[#allocation3 + $0x60] sm:$0xff]
      %v658 = vld [vmem:[#allocation3 + $0x68] sm:$0xff]
      %v659 = vld [vmem:[#allocation3 + $0x70] sm:$0xff]
      %v660 = vld [vmem:[#allocation3 + $0x78] sm:$0xff]
      %v661 = vadd.f32 %v629, %v645
      %v662 = vadd.f32 %v630, %v646
      %v663 = vadd.f32 %v631, %v647
      %v664 = vadd.f32 %v632, %v648
      %v665 = vadd.f32 %v633, %v649
      %v666 = vadd.f32 %v634, %v650
      %v667 = vadd.f32 %v635, %v651
      %v668 = vadd.f32 %v636, %v652
      %v669 = vadd.f32 %v637, %v653
      %v670 = vadd.f32 %v638, %v654
      %v671 = vadd.f32 %v639, %v655
      %v672 = vadd.f32 %v640, %v656
      %v673 = vadd.f32 %v641, %v657
      %v674 = vadd.f32 %v642, %v658
      %v675 = vadd.f32 %v643, %v659
      %v676 = vadd.f32 %v644, %v660
      %v677 = vmul.f32 %v661, 2.0
      %v678 = vmul.f32 %v662, 2.0
      %v679 = vmul.f32 %v663, 2.0
      %v680 = vmul.f32 %v664, 2.0
      %v681 = vmul.f32 %v665, 2.0
      %v682 = vmul.f32 %v666, 2.0
      %v683 = vmul.f32 %v667, 2.0
      %v684 = vmul.f32 %v668, 2.0
      %v685 = vmul.f32 %v669, 2.0
      %v686 = vmul.f32 %v670, 2.0
      %v687 = vmul.f32 %v671, 2.0
      %v688 = vmul.f32 %v672, 2.0
      %v689 = vmul.f32 %v673, 2.0
      %v690 = vmul.f32 %v674, 2.0
      %v691 = vmul.f32 %v675, 2.0
      %v692 = vmul.f32 %v676, 2.0
      %v693 = vmax.f32 %v677, 1e-12
      %v694 = vmax.f32 %v678, 1e-12
      %v695 = vmax.f32 %v679, 1e-12
      %v696 = vmax.f32 %v680, 1e-12
      %v697 = vmax.f32 %v681, 1e-12
      %v698 = vmax.f32 %v682, 1e-12
      %v699 = vmax.f32 %v683, 1e-12
      %v700 = vmax.f32 %v684, 1e-12
      %v701 = vmax.f32 %v685, 1e-12
      %v702 = vmax.f32 %v686, 1e-12
      %v703 = vmax.f32 %v687, 1e-12
      %v704 = vmax.f32 %v688, 1e-12
      %v705 = vmax.f32 %v689, 1e-12
      %v706 = vmax.f32 %v690, 1e-12
      %v707 = vmax.f32 %v691, 1e-12
      %v708 = vmax.f32 %v692, 1e-12
      %v709 = vrsqrt.pop %v693
      %v710 = vmul.f32 %v693, %v709
      %vm711 = vcmp.eq.f32.partialorder %v693, inf
      %v712 = vsel %vm711, %v693, %v710
      %vm713 = vcmp.eq.f32.partialorder %v693, 0.0
      %v714 = vand.u32 %v693, 2147483648
      %v715 = vsel %vm713, %v714, %v712
      %v716 = vrsqrt.pop %v694
      %v717 = vmul.f32 %v694, %v716
      %vm718 = vcmp.eq.f32.partialorder %v694, inf
      %v719 = vsel %vm718, %v694, %v717
      %vm720 = vcmp.eq.f32.partialorder %v694, 0.0
      %v721 = vand.u32 %v694, 2147483648
      %v722 = vsel %vm720, %v721, %v719
      %v723 = vrsqrt.pop %v695
      %v724 = vmul.f32 %v695, %v723
      %vm725 = vcmp.eq.f32.partialorder %v695, inf
      %v726 = vsel %vm725, %v695, %v724
      %vm727 = vcmp.eq.f32.partialorder %v695, 0.0
      %v728 = vand.u32 %v695, 2147483648
      %v729 = vsel %vm727, %v728, %v726
      %v730 = vrsqrt.pop %v696
      %v731 = vmul.f32 %v696, %v730
      %vm732 = vcmp.eq.f32.partialorder %v696, inf
      %v733 = vsel %vm732, %v696, %v731
      %vm734 = vcmp.eq.f32.partialorder %v696, 0.0
      %v735 = vand.u32 %v696, 2147483648
      %v736 = vsel %vm734, %v735, %v733
      %v737 = vrsqrt.pop %v697
      %v738 = vmul.f32 %v697, %v737
      %vm739 = vcmp.eq.f32.partialorder %v697, inf
      %v740 = vsel %vm739, %v697, %v738
      %vm741 = vcmp.eq.f32.partialorder %v697, 0.0
      %v742 = vand.u32 %v697, 2147483648
      %v743 = vsel %vm741, %v742, %v740
      %v744 = vrsqrt.pop %v698
      %v745 = vmul.f32 %v698, %v744
      %vm746 = vcmp.eq.f32.partialorder %v698, inf
      %v747 = vsel %vm746, %v698, %v745
      %vm748 = vcmp.eq.f32.partialorder %v698, 0.0
      %v749 = vand.u32 %v698, 2147483648
      %v750 = vsel %vm748, %v749, %v747
      %v751 = vrsqrt.pop %v699
      %v752 = vmul.f32 %v699, %v751
      %vm753 = vcmp.eq.f32.partialorder %v699, inf
      %v754 = vsel %vm753, %v699, %v752
      %vm755 = vcmp.eq.f32.partialorder %v699, 0.0
      %v756 = vand.u32 %v699, 2147483648
      %v757 = vsel %vm755, %v756, %v754
      %v758 = vrsqrt.pop %v700
      %v759 = vmul.f32 %v700, %v758
      %vm760 = vcmp.eq.f32.partialorder %v700, inf
      %v761 = vsel %vm760, %v700, %v759
      %vm762 = vcmp.eq.f32.partialorder %v700, 0.0
      %v763 = vand.u32 %v700, 2147483648
      %v764 = vsel %vm762, %v763, %v761
      %v765 = vrsqrt.pop %v701
      %v766 = vmul.f32 %v701, %v765
      %vm767 = vcmp.eq.f32.partialorder %v701, inf
      %v768 = vsel %vm767, %v701, %v766
      %vm769 = vcmp.eq.f32.partialorder %v701, 0.0
      %v770 = vand.u32 %v701, 2147483648
      %v771 = vsel %vm769, %v770, %v768
      %v772 = vrsqrt.pop %v702
      %v773 = vmul.f32 %v702, %v772
      %vm774 = vcmp.eq.f32.partialorder %v702, inf
      %v775 = vsel %vm774, %v702, %v773
      %vm776 = vcmp.eq.f32.partialorder %v702, 0.0
      %v777 = vand.u32 %v702, 2147483648
      %v778 = vsel %vm776, %v777, %v775
      %v779 = vrsqrt.pop %v703
      %v780 = vmul.f32 %v703, %v779
      %vm781 = vcmp.eq.f32.partialorder %v703, inf
      %v782 = vsel %vm781, %v703, %v780
      %vm783 = vcmp.eq.f32.partialorder %v703, 0.0
      %v784 = vand.u32 %v703, 2147483648
      %v785 = vsel %vm783, %v784, %v782
      %v786 = vrsqrt.pop %v704
      %v787 = vmul.f32 %v704, %v786
      %vm788 = vcmp.eq.f32.partialorder %v704, inf
      %v789 = vsel %vm788, %v704, %v787
      %vm790 = vcmp.eq.f32.partialorder %v704, 0.0
      %v791 = vand.u32 %v704, 2147483648
      %v792 = vsel %vm790, %v791, %v789
      %v793 = vrsqrt.pop %v705
      %v794 = vmul.f32 %v705, %v793
      %vm795 = vcmp.eq.f32.partialorder %v705, inf
      %v796 = vsel %vm795, %v705, %v794
      %vm797 = vcmp.eq.f32.partialorder %v705, 0.0
      %v798 = vand.u32 %v705, 2147483648
      %v799 = vsel %vm797, %v798, %v796
      %v800 = vrsqrt.pop %v706
      %v801 = vmul.f32 %v706, %v800
      %vm802 = vcmp.eq.f32.partialorder %v706, inf
      %v803 = vsel %vm802, %v706, %v801
      %vm804 = vcmp.eq.f32.partialorder %v706, 0.0
      %v805 = vand.u32 %v706, 2147483648
      %v806 = vsel %vm804, %v805, %v803
      %v807 = vrsqrt.pop %v707
      %v808 = vmul.f32 %v707, %v807
      %vm809 = vcmp.eq.f32.partialorder %v707, inf
      %v810 = vsel %vm809, %v707, %v808
      %vm811 = vcmp.eq.f32.partialorder %v707, 0.0
      %v812 = vand.u32 %v707, 2147483648
      %v813 = vsel %vm811, %v812, %v810
      %v814 = vrsqrt.pop %v708
      %v815 = vmul.f32 %v708, %v814
      %vm816 = vcmp.eq.f32.partialorder %v708, inf
      %v817 = vsel %vm816, %v708, %v815
      %vm818 = vcmp.eq.f32.partialorder %v708, 0.0
      %v819 = vand.u32 %v708, 2147483648
      %v820 = vsel %vm818, %v819, %v817
      %v821 = vld [vmem:[#allocation4] sm:$0xff]
      %v822 = vld [vmem:[#allocation4 + $0x8] sm:$0xff]
      %v823 = vld [vmem:[#allocation4 + $0x10] sm:$0xff]
      %v824 = vld [vmem:[#allocation4 + $0x18] sm:$0xff]
      %v825 = vld [vmem:[#allocation4 + $0x20] sm:$0xff]
      %v826 = vld [vmem:[#allocation4 + $0x28] sm:$0xff]
      %v827 = vld [vmem:[#allocation4 + $0x30] sm:$0xff]
      %v828 = vld [vmem:[#allocation4 + $0x38] sm:$0xff]
      %v829 = vld [vmem:[#allocation4 + $0x40] sm:$0xff]
      %v830 = vld [vmem:[#allocation4 + $0x48] sm:$0xff]
      %v831 = vld [vmem:[#allocation4 + $0x50] sm:$0xff]
      %v832 = vld [vmem:[#allocation4 + $0x58] sm:$0xff]
      %v833 = vld [vmem:[#allocation4 + $0x60] sm:$0xff]
      %v834 = vld [vmem:[#allocation4 + $0x68] sm:$0xff]
      %v835 = vld [vmem:[#allocation4 + $0x70] sm:$0xff]
      %v836 = vld [vmem:[#allocation4 + $0x78] sm:$0xff]
      %v837 = vadd.f32 %v629, %v821
      %v838 = vadd.f32 %v630, %v822
      %v839 = vadd.f32 %v631, %v823
      %v840 = vadd.f32 %v632, %v824
      %v841 = vadd.f32 %v633, %v825
      %v842 = vadd.f32 %v634, %v826
      %v843 = vadd.f32 %v635, %v827
      %v844 = vadd.f32 %v636, %v828
      %v845 = vadd.f32 %v637, %v829
      %v846 = vadd.f32 %v638, %v830
      %v847 = vadd.f32 %v639, %v831
      %v848 = vadd.f32 %v640, %v832
      %v849 = vadd.f32 %v641, %v833
      %v850 = vadd.f32 %v642, %v834
      %v851 = vadd.f32 %v643, %v835
      %v852 = vadd.f32 %v644, %v836
      %v853 = vmul.f32 %v837, 2.0
      %v854 = vmul.f32 %v838, 2.0
      %v855 = vmul.f32 %v839, 2.0
      %v856 = vmul.f32 %v840, 2.0
      %v857 = vmul.f32 %v841, 2.0
      %v858 = vmul.f32 %v842, 2.0
      %v859 = vmul.f32 %v843, 2.0
      %v860 = vmul.f32 %v844, 2.0
      %v861 = vmul.f32 %v845, 2.0
      %v862 = vmul.f32 %v846, 2.0
      %v863 = vmul.f32 %v847, 2.0
      %v864 = vmul.f32 %v848, 2.0
      %v865 = vmul.f32 %v849, 2.0
      %v866 = vmul.f32 %v850, 2.0
      %v867 = vmul.f32 %v851, 2.0
      %v868 = vmul.f32 %v852, 2.0
      %v869 = vmax.f32 %v853, 1e-12
      %v870 = vmax.f32 %v854, 1e-12
      %v871 = vmax.f32 %v855, 1e-12
      %v872 = vmax.f32 %v856, 1e-12
      %v873 = vmax.f32 %v857, 1e-12
      %v874 = vmax.f32 %v858, 1e-12
      %v875 = vmax.f32 %v859, 1e-12
      %v876 = vmax.f32 %v860, 1e-12
      %v877 = vmax.f32 %v861, 1e-12
      %v878 = vmax.f32 %v862, 1e-12
      %v879 = vmax.f32 %v863, 1e-12
      %v880 = vmax.f32 %v864, 1e-12
      %v881 = vmax.f32 %v865, 1e-12
      %v882 = vmax.f32 %v866, 1e-12
      %v883 = vmax.f32 %v867, 1e-12
      %v884 = vmax.f32 %v868, 1e-12
      %v885 = vrsqrt.pop %v869
      %v886 = vmul.f32 %v869, %v885
      %vm887 = vcmp.eq.f32.partialorder %v869, inf
      %v888 = vsel %vm887, %v869, %v886
      %vm889 = vcmp.eq.f32.partialorder %v869, 0.0
      %v890 = vand.u32 %v869, 2147483648
      %v891 = vsel %vm889, %v890, %v888
      %v892 = vrsqrt.pop %v870
      %v893 = vmul.f32 %v870, %v892
      %vm894 = vcmp.eq.f32.partialorder %v870, inf
      %v895 = vsel %vm894, %v870, %v893
      %vm896 = vcmp.eq.f32.partialorder %v870, 0.0
      %v897 = vand.u32 %v870, 2147483648
      %v898 = vsel %vm896, %v897, %v895
      %v899 = vrsqrt.pop %v871
      %v900 = vmul.f32 %v871, %v899
      %vm901 = vcmp.eq.f32.partialorder %v871, inf
      %v902 = vsel %vm901, %v871, %v900
      %vm903 = vcmp.eq.f32.partialorder %v871, 0.0
      %v904 = vand.u32 %v871, 2147483648
      %v905 = vsel %vm903, %v904, %v902
      %v906 = vrsqrt.pop %v872
      %v907 = vmul.f32 %v872, %v906
      %vm908 = vcmp.eq.f32.partialorder %v872, inf
      %v909 = vsel %vm908, %v872, %v907
      %vm910 = vcmp.eq.f32.partialorder %v872, 0.0
      %v911 = vand.u32 %v872, 2147483648
      %v912 = vsel %vm910, %v911, %v909
      %v913 = vrsqrt.pop %v873
      %v914 = vmul.f32 %v873, %v913
      %vm915 = vcmp.eq.f32.partialorder %v873, inf
      %v916 = vsel %vm915, %v873, %v914
      %vm917 = vcmp.eq.f32.partialorder %v873, 0.0
      %v918 = vand.u32 %v873, 2147483648
      %v919 = vsel %vm917, %v918, %v916
      %v920 = vrsqrt.pop %v874
      %v921 = vmul.f32 %v874, %v920
      %vm922 = vcmp.eq.f32.partialorder %v874, inf
      %v923 = vsel %vm922, %v874, %v921
      %vm924 = vcmp.eq.f32.partialorder %v874, 0.0
      %v925 = vand.u32 %v874, 2147483648
      %v926 = vsel %vm924, %v925, %v923
      %v927 = vrsqrt.pop %v875
      %v928 = vmul.f32 %v875, %v927
      %vm929 = vcmp.eq.f32.partialorder %v875, inf
      %v930 = vsel %vm929, %v875, %v928
      %vm931 = vcmp.eq.f32.partialorder %v875, 0.0
      %v932 = vand.u32 %v875, 2147483648
      %v933 = vsel %vm931, %v932, %v930
      %v934 = vrsqrt.pop %v876
      %v935 = vmul.f32 %v876, %v934
      %vm936 = vcmp.eq.f32.partialorder %v876, inf
      %v937 = vsel %vm936, %v876, %v935
      %vm938 = vcmp.eq.f32.partialorder %v876, 0.0
      %v939 = vand.u32 %v876, 2147483648
      %v940 = vsel %vm938, %v939, %v937
      %v941 = vrsqrt.pop %v877
      %v942 = vmul.f32 %v877, %v941
      %vm943 = vcmp.eq.f32.partialorder %v877, inf
      %v944 = vsel %vm943, %v877, %v942
      %vm945 = vcmp.eq.f32.partialorder %v877, 0.0
      %v946 = vand.u32 %v877, 2147483648
      %v947 = vsel %vm945, %v946, %v944
      %v948 = vrsqrt.pop %v878
      %v949 = vmul.f32 %v878, %v948
      %vm950 = vcmp.eq.f32.partialorder %v878, inf
      %v951 = vsel %vm950, %v878, %v949
      %vm952 = vcmp.eq.f32.partialorder %v878, 0.0
      %v953 = vand.u32 %v878, 2147483648
      %v954 = vsel %vm952, %v953, %v951
      %v955 = vrsqrt.pop %v879
      %v956 = vmul.f32 %v879, %v955
      %vm957 = vcmp.eq.f32.partialorder %v879, inf
      %v958 = vsel %vm957, %v879, %v956
      %vm959 = vcmp.eq.f32.partialorder %v879, 0.0
      %v960 = vand.u32 %v879, 2147483648
      %v961 = vsel %vm959, %v960, %v958
      %v962 = vrsqrt.pop %v880
      %v963 = vmul.f32 %v880, %v962
      %vm964 = vcmp.eq.f32.partialorder %v880, inf
      %v965 = vsel %vm964, %v880, %v963
      %vm966 = vcmp.eq.f32.partialorder %v880, 0.0
      %v967 = vand.u32 %v880, 2147483648
      %v968 = vsel %vm966, %v967, %v965
      %v969 = vrsqrt.pop %v881
      %v970 = vmul.f32 %v881, %v969
      %vm971 = vcmp.eq.f32.partialorder %v881, inf
      %v972 = vsel %vm971, %v881, %v970
      %vm973 = vcmp.eq.f32.partialorder %v881, 0.0
      %v974 = vand.u32 %v881, 2147483648
      %v975 = vsel %vm973, %v974, %v972
      %v976 = vrsqrt.pop %v882
      %v977 = vmul.f32 %v882, %v976
      %vm978 = vcmp.eq.f32.partialorder %v882, inf
      %v979 = vsel %vm978, %v882, %v977
      %vm980 = vcmp.eq.f32.partialorder %v882, 0.0
      %v981 = vand.u32 %v882, 2147483648
      %v982 = vsel %vm980, %v981, %v979
      %v983 = vrsqrt.pop %v883
      %v984 = vmul.f32 %v883, %v983
      %vm985 = vcmp.eq.f32.partialorder %v883, inf
      %v986 = vsel %vm985, %v883, %v984
      %vm987 = vcmp.eq.f32.partialorder %v883, 0.0
      %v988 = vand.u32 %v883, 2147483648
      %v989 = vsel %vm987, %v988, %v986
      %v990 = vrsqrt.pop %v884
      %v991 = vmul.f32 %v884, %v990
      %vm992 = vcmp.eq.f32.partialorder %v884, inf
      %v993 = vsel %vm992, %v884, %v991
      %vm994 = vcmp.eq.f32.partialorder %v884, 0.0
      %v995 = vand.u32 %v884, 2147483648
      %v996 = vsel %vm994, %v995, %v993
      %s997 = smul.u32 0, 128
      %v998 = vlaneseq
      %v999 = vshrl.u32 %v998, 7
      %v1000 = vadd.s32 %v999, 8
      %v1001 = vadd.s32 %v999, 16
      %v1002 = vadd.s32 %v999, 24
      %v1003 = vadd.s32 %v999, 32
      %v1004 = vadd.s32 %v999, 40
      %v1005 = vadd.s32 %v999, 48
      %v1006 = vadd.s32 %v999, 56
      %v1007 = vadd.s32 %v999, 64
      %v1008 = vadd.s32 %v999, 72
      %v1009 = vadd.s32 %v999, 80
      %v1010 = vadd.s32 %v999, 88
      %v1011 = vadd.s32 %v999, 96
      %v1012 = vadd.s32 %v999, 104
      %v1013 = vadd.s32 %v999, 112
      %v1014 = vadd.s32 %v999, 120
      %v1015 = vstv %s997
      %v1016 = vadd.s32 %v1015, %v999
      %v1017 = vadd.s32 %v1015, %v1000
      %v1018 = vadd.s32 %v1015, %v1001
      %v1019 = vadd.s32 %v1015, %v1002
      %v1020 = vadd.s32 %v1015, %v1003
      %v1021 = vadd.s32 %v1015, %v1004
      %v1022 = vadd.s32 %v1015, %v1005
      %v1023 = vadd.s32 %v1015, %v1006
      %v1024 = vadd.s32 %v1015, %v1007
      %v1025 = vadd.s32 %v1015, %v1008
      %v1026 = vadd.s32 %v1015, %v1009
      %v1027 = vadd.s32 %v1015, %v1010
      %v1028 = vadd.s32 %v1015, %v1011
      %v1029 = vadd.s32 %v1015, %v1012
      %v1030 = vadd.s32 %v1015, %v1013
      %v1031 = vadd.s32 %v1015, %v1014
      %vm1032 = vcmp.lt.s32.totalorder %v1016, 8
      %vm1033 = vcmp.lt.s32.totalorder %v1017, 8
      %vm1034 = vcmp.lt.s32.totalorder %v1018, 8
      %vm1035 = vcmp.lt.s32.totalorder %v1019, 8
      %vm1036 = vcmp.lt.s32.totalorder %v1020, 8
      %vm1037 = vcmp.lt.s32.totalorder %v1021, 8
      %vm1038 = vcmp.lt.s32.totalorder %v1022, 8
      %vm1039 = vcmp.lt.s32.totalorder %v1023, 8
      %vm1040 = vcmp.lt.s32.totalorder %v1024, 8
      %vm1041 = vcmp.lt.s32.totalorder %v1025, 8
      %vm1042 = vcmp.lt.s32.totalorder %v1026, 8
      %vm1043 = vcmp.lt.s32.totalorder %v1027, 8
      %vm1044 = vcmp.lt.s32.totalorder %v1028, 8
      %vm1045 = vcmp.lt.s32.totalorder %v1029, 8
      %vm1046 = vcmp.lt.s32.totalorder %v1030, 8
      %vm1047 = vcmp.lt.s32.totalorder %v1031, 8
      %v1048 = vsub.f32 %v891, %v715
      %v1049 = vsub.f32 %v898, %v722
      %v1050 = vsub.f32 %v905, %v729
      %v1051 = vsub.f32 %v912, %v736
      %v1052 = vsub.f32 %v919, %v743
      %v1053 = vsub.f32 %v926, %v750
      %v1054 = vsub.f32 %v933, %v757
      %v1055 = vsub.f32 %v940, %v764
      %v1056 = vsub.f32 %v947, %v771
      %v1057 = vsub.f32 %v954, %v778
      %v1058 = vsub.f32 %v961, %v785
      %v1059 = vsub.f32 %v968, %v792
      %v1060 = vsub.f32 %v975, %v799
      %v1061 = vsub.f32 %v982, %v806
      %v1062 = vsub.f32 %v989, %v813
      %v1063 = vsub.f32 %v996, %v820
      %v1064 = vsub.f32 0.3, %v1048
      %v1065 = vsub.f32 0.3, %v1049
      %v1066 = vsub.f32 0.3, %v1050
      %v1067 = vsub.f32 0.3, %v1051
      %v1068 = vsub.f32 0.3, %v1052
      %v1069 = vsub.f32 0.3, %v1053
      %v1070 = vsub.f32 0.3, %v1054
      %v1071 = vsub.f32 0.3, %v1055
      %v1072 = vsub.f32 0.3, %v1056
      %v1073 = vsub.f32 0.3, %v1057
      %v1074 = vsub.f32 0.3, %v1058
      %v1075 = vsub.f32 0.3, %v1059
      %v1076 = vsub.f32 0.3, %v1060
      %v1077 = vsub.f32 0.3, %v1061
      %v1078 = vsub.f32 0.3, %v1062
      %v1079 = vsub.f32 0.3, %v1063
      %v1080 = vmax.f32 %v1064, 0.0
      %v1081 = vmax.f32 %v1065, 0.0
      %v1082 = vmax.f32 %v1066, 0.0
      %v1083 = vmax.f32 %v1067, 0.0
      %v1084 = vmax.f32 %v1068, 0.0
      %v1085 = vmax.f32 %v1069, 0.0
      %v1086 = vmax.f32 %v1070, 0.0
      %v1087 = vmax.f32 %v1071, 0.0
      %v1088 = vmax.f32 %v1072, 0.0
      %v1089 = vmax.f32 %v1073, 0.0
      %v1090 = vmax.f32 %v1074, 0.0
      %v1091 = vmax.f32 %v1075, 0.0
      %v1092 = vmax.f32 %v1076, 0.0
      %v1093 = vmax.f32 %v1077, 0.0
      %v1094 = vmax.f32 %v1078, 0.0
      %v1095 = vmax.f32 %v1079, 0.0
      %v1096 = vsel %vm1032, %v1080, 0.0
      %v1097 = vsel %vm1033, %v1081, 0.0
      %v1098 = vsel %vm1034, %v1082, 0.0
      %v1099 = vsel %vm1035, %v1083, 0.0
      %v1100 = vsel %vm1036, %v1084, 0.0
      %v1101 = vsel %vm1037, %v1085, 0.0
      %v1102 = vsel %vm1038, %v1086, 0.0
      %v1103 = vsel %vm1039, %v1087, 0.0
      %v1104 = vsel %vm1040, %v1088, 0.0
      %v1105 = vsel %vm1041, %v1089, 0.0
      %v1106 = vsel %vm1042, %v1090, 0.0
      %v1107 = vsel %vm1043, %v1091, 0.0
      %v1108 = vsel %vm1044, %v1092, 0.0
      %v1109 = vsel %vm1045, %v1093, 0.0
      %v1110 = vsel %vm1046, %v1094, 0.0
      %v1111 = vsel %vm1047, %v1095, 0.0
      %vm1112 = vcmp.gt.f32.partialorder %v891, %v715
      %vm1113 = vcmp.gt.f32.partialorder %v898, %v722
      %vm1114 = vcmp.gt.f32.partialorder %v905, %v729
      %vm1115 = vcmp.gt.f32.partialorder %v912, %v736
      %vm1116 = vcmp.gt.f32.partialorder %v919, %v743
      %vm1117 = vcmp.gt.f32.partialorder %v926, %v750
      %vm1118 = vcmp.gt.f32.partialorder %v933, %v757
      %vm1119 = vcmp.gt.f32.partialorder %v940, %v764
      %vm1120 = vcmp.gt.f32.partialorder %v947, %v771
      %vm1121 = vcmp.gt.f32.partialorder %v954, %v778
      %vm1122 = vcmp.gt.f32.partialorder %v961, %v785
      %vm1123 = vcmp.gt.f32.partialorder %v968, %v792
      %vm1124 = vcmp.gt.f32.partialorder %v975, %v799
      %vm1125 = vcmp.gt.f32.partialorder %v982, %v806
      %vm1126 = vcmp.gt.f32.partialorder %v989, %v813
      %vm1127 = vcmp.gt.f32.partialorder %v996, %v820
      %vm1128 = vmand %vm1032, %vm1112
      %vm1129 = vmand %vm1033, %vm1113
      %vm1130 = vmand %vm1034, %vm1114
      %vm1131 = vmand %vm1035, %vm1115
      %vm1132 = vmand %vm1036, %vm1116
      %vm1133 = vmand %vm1037, %vm1117
      %vm1134 = vmand %vm1038, %vm1118
      %vm1135 = vmand %vm1039, %vm1119
      %vm1136 = vmand %vm1040, %vm1120
      %vm1137 = vmand %vm1041, %vm1121
      %vm1138 = vmand %vm1042, %vm1122
      %vm1139 = vmand %vm1043, %vm1123
      %vm1140 = vmand %vm1044, %vm1124
      %vm1141 = vmand %vm1045, %vm1125
      %vm1142 = vmand %vm1046, %vm1126
      %vm1143 = vmand %vm1047, %vm1127
      %v1144 = vsel %vm1128, 1.0, 0.0
      %v1145 = vsel %vm1129, 1.0, 0.0
      %v1146 = vsel %vm1130, 1.0, 0.0
      %v1147 = vsel %vm1131, 1.0, 0.0
      %v1148 = vsel %vm1132, 1.0, 0.0
      %v1149 = vsel %vm1133, 1.0, 0.0
      %v1150 = vsel %vm1134, 1.0, 0.0
      %v1151 = vsel %vm1135, 1.0, 0.0
      %v1152 = vsel %vm1136, 1.0, 0.0
      %v1153 = vsel %vm1137, 1.0, 0.0
      %v1154 = vsel %vm1138, 1.0, 0.0
      %v1155 = vsel %vm1139, 1.0, 0.0
      %v1156 = vsel %vm1140, 1.0, 0.0
      %v1157 = vsel %vm1141, 1.0, 0.0
      %v1158 = vsel %vm1142, 1.0, 0.0
      %v1159 = vsel %vm1143, 1.0, 0.0
      %vm1160 = vcmask 7168
      %v1161 = vsel %vm1160, %v1096, 0.0
      %v1162 = vsel %vm1160, %v1097, 0.0
      %v1163 = vadd.f32 %v1161, %v1162
      %v1164 = vsel %vm1160, %v1098, 0.0
      %v1165 = vadd.f32 %v1163, %v1164
      %v1166 = vsel %vm1160, %v1099, 0.0
      %v1167 = vadd.f32 %v1165, %v1166
      %v1168 = vsel %vm1160, %v1100, 0.0
      %v1169 = vadd.f32 %v1167, %v1168
      %v1170 = vsel %vm1160, %v1101, 0.0
      %v1171 = vadd.f32 %v1169, %v1170
      %v1172 = vsel %vm1160, %v1102, 0.0
      %v1173 = vadd.f32 %v1171, %v1172
      %v1174 = vsel %vm1160, %v1103, 0.0
      %v1175 = vadd.f32 %v1173, %v1174
      %v1176 = vsel %vm1160, %v1104, 0.0
      %v1177 = vadd.f32 %v1175, %v1176
      %v1178 = vsel %vm1160, %v1105, 0.0
      %v1179 = vadd.f32 %v1177, %v1178
      %v1180 = vsel %vm1160, %v1106, 0.0
      %v1181 = vadd.f32 %v1179, %v1180
      %v1182 = vsel %vm1160, %v1107, 0.0
      %v1183 = vadd.f32 %v1181, %v1182
      %v1184 = vsel %vm1160, %v1108, 0.0
      %v1185 = vadd.f32 %v1183, %v1184
      %v1186 = vsel %vm1160, %v1109, 0.0
      %v1187 = vadd.f32 %v1185, %v1186
      %v1188 = vsel %vm1160, %v1110, 0.0
      %v1189 = vadd.f32 %v1187, %v1188
      %v1190 = vsel %vm1160, %v1111, 0.0
      %v1191 = vadd.f32 %v1189, %v1190
      %1192 = vadd.xlane.f32.xlu0 %v1191
      %v1193 = vpop.xlane.xlu0 %1192
      %v1194 = vrot.slane %v1193, 4
      %v1195 = vadd.f32 %v1193, %v1194
      %v1196 = vrot.slane %v1195, 2
      %v1197 = vadd.f32 %v1195, %v1196
      %v1198 = vrot.slane %v1197, 1
      %v1199 = vadd.f32 %v1197, %v1198
      %s1200 = vtos %v1199
      %v1201 = vsel %vm1160, %v1144, 0.0
      %v1202 = vsel %vm1160, %v1145, 0.0
      %v1203 = vadd.f32 %v1201, %v1202
      %v1204 = vsel %vm1160, %v1146, 0.0
      %v1205 = vadd.f32 %v1203, %v1204
      %v1206 = vsel %vm1160, %v1147, 0.0
      %v1207 = vadd.f32 %v1205, %v1206
      %v1208 = vsel %vm1160, %v1148, 0.0
      %v1209 = vadd.f32 %v1207, %v1208
      %v1210 = vsel %vm1160, %v1149, 0.0
      %v1211 = vadd.f32 %v1209, %v1210
      %v1212 = vsel %vm1160, %v1150, 0.0
      %v1213 = vadd.f32 %v1211, %v1212
      %v1214 = vsel %vm1160, %v1151, 0.0
      %v1215 = vadd.f32 %v1213, %v1214
      %v1216 = vsel %vm1160, %v1152, 0.0
      %v1217 = vadd.f32 %v1215, %v1216
      %v1218 = vsel %vm1160, %v1153, 0.0
      %v1219 = vadd.f32 %v1217, %v1218
      %v1220 = vsel %vm1160, %v1154, 0.0
      %v1221 = vadd.f32 %v1219, %v1220
      %v1222 = vsel %vm1160, %v1155, 0.0
      %v1223 = vadd.f32 %v1221, %v1222
      %v1224 = vsel %vm1160, %v1156, 0.0
      %v1225 = vadd.f32 %v1223, %v1224
      %v1226 = vsel %vm1160, %v1157, 0.0
      %v1227 = vadd.f32 %v1225, %v1226
      %v1228 = vsel %vm1160, %v1158, 0.0
      %v1229 = vadd.f32 %v1227, %v1228
      %v1230 = vsel %vm1160, %v1159, 0.0
      %v1231 = vadd.f32 %v1229, %v1230
      %1232 = vadd.xlane.f32.xlu0 %v1231
      %v1233 = vpop.xlane.xlu0 %1232
      %v1234 = vrot.slane %v1233, 4
      %v1235 = vadd.f32 %v1233, %v1234
      %v1236 = vrot.slane %v1235, 2
      %v1237 = vadd.f32 %v1235, %v1236
      %v1238 = vrot.slane %v1237, 1
      %v1239 = vadd.f32 %v1237, %v1238
      %s1240 = vtos %v1239
      %vm1241 = vcmp.eq.s32.totalorder %v999, 0
      %vm1242 = vcmp.eq.s32.totalorder %v999, 1
      %v1243 = vstv %s1240
      %v1244 = vsel %vm1242, %v1243, 0.0
      %v1245 = vstv %s1200
      %v1246 = vsel %vm1241, %v1245, %v1244
      %1247 = vst [vmem:[#allocation5] sm:$0xff] %v1246
    $region41: #{tpu_custom_call.1} parent=1 // pred_fallthru
      _
    // Predicated region
    $region42: #{tpu_custom_call.1} parent=1 // pred_check
      _
    $region43: #{tpu_custom_call.1} parent=1 // pred_check_branch
      %1249 = sbr.rel (0) target = $region45
    $region44: #{tpu_custom_call.1} parent=1 // pred_region
      %s1251 = ssub.s32 128, 128
      %1252 = vsyncadd [#allocation6], %s1251
      %s1254 = sshll.u32 [#allocation5], 4
      %s1255 = int_to_ptr.vmem [resolvable:$true] %s1254
      %1257 = dma.vmem_to_hbm [thread:$0]  %s1255, 128, %s6, [#allocation6]
    $region45: #{tpu_custom_call.1} parent=1 // pred_fallthru
      _
    // Predicated region
    $region46: #{tpu_custom_call.1} parent=1 // pred_check
      _
    $region47: #{tpu_custom_call.1} parent=1 // pred_check_branch
      %1259 = sbr.rel (0) target = $region49
    $region48: #{tpu_custom_call.1} parent=1 // pred_region
      %1260 = dma.done [#allocation6], 128
    $region49: #{tpu_custom_call.1} parent=1 // pred_fallthru
      _
    %1261 = vsyncpa [#allocation6], 1

// kernel: tpu_custom_call.1
$region0: #{tpu_custom_call.1}
  #allocation0 [shape = 'u32[]', space=smem, size = 0x4, offset = 0x4, fixed_abs, tag = 'smem constant byte address 0x4 - core index']
  #allocation1 [shape = 'u32[144,128]{1,0:T(1,128)}', space=vmem, size = 0x12000, scoped, tag = 'internal scratch']
  #allocation2 [shape = 'f32[128,128]{1,0:T(8,128)}', space=vmem, size = 0x10000, scoped, tag = 'scratch operand']
  #allocation3 [shape = 'f32[128,1]{1,0:T(8,128)}', space=vmem, size = 0x10000, scoped, tag = 'scratch operand']
  #allocation4 [shape = 'f32[128,1]{1,0:T(8,128)}', space=vmem, size = 0x10000, scoped, tag = 'scratch operand']
  %s0 = inlined_call_operand.vmem [shape: f32[128,128], index: 0, kind: input, shape index: {}]
  %s1 = inlined_call_operand.vmem [shape: f32[128,128], index: 1, kind: input, shape index: {}]
  %s2 = inlined_call_operand.vmem [shape: f32[128,1], index: 2, kind: input, shape index: {}]
  %s3 = inlined_call_operand.vmem [shape: f32[1,128], index: 3, kind: input, shape index: {}]
  %s4 = inlined_call_operand.vmem [shape: s32[128,1], index: 4, kind: input, shape index: {}]
  %s5 = inlined_call_operand.vmem [shape: s32[1,128], index: 5, kind: input, shape index: {}]
  %s6 = inlined_call_operand.hbm [shape: f32[1,8,128], index: 6, kind: output, shape index: {}]
  %s7 = sld [smem:[#allocation0]]
  $region50: #{tpu_custom_call.1} parent=0
    _
  %s9 = ssub.s32 1, %s7
  %s10 = scalar_select 0, %s9, %s7
  $region1: #{tpu_custom_call.1} parent=0
    #allocation5 [shape = 'u8[4096]{0}', space=vmem, size = 0x1000, scoped, tag = 'output window, operand 0, single buffered']
    #allocation6 [shape = 's32[1]{0}', space=sflag, size = 0x4, scoped, tag = 'scoped memory for tpu_custom_call.1']
    %11 = vsyncpa [#allocation6], 0
    // Predicated region
    $region2: #{tpu_custom_call.1} parent=1 // pred_check
      _
    $region3: #{tpu_custom_call.1} parent=1 // pred_check_branch
      %13 = sbr.rel (0) target = $region5
    $region4: #{tpu_custom_call.1} parent=1 // pred_region
      _
    $region5: #{tpu_custom_call.1} parent=1 // pred_fallthru
      _
    // Predicated region
    $region6: #{tpu_custom_call.1} parent=1 // pred_check
      _
    $region7: #{tpu_custom_call.1} parent=1 // pred_check_branch
      %15 = sbr.rel (0) target = $region9
    $region8: #{tpu_custom_call.1} parent=1 // pred_region
      _
    $region9: #{tpu_custom_call.1} parent=1 // pred_fallthru
      _
    // Predicated region
    $region10: #{tpu_custom_call.1} parent=1 // pred_check
      _
    $region11: #{tpu_custom_call.1} parent=1 // pred_check_branch
      %17 = sbr.rel (0) target = $region13
    $region12: #{tpu_custom_call.1} parent=1 // pred_region
      _
    $region13: #{tpu_custom_call.1} parent=1 // pred_fallthru
      _
    // Predicated region
    $region14: #{tpu_custom_call.1} parent=1 // pred_check
      _
    $region15: #{tpu_custom_call.1} parent=1 // pred_check_branch
      %19 = sbr.rel (0) target = $region17
    $region16: #{tpu_custom_call.1} parent=1 // pred_region
      _
    $region17: #{tpu_custom_call.1} parent=1 // pred_fallthru
      _
    // Predicated region
    $region18: #{tpu_custom_call.1} parent=1 // pred_check
      _
    $region19: #{tpu_custom_call.1} parent=1 // pred_check_branch
      %21 = sbr.rel (0) target = $region21
    $region20: #{tpu_custom_call.1} parent=1 // pred_region
      _
    $region21: #{tpu_custom_call.1} parent=1 // pred_fallthru
      _
    // Predicated region
    $region22: #{tpu_custom_call.1} parent=1 // pred_check
      _
    $region23: #{tpu_custom_call.1} parent=1 // pred_check_branch
      %23 = sbr.rel (0) target = $region25
    $region24: #{tpu_custom_call.1} parent=1 // pred_region
      _
    $region25: #{tpu_custom_call.1} parent=1 // pred_fallthru
      _
    %p24 = scmp.eq.s32.totalorder 0, 0
    %p25 = scmp.eq.s32.totalorder 0, 0
    %p26 = pnand %p24, %p25
    %p27 = pneg %p26
    // Predicated region
    $region26: #{tpu_custom_call.1} parent=1 // pred_check
      _
    $region27: #{tpu_custom_call.1} parent=1 // pred_check_branch
      %29 = sbr.rel (%p26) target = $region29
    $region28: #{tpu_custom_call.1} parent=1 // pred_region
      %vm30 = vcmask 7168
      %31 = vst.msk [vmem:[#allocation3] sm:$0xff] %vm30, -inf
      %32 = vst.msk [vmem:[#allocation3 + $0x8] sm:$0xff] %vm30, -inf
      %33 = vst.msk [vmem:[#allocation3 + $0x10] sm:$0xff] %vm30, -inf
      %34 = vst.msk [vmem:[#allocation3 + $0x18] sm:$0xff] %vm30, -inf
      %35 = vst.msk [vmem:[#allocation3 + $0x20] sm:$0xff] %vm30, -inf
      %36 = vst.msk [vmem:[#allocation3 + $0x28] sm:$0xff] %vm30, -inf
      %37 = vst.msk [vmem:[#allocation3 + $0x30] sm:$0xff] %vm30, -inf
      %38 = vst.msk [vmem:[#allocation3 + $0x38] sm:$0xff] %vm30, -inf
      %39 = vst.msk [vmem:[#allocation3 + $0x40] sm:$0xff] %vm30, -inf
      %40 = vst.msk [vmem:[#allocation3 + $0x48] sm:$0xff] %vm30, -inf
      %41 = vst.msk [vmem:[#allocation3 + $0x50] sm:$0xff] %vm30, -inf
      %42 = vst.msk [vmem:[#allocation3 + $0x58] sm:$0xff] %vm30, -inf
      %43 = vst.msk [vmem:[#allocation3 + $0x60] sm:$0xff] %vm30, -inf
      %44 = vst.msk [vmem:[#allocation3 + $0x68] sm:$0xff] %vm30, -inf
      %45 = vst.msk [vmem:[#allocation3 + $0x70] sm:$0xff] %vm30, -inf
      %46 = vst.msk [vmem:[#allocation3 + $0x78] sm:$0xff] %vm30, -inf
      %47 = vst.msk [vmem:[#allocation4] sm:$0xff] %vm30, inf
      %48 = vst.msk [vmem:[#allocation4 + $0x8] sm:$0xff] %vm30, inf
      %49 = vst.msk [vmem:[#allocation4 + $0x10] sm:$0xff] %vm30, inf
      %50 = vst.msk [vmem:[#allocation4 + $0x18] sm:$0xff] %vm30, inf
      %51 = vst.msk [vmem:[#allocation4 + $0x20] sm:$0xff] %vm30, inf
      %52 = vst.msk [vmem:[#allocation4 + $0x28] sm:$0xff] %vm30, inf
      %53 = vst.msk [vmem:[#allocation4 + $0x30] sm:$0xff] %vm30, inf
      %54 = vst.msk [vmem:[#allocation4 + $0x38] sm:$0xff] %vm30, inf
      %55 = vst.msk [vmem:[#allocation4 + $0x40] sm:$0xff] %vm30, inf
      %56 = vst.msk [vmem:[#allocation4 + $0x48] sm:$0xff] %vm30, inf
      %57 = vst.msk [vmem:[#allocation4 + $0x50] sm:$0xff] %vm30, inf
      %58 = vst.msk [vmem:[#allocation4 + $0x58] sm:$0xff] %vm30, inf
      %59 = vst.msk [vmem:[#allocation4 + $0x60] sm:$0xff] %vm30, inf
      %60 = vst.msk [vmem:[#allocation4 + $0x68] sm:$0xff] %vm30, inf
      %61 = vst.msk [vmem:[#allocation4 + $0x70] sm:$0xff] %vm30, inf
      %62 = vst.msk [vmem:[#allocation4 + $0x78] sm:$0xff] %vm30, inf
    $region29: #{tpu_custom_call.1} parent=1 // pred_fallthru
      _
    // Predicated region
    $region30: #{tpu_custom_call.1} parent=1 // pred_check
      %p63 = pneg %p25
    $region31: #{tpu_custom_call.1} parent=1 // pred_check_branch
      %65 = sbr.rel (%p63) target = $region33
    $region32: #{tpu_custom_call.1} parent=1 // pred_region
      %66 = vst [vmem:[#allocation2] sm:$0xff] 0.0
      %67 = vst [vmem:[#allocation2 + $0x8] sm:$0xff] 0.0
      %68 = vst [vmem:[#allocation2 + $0x10] sm:$0xff] 0.0
      %69 = vst [vmem:[#allocation2 + $0x18] sm:$0xff] 0.0
      %70 = vst [vmem:[#allocation2 + $0x20] sm:$0xff] 0.0
      %71 = vst [vmem:[#allocation2 + $0x28] sm:$0xff] 0.0
      %72 = vst [vmem:[#allocation2 + $0x30] sm:$0xff] 0.0
      %73 = vst [vmem:[#allocation2 + $0x38] sm:$0xff] 0.0
      %74 = vst [vmem:[#allocation2 + $0x40] sm:$0xff] 0.0
      %75 = vst [vmem:[#allocation2 + $0x48] sm:$0xff] 0.0
      %76 = vst [vmem:[#allocation2 + $0x50] sm:$0xff] 0.0
      %77 = vst [vmem:[#allocation2 + $0x58] sm:$0xff] 0.0
      %78 = vst [vmem:[#allocation2 + $0x60] sm:$0xff] 0.0
      %79 = vst [vmem:[#allocation2 + $0x68] sm:$0xff] 0.0
      %80 = vst [vmem:[#allocation2 + $0x70] sm:$0xff] 0.0
      %81 = vst [vmem:[#allocation2 + $0x78] sm:$0xff] 0.0
    $region33: #{tpu_custom_call.1} parent=1 // pred_fallthru
      _
    %v82 = vld [vmem:[#allocation2] sm:$0xff]
    %v83 = vld [vmem:[#allocation2 + $0x8] sm:$0xff]
    %v84 = vld [vmem:[#allocation2 + $0x10] sm:$0xff]
    %v85 = vld [vmem:[#allocation2 + $0x18] sm:$0xff]
    %v86 = vld [vmem:[#allocation2 + $0x20] sm:$0xff]
    %v87 = vld [vmem:[#allocation2 + $0x28] sm:$0xff]
    %v88 = vld [vmem:[#allocation2 + $0x30] sm:$0xff]
    %v89 = vld [vmem:[#allocation2 + $0x38] sm:$0xff]
    %v90 = vld [vmem:[#allocation2 + $0x40] sm:$0xff]
    %v91 = vld [vmem:[#allocation2 + $0x48] sm:$0xff]
    %v92 = vld [vmem:[#allocation2 + $0x50] sm:$0xff]
    %v93 = vld [vmem:[#allocation2 + $0x58] sm:$0xff]
    %v94 = vld [vmem:[#allocation2 + $0x60] sm:$0xff]
    %v95 = vld [vmem:[#allocation2 + $0x68] sm:$0xff]
    %v96 = vld [vmem:[#allocation2 + $0x70] sm:$0xff]
    %v97 = vld [vmem:[#allocation2 + $0x78] sm:$0xff]
    %v98 = vld [vmem:[%s0] sm:$0xff]
    %v99 = vld [vmem:[%s0 + $0x8] sm:$0xff]
    %v100 = vld [vmem:[%s0 + $0x10] sm:$0xff]
    %v101 = vld [vmem:[%s0 + $0x18] sm:$0xff]
    %v102 = vld [vmem:[%s0 + $0x20] sm:$0xff]
    %v103 = vld [vmem:[%s0 + $0x28] sm:$0xff]
    %v104 = vld [vmem:[%s0 + $0x30] sm:$0xff]
    %v105 = vld [vmem:[%s0 + $0x38] sm:$0xff]
    %v106 = vld [vmem:[%s0 + $0x40] sm:$0xff]
    %v107 = vld [vmem:[%s0 + $0x48] sm:$0xff]
    %v108 = vld [vmem:[%s0 + $0x50] sm:$0xff]
    %v109 = vld [vmem:[%s0 + $0x58] sm:$0xff]
    %v110 = vld [vmem:[%s0 + $0x60] sm:$0xff]
    %v111 = vld [vmem:[%s0 + $0x68] sm:$0xff]
    %v112 = vld [vmem:[%s0 + $0x70] sm:$0xff]
    %v113 = vld [vmem:[%s0 + $0x78] sm:$0xff]
    %v114 = vld [vmem:[%s1] sm:$0xff]
    %v115 = vld [vmem:[%s1 + $0x8] sm:$0xff]
    %v116 = vld [vmem:[%s1 + $0x10] sm:$0xff]
    %v117 = vld [vmem:[%s1 + $0x18] sm:$0xff]
    %v118 = vld [vmem:[%s1 + $0x20] sm:$0xff]
    %v119 = vld [vmem:[%s1 + $0x28] sm:$0xff]
    %v120 = vld [vmem:[%s1 + $0x30] sm:$0xff]
    %v121 = vld [vmem:[%s1 + $0x38] sm:$0xff]
    %v122 = vld [vmem:[%s1 + $0x40] sm:$0xff]
    %v123 = vld [vmem:[%s1 + $0x48] sm:$0xff]
    %v124 = vld [vmem:[%s1 + $0x50] sm:$0xff]
    %v125 = vld [vmem:[%s1 + $0x58] sm:$0xff]
    %v126 = vld [vmem:[%s1 + $0x60] sm:$0xff]
    %v127 = vld [vmem:[%s1 + $0x68] sm:$0xff]
    %v128 = vld [vmem:[%s1 + $0x70] sm:$0xff]
    %v129 = vld [vmem:[%s1 + $0x78] sm:$0xff]
    %130 = vmatprep.subr.mxu0 0.0
    %131 = vmatpush1.msra.mxu0 %v129
    %132 = vmatprep.subr.mxu0 0.0
    %133 = vmatpush1.msra.mxu0 %v128
    %134 = vmatprep.subr.mxu0 0.0
    %135 = vmatpush1.msra.mxu0 %v127
    %136 = vmatprep.subr.mxu0 0.0
    %137 = vmatpush1.msra.mxu0 %v126
    %138 = vmatprep.subr.mxu0 0.0
    %139 = vmatpush1.msra.mxu0 %v125
    %140 = vmatprep.subr.mxu0 0.0
    %141 = vmatpush1.msra.mxu0 %v124
    %142 = vmatprep.subr.mxu0 0.0
    %143 = vmatpush1.msra.mxu0 %v123
    %144 = vmatprep.subr.mxu0 0.0
    %145 = vmatpush1.msra.mxu0 %v122
    %146 = vmatprep.subr.mxu0 0.0
    %147 = vmatpush1.msra.mxu0 %v121
    %148 = vmatprep.subr.mxu0 0.0
    %149 = vmatpush1.msra.mxu0 %v120
    %150 = vmatprep.subr.mxu0 0.0
    %151 = vmatpush1.msra.mxu0 %v119
    %152 = vmatprep.subr.mxu0 0.0
    %153 = vmatpush1.msra.mxu0 %v118
    %154 = vmatprep.subr.mxu0 0.0
    %155 = vmatpush1.msra.mxu0 %v117
    %156 = vmatprep.subr.mxu0 0.0
    %157 = vmatpush1.msra.mxu0 %v116
    %158 = vmatprep.subr.mxu0 0.0
    %159 = vmatpush1.msra.mxu0 %v115
    %160 = vmatprep.subr.mxu0 0.0
    %161 = vmatpush1.msra.mxu0 %v114
    %162 = vmatprep.subr.mxu0 0.0
    %163 = vmatpush2.msra.mxu0 0.0
    %164 = vmatprep.subr.mxu0 0.0
    %165 = vmatpush2.msra.mxu0 0.0
    %166 = vmatprep.subr.mxu0 0.0
    %167 = vmatpush2.msra.mxu0 0.0
    %168 = vmatprep.subr.mxu0 0.0
    %169 = vmatpush2.msra.mxu0 0.0
    %170 = vmatprep.subr.mxu0 0.0
    %171 = vmatpush2.msra.mxu0 0.0
    %172 = vmatprep.subr.mxu0 0.0
    %173 = vmatpush2.msra.mxu0 0.0
    %174 = vmatprep.subr.mxu0 0.0
    %175 = vmatpush2.msra.mxu0 0.0
    %176 = vmatprep.subr.mxu0 0.0
    %177 = vmatpush2.msra.mxu0 0.0
    %178 = vmatprep.subr.mxu0 0.0
    %179 = vmatpush2.msra.mxu0 0.0
    %180 = vmatprep.subr.mxu0 0.0
    %181 = vmatpush2.msra.mxu0 0.0
    %182 = vmatprep.subr.mxu0 0.0
    %183 = vmatpush2.msra.mxu0 0.0
    %184 = vmatprep.subr.mxu0 0.0
    %185 = vmatpush2.msra.mxu0 0.0
    %186 = vmatprep.subr.mxu0 0.0
    %187 = vmatpush2.msra.mxu0 0.0
    %188 = vmatprep.subr.mxu0 0.0
    %189 = vmatpush2.msra.mxu0 0.0
    %190 = vmatprep.subr.mxu0 0.0
    %191 = vmatpush2.msra.mxu0 0.0
    %192 = vmatprep.subr.mxu0 0.0
    %193 = vmatpush2.msra.mxu0 0.0
    %194 = vmatprep.mubr.f32.mxu0 0.0
    %195 = vmatmul.mubr.f32.gmra.mxu0 %v98
    %v196 = vpop.f32.mrf.mxu0
    %v197 = vadd.f32 0.0, %v196
    %v198 = vpop.f32.mrf.mxu0
    %199 = vmatprep.mubr.f32.mxu0 0.0
    %200 = vmatmul.mubr.f32.gmra.mxu0 %v99
    %v201 = vpop.f32.mrf.mxu0
    %v202 = vadd.f32 0.0, %v201
    %v203 = vpop.f32.mrf.mxu0
    %204 = vmatprep.mubr.f32.mxu0 0.0
    %205 = vmatmul.mubr.f32.gmra.mxu0 %v100
    %v206 = vpop.f32.mrf.mxu0
    %v207 = vadd.f32 0.0, %v206
    %v208 = vpop.f32.mrf.mxu0
    %209 = vmatprep.mubr.f32.mxu0 0.0
    %210 = vmatmul.mubr.f32.gmra.mxu0 %v101
    %v211 = vpop.f32.mrf.mxu0
    %v212 = vadd.f32 0.0, %v211
    %v213 = vpop.f32.mrf.mxu0
    %214 = vmatprep.mubr.f32.mxu0 0.0
    %215 = vmatmul.mubr.f32.gmra.mxu0 %v102
    %v216 = vpop.f32.mrf.mxu0
    %v217 = vadd.f32 0.0, %v216
    %v218 = vpop.f32.mrf.mxu0
    %219 = vmatprep.mubr.f32.mxu0 0.0
    %220 = vmatmul.mubr.f32.gmra.mxu0 %v103
    %v221 = vpop.f32.mrf.mxu0
    %v222 = vadd.f32 0.0, %v221
    %v223 = vpop.f32.mrf.mxu0
    %224 = vmatprep.mubr.f32.mxu0 0.0
    %225 = vmatmul.mubr.f32.gmra.mxu0 %v104
    %v226 = vpop.f32.mrf.mxu0
    %v227 = vadd.f32 0.0, %v226
    %v228 = vpop.f32.mrf.mxu0
    %229 = vmatprep.mubr.f32.mxu0 0.0
    %230 = vmatmul.mubr.f32.gmra.mxu0 %v105
    %v231 = vpop.f32.mrf.mxu0
    %v232 = vadd.f32 0.0, %v231
    %v233 = vpop.f32.mrf.mxu0
    %234 = vmatprep.mubr.f32.mxu0 0.0
    %235 = vmatmul.mubr.f32.gmra.mxu0 %v106
    %v236 = vpop.f32.mrf.mxu0
    %v237 = vadd.f32 0.0, %v236
    %v238 = vpop.f32.mrf.mxu0
    %239 = vmatprep.mubr.f32.mxu0 0.0
    %240 = vmatmul.mubr.f32.gmra.mxu0 %v107
    %v241 = vpop.f32.mrf.mxu0
    %v242 = vadd.f32 0.0, %v241
    %v243 = vpop.f32.mrf.mxu0
    %244 = vmatprep.mubr.f32.mxu0 0.0
    %245 = vmatmul.mubr.f32.gmra.mxu0 %v108
    %v246 = vpop.f32.mrf.mxu0
    %v247 = vadd.f32 0.0, %v246
    %v248 = vpop.f32.mrf.mxu0
    %249 = vmatprep.mubr.f32.mxu0 0.0
    %250 = vmatmul.mubr.f32.gmra.mxu0 %v109
    %v251 = vpop.f32.mrf.mxu0
    %v252 = vadd.f32 0.0, %v251
    %v253 = vpop.f32.mrf.mxu0
    %254 = vmatprep.mubr.f32.mxu0 0.0
    %255 = vmatmul.mubr.f32.gmra.mxu0 %v110
    %v256 = vpop.f32.mrf.mxu0
    %v257 = vadd.f32 0.0, %v256
    %v258 = vpop.f32.mrf.mxu0
    %259 = vmatprep.mubr.f32.mxu0 0.0
    %260 = vmatmul.mubr.f32.gmra.mxu0 %v111
    %v261 = vpop.f32.mrf.mxu0
    %v262 = vadd.f32 0.0, %v261
    %v263 = vpop.f32.mrf.mxu0
    %264 = vmatprep.mubr.f32.mxu0 0.0
    %265 = vmatmul.mubr.f32.gmra.mxu0 %v112
    %v266 = vpop.f32.mrf.mxu0
    %v267 = vadd.f32 0.0, %v266
    %v268 = vpop.f32.mrf.mxu0
    %269 = vmatprep.mubr.f32.mxu0 0.0
    %270 = vmatmul.mubr.f32.gmra.mxu0 %v113
    %v271 = vpop.f32.mrf.mxu0
    %v272 = vadd.f32 0.0, %v271
    %v273 = vpop.f32.mrf.mxu0
    %274 = vdwg.mxu0
    %v275 = vadd.f32 %v82, %v197
    %v276 = vadd.f32 %v83, %v202
    %v277 = vadd.f32 %v84, %v207
    %v278 = vadd.f32 %v85, %v212
    %v279 = vadd.f32 %v86, %v217
    %v280 = vadd.f32 %v87, %v222
    %v281 = vadd.f32 %v88, %v227
    %v282 = vadd.f32 %v89, %v232
    %v283 = vadd.f32 %v90, %v237
    %v284 = vadd.f32 %v91, %v242
    %v285 = vadd.f32 %v92, %v247
    %v286 = vadd.f32 %v93, %v252
    %v287 = vadd.f32 %v94, %v257
    %v288 = vadd.f32 %v95, %v262
    %v289 = vadd.f32 %v96, %v267
    %v290 = vadd.f32 %v97, %v272
    %291 = vst [vmem:[#allocation2] sm:$0xff] %v275
    %292 = vst [vmem:[#allocation2 + $0x8] sm:$0xff] %v276
    %293 = vst [vmem:[#allocation2 + $0x10] sm:$0xff] %v277
    %294 = vst [vmem:[#allocation2 + $0x18] sm:$0xff] %v278
    %295 = vst [vmem:[#allocation2 + $0x20] sm:$0xff] %v279
    %296 = vst [vmem:[#allocation2 + $0x28] sm:$0xff] %v280
    %297 = vst [vmem:[#allocation2 + $0x30] sm:$0xff] %v281
    %298 = vst [vmem:[#allocation2 + $0x38] sm:$0xff] %v282
    %299 = vst [vmem:[#allocation2 + $0x40] sm:$0xff] %v283
    %300 = vst [vmem:[#allocation2 + $0x48] sm:$0xff] %v284
    %301 = vst [vmem:[#allocation2 + $0x50] sm:$0xff] %v285
    %302 = vst [vmem:[#allocation2 + $0x58] sm:$0xff] %v286
    %303 = vst [vmem:[#allocation2 + $0x60] sm:$0xff] %v287
    %304 = vst [vmem:[#allocation2 + $0x68] sm:$0xff] %v288
    %305 = vst [vmem:[#allocation2 + $0x70] sm:$0xff] %v289
    %306 = vst [vmem:[#allocation2 + $0x78] sm:$0xff] %v290
    // Predicated region
    $region34: #{tpu_custom_call.1} parent=1 // pred_check
      %p307 = pneg %p25
    $region35: #{tpu_custom_call.1} parent=1 // pred_check_branch
      %309 = sbr.rel (%p307) target = $region37
    $region36: #{tpu_custom_call.1} parent=1 // pred_region
      %v310 = vld [vmem:[%s3] sm:$0x1]
      %v311 = vld [vmem:[#allocation2] sm:$0xff]
      %v312 = vld [vmem:[#allocation2 + $0x8] sm:$0xff]
      %v313 = vld [vmem:[#allocation2 + $0x10] sm:$0xff]
      %v314 = vld [vmem:[#allocation2 + $0x18] sm:$0xff]
      %v315 = vld [vmem:[#allocation2 + $0x20] sm:$0xff]
      %v316 = vld [vmem:[#allocation2 + $0x28] sm:$0xff]
      %v317 = vld [vmem:[#allocation2 + $0x30] sm:$0xff]
      %v318 = vld [vmem:[#allocation2 + $0x38] sm:$0xff]
      %v319 = vld [vmem:[#allocation2 + $0x40] sm:$0xff]
      %v320 = vld [vmem:[#allocation2 + $0x48] sm:$0xff]
      %v321 = vld [vmem:[#allocation2 + $0x50] sm:$0xff]
      %v322 = vld [vmem:[#allocation2 + $0x58] sm:$0xff]
      %v323 = vld [vmem:[#allocation2 + $0x60] sm:$0xff]
      %v324 = vld [vmem:[#allocation2 + $0x68] sm:$0xff]
      %v325 = vld [vmem:[#allocation2 + $0x70] sm:$0xff]
      %v326 = vld [vmem:[#allocation2 + $0x78] sm:$0xff]
      %v328 = vlaneseq
      %v329 = vshrl.u32 %v328, 7
      %v330 = vsub.s32 0, %v329
      %v331 = vrot.slane %v310, %v330
      %v333 = vsub.f32 %v331, %v311
      %v334 = vsub.f32 %v331, %v312
      %v335 = vsub.f32 %v331, %v313
      %v336 = vsub.f32 %v331, %v314
      %v337 = vsub.f32 %v331, %v315
      %v338 = vsub.f32 %v331, %v316
      %v339 = vsub.f32 %v331, %v317
      %v340 = vsub.f32 %v331, %v318
      %v341 = vsub.f32 %v331, %v319
      %v342 = vsub.f32 %v331, %v320
      %v343 = vsub.f32 %v331, %v321
      %v344 = vsub.f32 %v331, %v322
      %v345 = vsub.f32 %v331, %v323
      %v346 = vsub.f32 %v331, %v324
      %v347 = vsub.f32 %v331, %v325
      %v348 = vsub.f32 %v331, %v326
      %v349 = vld [vmem:[%s4] sm:$0xff]
      %v350 = vld [vmem:[%s4 + $0x8] sm:$0xff]
      %v351 = vld [vmem:[%s4 + $0x10] sm:$0xff]
      %v352 = vld [vmem:[%s4 + $0x18] sm:$0xff]
      %v353 = vld [vmem:[%s4 + $0x20] sm:$0xff]
      %v354 = vld [vmem:[%s4 + $0x28] sm:$0xff]
      %v355 = vld [vmem:[%s4 + $0x30] sm:$0xff]
      %v356 = vld [vmem:[%s4 + $0x38] sm:$0xff]
      %v357 = vld [vmem:[%s4 + $0x40] sm:$0xff]
      %v358 = vld [vmem:[%s4 + $0x48] sm:$0xff]
      %v359 = vld [vmem:[%s4 + $0x50] sm:$0xff]
      %v360 = vld [vmem:[%s4 + $0x58] sm:$0xff]
      %v361 = vld [vmem:[%s4 + $0x60] sm:$0xff]
      %v362 = vld [vmem:[%s4 + $0x68] sm:$0xff]
      %v363 = vld [vmem:[%s4 + $0x70] sm:$0xff]
      %v364 = vld [vmem:[%s4 + $0x78] sm:$0xff]
      %v365 = vld [vmem:[%s5] sm:$0x1]
      %366 = vset.pattern.permute.xlu0 0
      %367 = vperm.xlu0 %366, %v349
      %v368 = vpop.permute.xlu0 %367
      %369 = vset.pattern.permute.xlu0 0
      %370 = vperm.xlu0 %369, %v350
      %v371 = vpop.permute.xlu0 %370
      %372 = vset.pattern.permute.xlu0 0
      %373 = vperm.xlu0 %372, %v351
      %v374 = vpop.permute.xlu0 %373
      %375 = vset.pattern.permute.xlu0 0
      %376 = vperm.xlu0 %375, %v352
      %v377 = vpop.permute.xlu0 %376
      %378 = vset.pattern.permute.xlu0 0
      %379 = vperm.xlu0 %378, %v353
      %v380 = vpop.permute.xlu0 %379
      %381 = vset.pattern.permute.xlu0 0
      %382 = vperm.xlu0 %381, %v354
      %v383 = vpop.permute.xlu0 %382
      %384 = vset.pattern.permute.xlu0 0
      %385 = vperm.xlu0 %384, %v355
      %v386 = vpop.permute.xlu0 %385
      %387 = vset.pattern.permute.xlu0 0
      %388 = vperm.xlu0 %387, %v356
      %v389 = vpop.permute.xlu0 %388
      %390 = vset.pattern.permute.xlu0 0
      %391 = vperm.xlu0 %390, %v357
      %v392 = vpop.permute.xlu0 %391
      %393 = vset.pattern.permute.xlu0 0
      %394 = vperm.xlu0 %393, %v358
      %v395 = vpop.permute.xlu0 %394
      %396 = vset.pattern.permute.xlu0 0
      %397 = vperm.xlu0 %396, %v359
      %v398 = vpop.permute.xlu0 %397
      %399 = vset.pattern.permute.xlu0 0
      %400 = vperm.xlu0 %399, %v360
      %v401 = vpop.permute.xlu0 %400
      %402 = vset.pattern.permute.xlu0 0
      %403 = vperm.xlu0 %402, %v361
      %v404 = vpop.permute.xlu0 %403
      %405 = vset.pattern.permute.xlu0 0
      %406 = vperm.xlu0 %405, %v362
      %v407 = vpop.permute.xlu0 %406
      %408 = vset.pattern.permute.xlu0 0
      %409 = vperm.xlu0 %408, %v363
      %v410 = vpop.permute.xlu0 %409
      %411 = vset.pattern.permute.xlu0 0
      %412 = vperm.xlu0 %411, %v364
      %v413 = vpop.permute.xlu0 %412
      %v414 = vlaneseq
      %v415 = vshrl.u32 %v414, 7
      %v416 = vsub.s32 0, %v415
      %v417 = vrot.slane %v365, %v416
      %vm418 = vcmp.eq.s32.totalorder %v368, %v417
      %vm419 = vcmp.eq.s32.totalorder %v371, %v417
      %vm420 = vcmp.eq.s32.totalorder %v374, %v417
      %vm421 = vcmp.eq.s32.totalorder %v377, %v417
      %vm422 = vcmp.eq.s32.totalorder %v380, %v417
      %vm423 = vcmp.eq.s32.totalorder %v383, %v417
      %vm424 = vcmp.eq.s32.totalorder %v386, %v417
      %vm425 = vcmp.eq.s32.totalorder %v389, %v417
      %vm426 = vcmp.eq.s32.totalorder %v392, %v417
      %vm427 = vcmp.eq.s32.totalorder %v395, %v417
      %vm428 = vcmp.eq.s32.totalorder %v398, %v417
      %vm429 = vcmp.eq.s32.totalorder %v401, %v417
      %vm430 = vcmp.eq.s32.totalorder %v404, %v417
      %vm431 = vcmp.eq.s32.totalorder %v407, %v417
      %vm432 = vcmp.eq.s32.totalorder %v410, %v417
      %vm433 = vcmp.eq.s32.totalorder %v413, %v417
      %v434 = vld [vmem:[#allocation3] sm:$0xff]
      %v435 = vld [vmem:[#allocation3 + $0x8] sm:$0xff]
      %v436 = vld [vmem:[#allocation3 + $0x10] sm:$0xff]
      %v437 = vld [vmem:[#allocation3 + $0x18] sm:$0xff]
      %v438 = vld [vmem:[#allocation3 + $0x20] sm:$0xff]
      %v439 = vld [vmem:[#allocation3 + $0x28] sm:$0xff]
      %v440 = vld [vmem:[#allocation3 + $0x30] sm:$0xff]
      %v441 = vld [vmem:[#allocation3 + $0x38] sm:$0xff]
      %v442 = vld [vmem:[#allocation3 + $0x40] sm:$0xff]
      %v443 = vld [vmem:[#allocation3 + $0x48] sm:$0xff]
      %v444 = vld [vmem:[#allocation3 + $0x50] sm:$0xff]
      %v445 = vld [vmem:[#allocation3 + $0x58] sm:$0xff]
      %v446 = vld [vmem:[#allocation3 + $0x60] sm:$0xff]
      %v447 = vld [vmem:[#allocation3 + $0x68] sm:$0xff]
      %v448 = vld [vmem:[#allocation3 + $0x70] sm:$0xff]
      %v449 = vld [vmem:[#allocation3 + $0x78] sm:$0xff]
      %v450 = vsel %vm418, %v333, -inf
      %v451 = vsel %vm419, %v334, -inf
      %v452 = vsel %vm420, %v335, -inf
      %v453 = vsel %vm421, %v336, -inf
      %v454 = vsel %vm422, %v337, -inf
      %v455 = vsel %vm423, %v338, -inf
      %v456 = vsel %vm424, %v339, -inf
      %v457 = vsel %vm425, %v340, -inf
      %v458 = vsel %vm426, %v341, -inf
      %v459 = vsel %vm427, %v342, -inf
      %v460 = vsel %vm428, %v343, -inf
      %v461 = vsel %vm429, %v344, -inf
      %v462 = vsel %vm430, %v345, -inf
      %v463 = vsel %vm431, %v346, -inf
      %v464 = vsel %vm432, %v347, -inf
      %v465 = vsel %vm433, %v348, -inf
      %466 = vmax.xlane.f32.xlu0 %v450
      %v467 = vpop.xlane.xlu0 %466
      %468 = vmax.xlane.f32.xlu0 %v451
      %v469 = vpop.xlane.xlu0 %468
      %470 = vmax.xlane.f32.xlu0 %v452
      %v471 = vpop.xlane.xlu0 %470
      %472 = vmax.xlane.f32.xlu0 %v453
      %v473 = vpop.xlane.xlu0 %472
      %474 = vmax.xlane.f32.xlu0 %v454
      %v475 = vpop.xlane.xlu0 %474
      %476 = vmax.xlane.f32.xlu0 %v455
      %v477 = vpop.xlane.xlu0 %476
      %478 = vmax.xlane.f32.xlu0 %v456
      %v479 = vpop.xlane.xlu0 %478
      %480 = vmax.xlane.f32.xlu0 %v457
      %v481 = vpop.xlane.xlu0 %480
      %482 = vmax.xlane.f32.xlu0 %v458
      %v483 = vpop.xlane.xlu0 %482
      %484 = vmax.xlane.f32.xlu0 %v459
      %v485 = vpop.xlane.xlu0 %484
      %486 = vmax.xlane.f32.xlu0 %v460
      %v487 = vpop.xlane.xlu0 %486
      %488 = vmax.xlane.f32.xlu0 %v461
      %v489 = vpop.xlane.xlu0 %488
      %490 = vmax.xlane.f32.xlu0 %v462
      %v491 = vpop.xlane.xlu0 %490
      %492 = vmax.xlane.f32.xlu0 %v463
      %v493 = vpop.xlane.xlu0 %492
      %494 = vmax.xlane.f32.xlu0 %v464
      %v495 = vpop.xlane.xlu0 %494
      %496 = vmax.xlane.f32.xlu0 %v465
      %v497 = vpop.xlane.xlu0 %496
      %v498 = vmax.f32 %v434, %v467
      %v499 = vmax.f32 %v435, %v469
      %v500 = vmax.f32 %v436, %v471
      %v501 = vmax.f32 %v437, %v473
      %v502 = vmax.f32 %v438, %v475
      %v503 = vmax.f32 %v439, %v477
      %v504 = vmax.f32 %v440, %v479
      %v505 = vmax.f32 %v441, %v481
      %v506 = vmax.f32 %v442, %v483
      %v507 = vmax.f32 %v443, %v485
      %v508 = vmax.f32 %v444, %v487
      %v509 = vmax.f32 %v445, %v489
      %v510 = vmax.f32 %v446, %v491
      %v511 = vmax.f32 %v447, %v493
      %v512 = vmax.f32 %v448, %v495
      %v513 = vmax.f32 %v449, %v497
      %vm514 = vcmask 7168
      %515 = vst.msk [vmem:[#allocation3] sm:$0xff] %vm514, %v498
      %516 = vst.msk [vmem:[#allocation3 + $0x8] sm:$0xff] %vm514, %v499
      %517 = vst.msk [vmem:[#allocation3 + $0x10] sm:$0xff] %vm514, %v500
      %518 = vst.msk [vmem:[#allocation3 + $0x18] sm:$0xff] %vm514, %v501
      %519 = vst.msk [vmem:[#allocation3 + $0x20] sm:$0xff] %vm514, %v502
      %520 = vst.msk [vmem:[#allocation3 + $0x28] sm:$0xff] %vm514, %v503
      %521 = vst.msk [vmem:[#allocation3 + $0x30] sm:$0xff] %vm514, %v504
      %522 = vst.msk [vmem:[#allocation3 + $0x38] sm:$0xff] %vm514, %v505
      %523 = vst.msk [vmem:[#allocation3 + $0x40] sm:$0xff] %vm514, %v506
      %524 = vst.msk [vmem:[#allocation3 + $0x48] sm:$0xff] %vm514, %v507
      %525 = vst.msk [vmem:[#allocation3 + $0x50] sm:$0xff] %vm514, %v508
      %526 = vst.msk [vmem:[#allocation3 + $0x58] sm:$0xff] %vm514, %v509
      %527 = vst.msk [vmem:[#allocation3 + $0x60] sm:$0xff] %vm514, %v510
      %528 = vst.msk [vmem:[#allocation3 + $0x68] sm:$0xff] %vm514, %v511
      %529 = vst.msk [vmem:[#allocation3 + $0x70] sm:$0xff] %vm514, %v512
      %530 = vst.msk [vmem:[#allocation3 + $0x78] sm:$0xff] %vm514, %v513
      %v531 = vld [vmem:[#allocation4] sm:$0xff]
      %v532 = vld [vmem:[#allocation4 + $0x8] sm:$0xff]
      %v533 = vld [vmem:[#allocation4 + $0x10] sm:$0xff]
      %v534 = vld [vmem:[#allocation4 + $0x18] sm:$0xff]
      %v535 = vld [vmem:[#allocation4 + $0x20] sm:$0xff]
      %v536 = vld [vmem:[#allocation4 + $0x28] sm:$0xff]
      %v537 = vld [vmem:[#allocation4 + $0x30] sm:$0xff]
      %v538 = vld [vmem:[#allocation4 + $0x38] sm:$0xff]
      %v539 = vld [vmem:[#allocation4 + $0x40] sm:$0xff]
      %v540 = vld [vmem:[#allocation4 + $0x48] sm:$0xff]
      %v541 = vld [vmem:[#allocation4 + $0x50] sm:$0xff]
      %v542 = vld [vmem:[#allocation4 + $0x58] sm:$0xff]
      %v543 = vld [vmem:[#allocation4 + $0x60] sm:$0xff]
      %v544 = vld [vmem:[#allocation4 + $0x68] sm:$0xff]
      %v545 = vld [vmem:[#allocation4 + $0x70] sm:$0xff]
      %v546 = vld [vmem:[#allocation4 + $0x78] sm:$0xff]
      %v547 = vsel %vm418, inf, %v333
      %v548 = vsel %vm419, inf, %v334
      %v549 = vsel %vm420, inf, %v335
      %v550 = vsel %vm421, inf, %v336
      %v551 = vsel %vm422, inf, %v337
      %v552 = vsel %vm423, inf, %v338
      %v553 = vsel %vm424, inf, %v339
      %v554 = vsel %vm425, inf, %v340
      %v555 = vsel %vm426, inf, %v341
      %v556 = vsel %vm427, inf, %v342
      %v557 = vsel %vm428, inf, %v343
      %v558 = vsel %vm429, inf, %v344
      %v559 = vsel %vm430, inf, %v345
      %v560 = vsel %vm431, inf, %v346
      %v561 = vsel %vm432, inf, %v347
      %v562 = vsel %vm433, inf, %v348
      %563 = vmin.xlane.f32.xlu0 %v547
      %v564 = vpop.xlane.xlu0 %563
      %565 = vmin.xlane.f32.xlu0 %v548
      %v566 = vpop.xlane.xlu0 %565
      %567 = vmin.xlane.f32.xlu0 %v549
      %v568 = vpop.xlane.xlu0 %567
      %569 = vmin.xlane.f32.xlu0 %v550
      %v570 = vpop.xlane.xlu0 %569
      %571 = vmin.xlane.f32.xlu0 %v551
      %v572 = vpop.xlane.xlu0 %571
      %573 = vmin.xlane.f32.xlu0 %v552
      %v574 = vpop.xlane.xlu0 %573
      %575 = vmin.xlane.f32.xlu0 %v553
      %v576 = vpop.xlane.xlu0 %575
      %577 = vmin.xlane.f32.xlu0 %v554
      %v578 = vpop.xlane.xlu0 %577
      %579 = vmin.xlane.f32.xlu0 %v555
      %v580 = vpop.xlane.xlu0 %579
      %581 = vmin.xlane.f32.xlu0 %v556
      %v582 = vpop.xlane.xlu0 %581
      %583 = vmin.xlane.f32.xlu0 %v557
      %v584 = vpop.xlane.xlu0 %583
      %585 = vmin.xlane.f32.xlu0 %v558
      %v586 = vpop.xlane.xlu0 %585
      %587 = vmin.xlane.f32.xlu0 %v559
      %v588 = vpop.xlane.xlu0 %587
      %589 = vmin.xlane.f32.xlu0 %v560
      %v590 = vpop.xlane.xlu0 %589
      %591 = vmin.xlane.f32.xlu0 %v561
      %v592 = vpop.xlane.xlu0 %591
      %593 = vmin.xlane.f32.xlu0 %v562
      %v594 = vpop.xlane.xlu0 %593
      %v595 = vmin.f32 %v531, %v564
      %v596 = vmin.f32 %v532, %v566
      %v597 = vmin.f32 %v533, %v568
      %v598 = vmin.f32 %v534, %v570
      %v599 = vmin.f32 %v535, %v572
      %v600 = vmin.f32 %v536, %v574
      %v601 = vmin.f32 %v537, %v576
      %v602 = vmin.f32 %v538, %v578
      %v603 = vmin.f32 %v539, %v580
      %v604 = vmin.f32 %v540, %v582
      %v605 = vmin.f32 %v541, %v584
      %v606 = vmin.f32 %v542, %v586
      %v607 = vmin.f32 %v543, %v588
      %v608 = vmin.f32 %v544, %v590
      %v609 = vmin.f32 %v545, %v592
      %v610 = vmin.f32 %v546, %v594
      %611 = vst.msk [vmem:[#allocation4] sm:$0xff] %vm514, %v595
      %612 = vst.msk [vmem:[#allocation4 + $0x8] sm:$0xff] %vm514, %v596
      %613 = vst.msk [vmem:[#allocation4 + $0x10] sm:$0xff] %vm514, %v597
      %614 = vst.msk [vmem:[#allocation4 + $0x18] sm:$0xff] %vm514, %v598
      %615 = vst.msk [vmem:[#allocation4 + $0x20] sm:$0xff] %vm514, %v599
      %616 = vst.msk [vmem:[#allocation4 + $0x28] sm:$0xff] %vm514, %v600
      %617 = vst.msk [vmem:[#allocation4 + $0x30] sm:$0xff] %vm514, %v601
      %618 = vst.msk [vmem:[#allocation4 + $0x38] sm:$0xff] %vm514, %v602
      %619 = vst.msk [vmem:[#allocation4 + $0x40] sm:$0xff] %vm514, %v603
      %620 = vst.msk [vmem:[#allocation4 + $0x48] sm:$0xff] %vm514, %v604
      %621 = vst.msk [vmem:[#allocation4 + $0x50] sm:$0xff] %vm514, %v605
      %622 = vst.msk [vmem:[#allocation4 + $0x58] sm:$0xff] %vm514, %v606
      %623 = vst.msk [vmem:[#allocation4 + $0x60] sm:$0xff] %vm514, %v607
      %624 = vst.msk [vmem:[#allocation4 + $0x68] sm:$0xff] %vm514, %v608
      %625 = vst.msk [vmem:[#allocation4 + $0x70] sm:$0xff] %vm514, %v609
      %626 = vst.msk [vmem:[#allocation4 + $0x78] sm:$0xff] %vm514, %v610
    $region37: #{tpu_custom_call.1} parent=1 // pred_fallthru
      _
    // Predicated region
    $region38: #{tpu_custom_call.1} parent=1 // pred_check
      _
    $region39: #{tpu_custom_call.1} parent=1 // pred_check_branch
      %628 = sbr.rel (%p26) target = $region41
    $region40: #{tpu_custom_call.1} parent=1 // pred_region
      %v629 = vld [vmem:[%s2] sm:$0xff]
      %v630 = vld [vmem:[%s2 + $0x8] sm:$0xff]
      %v631 = vld [vmem:[%s2 + $0x10] sm:$0xff]
      %v632 = vld [vmem:[%s2 + $0x18] sm:$0xff]
      %v633 = vld [vmem:[%s2 + $0x20] sm:$0xff]
      %v634 = vld [vmem:[%s2 + $0x28] sm:$0xff]
      %v635 = vld [vmem:[%s2 + $0x30] sm:$0xff]
      %v636 = vld [vmem:[%s2 + $0x38] sm:$0xff]
      %v637 = vld [vmem:[%s2 + $0x40] sm:$0xff]
      %v638 = vld [vmem:[%s2 + $0x48] sm:$0xff]
      %v639 = vld [vmem:[%s2 + $0x50] sm:$0xff]
      %v640 = vld [vmem:[%s2 + $0x58] sm:$0xff]
      %v641 = vld [vmem:[%s2 + $0x60] sm:$0xff]
      %v642 = vld [vmem:[%s2 + $0x68] sm:$0xff]
      %v643 = vld [vmem:[%s2 + $0x70] sm:$0xff]
      %v644 = vld [vmem:[%s2 + $0x78] sm:$0xff]
      %v645 = vld [vmem:[#allocation3] sm:$0xff]
      %v646 = vld [vmem:[#allocation3 + $0x8] sm:$0xff]
      %v647 = vld [vmem:[#allocation3 + $0x10] sm:$0xff]
      %v648 = vld [vmem:[#allocation3 + $0x18] sm:$0xff]
      %v649 = vld [vmem:[#allocation3 + $0x20] sm:$0xff]
      %v650 = vld [vmem:[#allocation3 + $0x28] sm:$0xff]
      %v651 = vld [vmem:[#allocation3 + $0x30] sm:$0xff]
      %v652 = vld [vmem:[#allocation3 + $0x38] sm:$0xff]
      %v653 = vld [vmem:[#allocation3 + $0x40] sm:$0xff]
      %v654 = vld [vmem:[#allocation3 + $0x48] sm:$0xff]
      %v655 = vld [vmem:[#allocation3 + $0x50] sm:$0xff]
      %v656 = vld [vmem:[#allocation3 + $0x58] sm:$0xff]
      %v657 = vld [vmem:[#allocation3 + $0x60] sm:$0xff]
      %v658 = vld [vmem:[#allocation3 + $0x68] sm:$0xff]
      %v659 = vld [vmem:[#allocation3 + $0x70] sm:$0xff]
      %v660 = vld [vmem:[#allocation3 + $0x78] sm:$0xff]
      %v661 = vadd.f32 %v629, %v645
      %v662 = vadd.f32 %v630, %v646
      %v663 = vadd.f32 %v631, %v647
      %v664 = vadd.f32 %v632, %v648
      %v665 = vadd.f32 %v633, %v649
      %v666 = vadd.f32 %v634, %v650
      %v667 = vadd.f32 %v635, %v651
      %v668 = vadd.f32 %v636, %v652
      %v669 = vadd.f32 %v637, %v653
      %v670 = vadd.f32 %v638, %v654
      %v671 = vadd.f32 %v639, %v655
      %v672 = vadd.f32 %v640, %v656
      %v673 = vadd.f32 %v641, %v657
      %v674 = vadd.f32 %v642, %v658
      %v675 = vadd.f32 %v643, %v659
      %v676 = vadd.f32 %v644, %v660
      %v677 = vmul.f32 %v661, 2.0
      %v678 = vmul.f32 %v662, 2.0
      %v679 = vmul.f32 %v663, 2.0
      %v680 = vmul.f32 %v664, 2.0
      %v681 = vmul.f32 %v665, 2.0
      %v682 = vmul.f32 %v666, 2.0
      %v683 = vmul.f32 %v667, 2.0
      %v684 = vmul.f32 %v668, 2.0
      %v685 = vmul.f32 %v669, 2.0
      %v686 = vmul.f32 %v670, 2.0
      %v687 = vmul.f32 %v671, 2.0
      %v688 = vmul.f32 %v672, 2.0
      %v689 = vmul.f32 %v673, 2.0
      %v690 = vmul.f32 %v674, 2.0
      %v691 = vmul.f32 %v675, 2.0
      %v692 = vmul.f32 %v676, 2.0
      %v693 = vmax.f32 %v677, 1e-12
      %v694 = vmax.f32 %v678, 1e-12
      %v695 = vmax.f32 %v679, 1e-12
      %v696 = vmax.f32 %v680, 1e-12
      %v697 = vmax.f32 %v681, 1e-12
      %v698 = vmax.f32 %v682, 1e-12
      %v699 = vmax.f32 %v683, 1e-12
      %v700 = vmax.f32 %v684, 1e-12
      %v701 = vmax.f32 %v685, 1e-12
      %v702 = vmax.f32 %v686, 1e-12
      %v703 = vmax.f32 %v687, 1e-12
      %v704 = vmax.f32 %v688, 1e-12
      %v705 = vmax.f32 %v689, 1e-12
      %v706 = vmax.f32 %v690, 1e-12
      %v707 = vmax.f32 %v691, 1e-12
      %v708 = vmax.f32 %v692, 1e-12
      %v709 = vrsqrt.pop %v693
      %v710 = vmul.f32 %v693, %v709
      %vm711 = vcmp.eq.f32.partialorder %v693, inf
      %v712 = vsel %vm711, %v693, %v710
      %vm713 = vcmp.eq.f32.partialorder %v693, 0.0
      %v714 = vand.u32 %v693, 2147483648
      %v715 = vsel %vm713, %v714, %v712
      %v716 = vrsqrt.pop %v694
      %v717 = vmul.f32 %v694, %v716
      %vm718 = vcmp.eq.f32.partialorder %v694, inf
      %v719 = vsel %vm718, %v694, %v717
      %vm720 = vcmp.eq.f32.partialorder %v694, 0.0
      %v721 = vand.u32 %v694, 2147483648
      %v722 = vsel %vm720, %v721, %v719
      %v723 = vrsqrt.pop %v695
      %v724 = vmul.f32 %v695, %v723
      %vm725 = vcmp.eq.f32.partialorder %v695, inf
      %v726 = vsel %vm725, %v695, %v724
      %vm727 = vcmp.eq.f32.partialorder %v695, 0.0
      %v728 = vand.u32 %v695, 2147483648
      %v729 = vsel %vm727, %v728, %v726
      %v730 = vrsqrt.pop %v696
      %v731 = vmul.f32 %v696, %v730
      %vm732 = vcmp.eq.f32.partialorder %v696, inf
      %v733 = vsel %vm732, %v696, %v731
      %vm734 = vcmp.eq.f32.partialorder %v696, 0.0
      %v735 = vand.u32 %v696, 2147483648
      %v736 = vsel %vm734, %v735, %v733
      %v737 = vrsqrt.pop %v697
      %v738 = vmul.f32 %v697, %v737
      %vm739 = vcmp.eq.f32.partialorder %v697, inf
      %v740 = vsel %vm739, %v697, %v738
      %vm741 = vcmp.eq.f32.partialorder %v697, 0.0
      %v742 = vand.u32 %v697, 2147483648
      %v743 = vsel %vm741, %v742, %v740
      %v744 = vrsqrt.pop %v698
      %v745 = vmul.f32 %v698, %v744
      %vm746 = vcmp.eq.f32.partialorder %v698, inf
      %v747 = vsel %vm746, %v698, %v745
      %vm748 = vcmp.eq.f32.partialorder %v698, 0.0
      %v749 = vand.u32 %v698, 2147483648
      %v750 = vsel %vm748, %v749, %v747
      %v751 = vrsqrt.pop %v699
      %v752 = vmul.f32 %v699, %v751
      %vm753 = vcmp.eq.f32.partialorder %v699, inf
      %v754 = vsel %vm753, %v699, %v752
      %vm755 = vcmp.eq.f32.partialorder %v699, 0.0
      %v756 = vand.u32 %v699, 2147483648
      %v757 = vsel %vm755, %v756, %v754
      %v758 = vrsqrt.pop %v700
      %v759 = vmul.f32 %v700, %v758
      %vm760 = vcmp.eq.f32.partialorder %v700, inf
      %v761 = vsel %vm760, %v700, %v759
      %vm762 = vcmp.eq.f32.partialorder %v700, 0.0
      %v763 = vand.u32 %v700, 2147483648
      %v764 = vsel %vm762, %v763, %v761
      %v765 = vrsqrt.pop %v701
      %v766 = vmul.f32 %v701, %v765
      %vm767 = vcmp.eq.f32.partialorder %v701, inf
      %v768 = vsel %vm767, %v701, %v766
      %vm769 = vcmp.eq.f32.partialorder %v701, 0.0
      %v770 = vand.u32 %v701, 2147483648
      %v771 = vsel %vm769, %v770, %v768
      %v772 = vrsqrt.pop %v702
      %v773 = vmul.f32 %v702, %v772
      %vm774 = vcmp.eq.f32.partialorder %v702, inf
      %v775 = vsel %vm774, %v702, %v773
      %vm776 = vcmp.eq.f32.partialorder %v702, 0.0
      %v777 = vand.u32 %v702, 2147483648
      %v778 = vsel %vm776, %v777, %v775
      %v779 = vrsqrt.pop %v703
      %v780 = vmul.f32 %v703, %v779
      %vm781 = vcmp.eq.f32.partialorder %v703, inf
      %v782 = vsel %vm781, %v703, %v780
      %vm783 = vcmp.eq.f32.partialorder %v703, 0.0
      %v784 = vand.u32 %v703, 2147483648
      %v785 = vsel %vm783, %v784, %v782
      %v786 = vrsqrt.pop %v704
      %v787 = vmul.f32 %v704, %v786
      %vm788 = vcmp.eq.f32.partialorder %v704, inf
      %v789 = vsel %vm788, %v704, %v787
      %vm790 = vcmp.eq.f32.partialorder %v704, 0.0
      %v791 = vand.u32 %v704, 2147483648
      %v792 = vsel %vm790, %v791, %v789
      %v793 = vrsqrt.pop %v705
      %v794 = vmul.f32 %v705, %v793
      %vm795 = vcmp.eq.f32.partialorder %v705, inf
      %v796 = vsel %vm795, %v705, %v794
      %vm797 = vcmp.eq.f32.partialorder %v705, 0.0
      %v798 = vand.u32 %v705, 2147483648
      %v799 = vsel %vm797, %v798, %v796
      %v800 = vrsqrt.pop %v706
      %v801 = vmul.f32 %v706, %v800
      %vm802 = vcmp.eq.f32.partialorder %v706, inf
      %v803 = vsel %vm802, %v706, %v801
      %vm804 = vcmp.eq.f32.partialorder %v706, 0.0
      %v805 = vand.u32 %v706, 2147483648
      %v806 = vsel %vm804, %v805, %v803
      %v807 = vrsqrt.pop %v707
      %v808 = vmul.f32 %v707, %v807
      %vm809 = vcmp.eq.f32.partialorder %v707, inf
      %v810 = vsel %vm809, %v707, %v808
      %vm811 = vcmp.eq.f32.partialorder %v707, 0.0
      %v812 = vand.u32 %v707, 2147483648
      %v813 = vsel %vm811, %v812, %v810
      %v814 = vrsqrt.pop %v708
      %v815 = vmul.f32 %v708, %v814
      %vm816 = vcmp.eq.f32.partialorder %v708, inf
      %v817 = vsel %vm816, %v708, %v815
      %vm818 = vcmp.eq.f32.partialorder %v708, 0.0
      %v819 = vand.u32 %v708, 2147483648
      %v820 = vsel %vm818, %v819, %v817
      %v821 = vld [vmem:[#allocation4] sm:$0xff]
      %v822 = vld [vmem:[#allocation4 + $0x8] sm:$0xff]
      %v823 = vld [vmem:[#allocation4 + $0x10] sm:$0xff]
      %v824 = vld [vmem:[#allocation4 + $0x18] sm:$0xff]
      %v825 = vld [vmem:[#allocation4 + $0x20] sm:$0xff]
      %v826 = vld [vmem:[#allocation4 + $0x28] sm:$0xff]
      %v827 = vld [vmem:[#allocation4 + $0x30] sm:$0xff]
      %v828 = vld [vmem:[#allocation4 + $0x38] sm:$0xff]
      %v829 = vld [vmem:[#allocation4 + $0x40] sm:$0xff]
      %v830 = vld [vmem:[#allocation4 + $0x48] sm:$0xff]
      %v831 = vld [vmem:[#allocation4 + $0x50] sm:$0xff]
      %v832 = vld [vmem:[#allocation4 + $0x58] sm:$0xff]
      %v833 = vld [vmem:[#allocation4 + $0x60] sm:$0xff]
      %v834 = vld [vmem:[#allocation4 + $0x68] sm:$0xff]
      %v835 = vld [vmem:[#allocation4 + $0x70] sm:$0xff]
      %v836 = vld [vmem:[#allocation4 + $0x78] sm:$0xff]
      %v837 = vadd.f32 %v629, %v821
      %v838 = vadd.f32 %v630, %v822
      %v839 = vadd.f32 %v631, %v823
      %v840 = vadd.f32 %v632, %v824
      %v841 = vadd.f32 %v633, %v825
      %v842 = vadd.f32 %v634, %v826
      %v843 = vadd.f32 %v635, %v827
      %v844 = vadd.f32 %v636, %v828
      %v845 = vadd.f32 %v637, %v829
      %v846 = vadd.f32 %v638, %v830
      %v847 = vadd.f32 %v639, %v831
      %v848 = vadd.f32 %v640, %v832
      %v849 = vadd.f32 %v641, %v833
      %v850 = vadd.f32 %v642, %v834
      %v851 = vadd.f32 %v643, %v835
      %v852 = vadd.f32 %v644, %v836
      %v853 = vmul.f32 %v837, 2.0
      %v854 = vmul.f32 %v838, 2.0
      %v855 = vmul.f32 %v839, 2.0
      %v856 = vmul.f32 %v840, 2.0
      %v857 = vmul.f32 %v841, 2.0
      %v858 = vmul.f32 %v842, 2.0
      %v859 = vmul.f32 %v843, 2.0
      %v860 = vmul.f32 %v844, 2.0
      %v861 = vmul.f32 %v845, 2.0
      %v862 = vmul.f32 %v846, 2.0
      %v863 = vmul.f32 %v847, 2.0
      %v864 = vmul.f32 %v848, 2.0
      %v865 = vmul.f32 %v849, 2.0
      %v866 = vmul.f32 %v850, 2.0
      %v867 = vmul.f32 %v851, 2.0
      %v868 = vmul.f32 %v852, 2.0
      %v869 = vmax.f32 %v853, 1e-12
      %v870 = vmax.f32 %v854, 1e-12
      %v871 = vmax.f32 %v855, 1e-12
      %v872 = vmax.f32 %v856, 1e-12
      %v873 = vmax.f32 %v857, 1e-12
      %v874 = vmax.f32 %v858, 1e-12
      %v875 = vmax.f32 %v859, 1e-12
      %v876 = vmax.f32 %v860, 1e-12
      %v877 = vmax.f32 %v861, 1e-12
      %v878 = vmax.f32 %v862, 1e-12
      %v879 = vmax.f32 %v863, 1e-12
      %v880 = vmax.f32 %v864, 1e-12
      %v881 = vmax.f32 %v865, 1e-12
      %v882 = vmax.f32 %v866, 1e-12
      %v883 = vmax.f32 %v867, 1e-12
      %v884 = vmax.f32 %v868, 1e-12
      %v885 = vrsqrt.pop %v869
      %v886 = vmul.f32 %v869, %v885
      %vm887 = vcmp.eq.f32.partialorder %v869, inf
      %v888 = vsel %vm887, %v869, %v886
      %vm889 = vcmp.eq.f32.partialorder %v869, 0.0
      %v890 = vand.u32 %v869, 2147483648
      %v891 = vsel %vm889, %v890, %v888
      %v892 = vrsqrt.pop %v870
      %v893 = vmul.f32 %v870, %v892
      %vm894 = vcmp.eq.f32.partialorder %v870, inf
      %v895 = vsel %vm894, %v870, %v893
      %vm896 = vcmp.eq.f32.partialorder %v870, 0.0
      %v897 = vand.u32 %v870, 2147483648
      %v898 = vsel %vm896, %v897, %v895
      %v899 = vrsqrt.pop %v871
      %v900 = vmul.f32 %v871, %v899
      %vm901 = vcmp.eq.f32.partialorder %v871, inf
      %v902 = vsel %vm901, %v871, %v900
      %vm903 = vcmp.eq.f32.partialorder %v871, 0.0
      %v904 = vand.u32 %v871, 2147483648
      %v905 = vsel %vm903, %v904, %v902
      %v906 = vrsqrt.pop %v872
      %v907 = vmul.f32 %v872, %v906
      %vm908 = vcmp.eq.f32.partialorder %v872, inf
      %v909 = vsel %vm908, %v872, %v907
      %vm910 = vcmp.eq.f32.partialorder %v872, 0.0
      %v911 = vand.u32 %v872, 2147483648
      %v912 = vsel %vm910, %v911, %v909
      %v913 = vrsqrt.pop %v873
      %v914 = vmul.f32 %v873, %v913
      %vm915 = vcmp.eq.f32.partialorder %v873, inf
      %v916 = vsel %vm915, %v873, %v914
      %vm917 = vcmp.eq.f32.partialorder %v873, 0.0
      %v918 = vand.u32 %v873, 2147483648
      %v919 = vsel %vm917, %v918, %v916
      %v920 = vrsqrt.pop %v874
      %v921 = vmul.f32 %v874, %v920
      %vm922 = vcmp.eq.f32.partialorder %v874, inf
      %v923 = vsel %vm922, %v874, %v921
      %vm924 = vcmp.eq.f32.partialorder %v874, 0.0
      %v925 = vand.u32 %v874, 2147483648
      %v926 = vsel %vm924, %v925, %v923
      %v927 = vrsqrt.pop %v875
      %v928 = vmul.f32 %v875, %v927
      %vm929 = vcmp.eq.f32.partialorder %v875, inf
      %v930 = vsel %vm929, %v875, %v928
      %vm931 = vcmp.eq.f32.partialorder %v875, 0.0
      %v932 = vand.u32 %v875, 2147483648
      %v933 = vsel %vm931, %v932, %v930
      %v934 = vrsqrt.pop %v876
      %v935 = vmul.f32 %v876, %v934
      %vm936 = vcmp.eq.f32.partialorder %v876, inf
      %v937 = vsel %vm936, %v876, %v935
      %vm938 = vcmp.eq.f32.partialorder %v876, 0.0
      %v939 = vand.u32 %v876, 2147483648
      %v940 = vsel %vm938, %v939, %v937
      %v941 = vrsqrt.pop %v877
      %v942 = vmul.f32 %v877, %v941
      %vm943 = vcmp.eq.f32.partialorder %v877, inf
      %v944 = vsel %vm943, %v877, %v942
      %vm945 = vcmp.eq.f32.partialorder %v877, 0.0
      %v946 = vand.u32 %v877, 2147483648
      %v947 = vsel %vm945, %v946, %v944
      %v948 = vrsqrt.pop %v878
      %v949 = vmul.f32 %v878, %v948
      %vm950 = vcmp.eq.f32.partialorder %v878, inf
      %v951 = vsel %vm950, %v878, %v949
      %vm952 = vcmp.eq.f32.partialorder %v878, 0.0
      %v953 = vand.u32 %v878, 2147483648
      %v954 = vsel %vm952, %v953, %v951
      %v955 = vrsqrt.pop %v879
      %v956 = vmul.f32 %v879, %v955
      %vm957 = vcmp.eq.f32.partialorder %v879, inf
      %v958 = vsel %vm957, %v879, %v956
      %vm959 = vcmp.eq.f32.partialorder %v879, 0.0
      %v960 = vand.u32 %v879, 2147483648
      %v961 = vsel %vm959, %v960, %v958
      %v962 = vrsqrt.pop %v880
      %v963 = vmul.f32 %v880, %v962
      %vm964 = vcmp.eq.f32.partialorder %v880, inf
      %v965 = vsel %vm964, %v880, %v963
      %vm966 = vcmp.eq.f32.partialorder %v880, 0.0
      %v967 = vand.u32 %v880, 2147483648
      %v968 = vsel %vm966, %v967, %v965
      %v969 = vrsqrt.pop %v881
      %v970 = vmul.f32 %v881, %v969
      %vm971 = vcmp.eq.f32.partialorder %v881, inf
      %v972 = vsel %vm971, %v881, %v970
      %vm973 = vcmp.eq.f32.partialorder %v881, 0.0
      %v974 = vand.u32 %v881, 2147483648
      %v975 = vsel %vm973, %v974, %v972
      %v976 = vrsqrt.pop %v882
      %v977 = vmul.f32 %v882, %v976
      %vm978 = vcmp.eq.f32.partialorder %v882, inf
      %v979 = vsel %vm978, %v882, %v977
      %vm980 = vcmp.eq.f32.partialorder %v882, 0.0
      %v981 = vand.u32 %v882, 2147483648
      %v982 = vsel %vm980, %v981, %v979
      %v983 = vrsqrt.pop %v883
      %v984 = vmul.f32 %v883, %v983
      %vm985 = vcmp.eq.f32.partialorder %v883, inf
      %v986 = vsel %vm985, %v883, %v984
      %vm987 = vcmp.eq.f32.partialorder %v883, 0.0
      %v988 = vand.u32 %v883, 2147483648
      %v989 = vsel %vm987, %v988, %v986
      %v990 = vrsqrt.pop %v884
      %v991 = vmul.f32 %v884, %v990
      %vm992 = vcmp.eq.f32.partialorder %v884, inf
      %v993 = vsel %vm992, %v884, %v991
      %vm994 = vcmp.eq.f32.partialorder %v884, 0.0
      %v995 = vand.u32 %v884, 2147483648
      %v996 = vsel %vm994, %v995, %v993
      %s997 = smul.u32 0, 128
      %v998 = vlaneseq
      %v999 = vshrl.u32 %v998, 7
      %v1000 = vadd.s32 %v999, 8
      %v1001 = vadd.s32 %v999, 16
      %v1002 = vadd.s32 %v999, 24
      %v1003 = vadd.s32 %v999, 32
      %v1004 = vadd.s32 %v999, 40
      %v1005 = vadd.s32 %v999, 48
      %v1006 = vadd.s32 %v999, 56
      %v1007 = vadd.s32 %v999, 64
      %v1008 = vadd.s32 %v999, 72
      %v1009 = vadd.s32 %v999, 80
      %v1010 = vadd.s32 %v999, 88
      %v1011 = vadd.s32 %v999, 96
      %v1012 = vadd.s32 %v999, 104
      %v1013 = vadd.s32 %v999, 112
      %v1014 = vadd.s32 %v999, 120
      %v1015 = vstv %s997
      %v1016 = vadd.s32 %v1015, %v999
      %v1017 = vadd.s32 %v1015, %v1000
      %v1018 = vadd.s32 %v1015, %v1001
      %v1019 = vadd.s32 %v1015, %v1002
      %v1020 = vadd.s32 %v1015, %v1003
      %v1021 = vadd.s32 %v1015, %v1004
      %v1022 = vadd.s32 %v1015, %v1005
      %v1023 = vadd.s32 %v1015, %v1006
      %v1024 = vadd.s32 %v1015, %v1007
      %v1025 = vadd.s32 %v1015, %v1008
      %v1026 = vadd.s32 %v1015, %v1009
      %v1027 = vadd.s32 %v1015, %v1010
      %v1028 = vadd.s32 %v1015, %v1011
      %v1029 = vadd.s32 %v1015, %v1012
      %v1030 = vadd.s32 %v1015, %v1013
      %v1031 = vadd.s32 %v1015, %v1014
      %vm1032 = vcmp.lt.s32.totalorder %v1016, 8
      %vm1033 = vcmp.lt.s32.totalorder %v1017, 8
      %vm1034 = vcmp.lt.s32.totalorder %v1018, 8
      %vm1035 = vcmp.lt.s32.totalorder %v1019, 8
      %vm1036 = vcmp.lt.s32.totalorder %v1020, 8
      %vm1037 = vcmp.lt.s32.totalorder %v1021, 8
      %vm1038 = vcmp.lt.s32.totalorder %v1022, 8
      %vm1039 = vcmp.lt.s32.totalorder %v1023, 8
      %vm1040 = vcmp.lt.s32.totalorder %v1024, 8
      %vm1041 = vcmp.lt.s32.totalorder %v1025, 8
      %vm1042 = vcmp.lt.s32.totalorder %v1026, 8
      %vm1043 = vcmp.lt.s32.totalorder %v1027, 8
      %vm1044 = vcmp.lt.s32.totalorder %v1028, 8
      %vm1045 = vcmp.lt.s32.totalorder %v1029, 8
      %vm1046 = vcmp.lt.s32.totalorder %v1030, 8
      %vm1047 = vcmp.lt.s32.totalorder %v1031, 8
      %v1048 = vsub.f32 %v891, %v715
      %v1049 = vsub.f32 %v898, %v722
      %v1050 = vsub.f32 %v905, %v729
      %v1051 = vsub.f32 %v912, %v736
      %v1052 = vsub.f32 %v919, %v743
      %v1053 = vsub.f32 %v926, %v750
      %v1054 = vsub.f32 %v933, %v757
      %v1055 = vsub.f32 %v940, %v764
      %v1056 = vsub.f32 %v947, %v771
      %v1057 = vsub.f32 %v954, %v778
      %v1058 = vsub.f32 %v961, %v785
      %v1059 = vsub.f32 %v968, %v792
      %v1060 = vsub.f32 %v975, %v799
      %v1061 = vsub.f32 %v982, %v806
      %v1062 = vsub.f32 %v989, %v813
      %v1063 = vsub.f32 %v996, %v820
      %v1064 = vsub.f32 0.3, %v1048
      %v1065 = vsub.f32 0.3, %v1049
      %v1066 = vsub.f32 0.3, %v1050
      %v1067 = vsub.f32 0.3, %v1051
      %v1068 = vsub.f32 0.3, %v1052
      %v1069 = vsub.f32 0.3, %v1053
      %v1070 = vsub.f32 0.3, %v1054
      %v1071 = vsub.f32 0.3, %v1055
      %v1072 = vsub.f32 0.3, %v1056
      %v1073 = vsub.f32 0.3, %v1057
      %v1074 = vsub.f32 0.3, %v1058
      %v1075 = vsub.f32 0.3, %v1059
      %v1076 = vsub.f32 0.3, %v1060
      %v1077 = vsub.f32 0.3, %v1061
      %v1078 = vsub.f32 0.3, %v1062
      %v1079 = vsub.f32 0.3, %v1063
      %v1080 = vmax.f32 %v1064, 0.0
      %v1081 = vmax.f32 %v1065, 0.0
      %v1082 = vmax.f32 %v1066, 0.0
      %v1083 = vmax.f32 %v1067, 0.0
      %v1084 = vmax.f32 %v1068, 0.0
      %v1085 = vmax.f32 %v1069, 0.0
      %v1086 = vmax.f32 %v1070, 0.0
      %v1087 = vmax.f32 %v1071, 0.0
      %v1088 = vmax.f32 %v1072, 0.0
      %v1089 = vmax.f32 %v1073, 0.0
      %v1090 = vmax.f32 %v1074, 0.0
      %v1091 = vmax.f32 %v1075, 0.0
      %v1092 = vmax.f32 %v1076, 0.0
      %v1093 = vmax.f32 %v1077, 0.0
      %v1094 = vmax.f32 %v1078, 0.0
      %v1095 = vmax.f32 %v1079, 0.0
      %v1096 = vsel %vm1032, %v1080, 0.0
      %v1097 = vsel %vm1033, %v1081, 0.0
      %v1098 = vsel %vm1034, %v1082, 0.0
      %v1099 = vsel %vm1035, %v1083, 0.0
      %v1100 = vsel %vm1036, %v1084, 0.0
      %v1101 = vsel %vm1037, %v1085, 0.0
      %v1102 = vsel %vm1038, %v1086, 0.0
      %v1103 = vsel %vm1039, %v1087, 0.0
      %v1104 = vsel %vm1040, %v1088, 0.0
      %v1105 = vsel %vm1041, %v1089, 0.0
      %v1106 = vsel %vm1042, %v1090, 0.0
      %v1107 = vsel %vm1043, %v1091, 0.0
      %v1108 = vsel %vm1044, %v1092, 0.0
      %v1109 = vsel %vm1045, %v1093, 0.0
      %v1110 = vsel %vm1046, %v1094, 0.0
      %v1111 = vsel %vm1047, %v1095, 0.0
      %vm1112 = vcmp.gt.f32.partialorder %v891, %v715
      %vm1113 = vcmp.gt.f32.partialorder %v898, %v722
      %vm1114 = vcmp.gt.f32.partialorder %v905, %v729
      %vm1115 = vcmp.gt.f32.partialorder %v912, %v736
      %vm1116 = vcmp.gt.f32.partialorder %v919, %v743
      %vm1117 = vcmp.gt.f32.partialorder %v926, %v750
      %vm1118 = vcmp.gt.f32.partialorder %v933, %v757
      %vm1119 = vcmp.gt.f32.partialorder %v940, %v764
      %vm1120 = vcmp.gt.f32.partialorder %v947, %v771
      %vm1121 = vcmp.gt.f32.partialorder %v954, %v778
      %vm1122 = vcmp.gt.f32.partialorder %v961, %v785
      %vm1123 = vcmp.gt.f32.partialorder %v968, %v792
      %vm1124 = vcmp.gt.f32.partialorder %v975, %v799
      %vm1125 = vcmp.gt.f32.partialorder %v982, %v806
      %vm1126 = vcmp.gt.f32.partialorder %v989, %v813
      %vm1127 = vcmp.gt.f32.partialorder %v996, %v820
      %vm1128 = vmand %vm1032, %vm1112
      %vm1129 = vmand %vm1033, %vm1113
      %vm1130 = vmand %vm1034, %vm1114
      %vm1131 = vmand %vm1035, %vm1115
      %vm1132 = vmand %vm1036, %vm1116
      %vm1133 = vmand %vm1037, %vm1117
      %vm1134 = vmand %vm1038, %vm1118
      %vm1135 = vmand %vm1039, %vm1119
      %vm1136 = vmand %vm1040, %vm1120
      %vm1137 = vmand %vm1041, %vm1121
      %vm1138 = vmand %vm1042, %vm1122
      %vm1139 = vmand %vm1043, %vm1123
      %vm1140 = vmand %vm1044, %vm1124
      %vm1141 = vmand %vm1045, %vm1125
      %vm1142 = vmand %vm1046, %vm1126
      %vm1143 = vmand %vm1047, %vm1127
      %v1144 = vsel %vm1128, 1.0, 0.0
      %v1145 = vsel %vm1129, 1.0, 0.0
      %v1146 = vsel %vm1130, 1.0, 0.0
      %v1147 = vsel %vm1131, 1.0, 0.0
      %v1148 = vsel %vm1132, 1.0, 0.0
      %v1149 = vsel %vm1133, 1.0, 0.0
      %v1150 = vsel %vm1134, 1.0, 0.0
      %v1151 = vsel %vm1135, 1.0, 0.0
      %v1152 = vsel %vm1136, 1.0, 0.0
      %v1153 = vsel %vm1137, 1.0, 0.0
      %v1154 = vsel %vm1138, 1.0, 0.0
      %v1155 = vsel %vm1139, 1.0, 0.0
      %v1156 = vsel %vm1140, 1.0, 0.0
      %v1157 = vsel %vm1141, 1.0, 0.0
      %v1158 = vsel %vm1142, 1.0, 0.0
      %v1159 = vsel %vm1143, 1.0, 0.0
      %vm1160 = vcmask 7168
      %v1161 = vsel %vm1160, %v1096, 0.0
      %v1162 = vsel %vm1160, %v1097, 0.0
      %v1163 = vadd.f32 %v1161, %v1162
      %v1164 = vsel %vm1160, %v1098, 0.0
      %v1165 = vadd.f32 %v1163, %v1164
      %v1166 = vsel %vm1160, %v1099, 0.0
      %v1167 = vadd.f32 %v1165, %v1166
      %v1168 = vsel %vm1160, %v1100, 0.0
      %v1169 = vadd.f32 %v1167, %v1168
      %v1170 = vsel %vm1160, %v1101, 0.0
      %v1171 = vadd.f32 %v1169, %v1170
      %v1172 = vsel %vm1160, %v1102, 0.0
      %v1173 = vadd.f32 %v1171, %v1172
      %v1174 = vsel %vm1160, %v1103, 0.0
      %v1175 = vadd.f32 %v1173, %v1174
      %v1176 = vsel %vm1160, %v1104, 0.0
      %v1177 = vadd.f32 %v1175, %v1176
      %v1178 = vsel %vm1160, %v1105, 0.0
      %v1179 = vadd.f32 %v1177, %v1178
      %v1180 = vsel %vm1160, %v1106, 0.0
      %v1181 = vadd.f32 %v1179, %v1180
      %v1182 = vsel %vm1160, %v1107, 0.0
      %v1183 = vadd.f32 %v1181, %v1182
      %v1184 = vsel %vm1160, %v1108, 0.0
      %v1185 = vadd.f32 %v1183, %v1184
      %v1186 = vsel %vm1160, %v1109, 0.0
      %v1187 = vadd.f32 %v1185, %v1186
      %v1188 = vsel %vm1160, %v1110, 0.0
      %v1189 = vadd.f32 %v1187, %v1188
      %v1190 = vsel %vm1160, %v1111, 0.0
      %v1191 = vadd.f32 %v1189, %v1190
      %1192 = vadd.xlane.f32.xlu0 %v1191
      %v1193 = vpop.xlane.xlu0 %1192
      %v1194 = vrot.slane %v1193, 4
      %v1195 = vadd.f32 %v1193, %v1194
      %v1196 = vrot.slane %v1195, 2
      %v1197 = vadd.f32 %v1195, %v1196
      %v1198 = vrot.slane %v1197, 1
      %v1199 = vadd.f32 %v1197, %v1198
      %s1200 = vtos %v1199
      %v1201 = vsel %vm1160, %v1144, 0.0
      %v1202 = vsel %vm1160, %v1145, 0.0
      %v1203 = vadd.f32 %v1201, %v1202
      %v1204 = vsel %vm1160, %v1146, 0.0
      %v1205 = vadd.f32 %v1203, %v1204
      %v1206 = vsel %vm1160, %v1147, 0.0
      %v1207 = vadd.f32 %v1205, %v1206
      %v1208 = vsel %vm1160, %v1148, 0.0
      %v1209 = vadd.f32 %v1207, %v1208
      %v1210 = vsel %vm1160, %v1149, 0.0
      %v1211 = vadd.f32 %v1209, %v1210
      %v1212 = vsel %vm1160, %v1150, 0.0
      %v1213 = vadd.f32 %v1211, %v1212
      %v1214 = vsel %vm1160, %v1151, 0.0
      %v1215 = vadd.f32 %v1213, %v1214
      %v1216 = vsel %vm1160, %v1152, 0.0
      %v1217 = vadd.f32 %v1215, %v1216
      %v1218 = vsel %vm1160, %v1153, 0.0
      %v1219 = vadd.f32 %v1217, %v1218
      %v1220 = vsel %vm1160, %v1154, 0.0
      %v1221 = vadd.f32 %v1219, %v1220
      %v1222 = vsel %vm1160, %v1155, 0.0
      %v1223 = vadd.f32 %v1221, %v1222
      %v1224 = vsel %vm1160, %v1156, 0.0
      %v1225 = vadd.f32 %v1223, %v1224
      %v1226 = vsel %vm1160, %v1157, 0.0
      %v1227 = vadd.f32 %v1225, %v1226
      %v1228 = vsel %vm1160, %v1158, 0.0
      %v1229 = vadd.f32 %v1227, %v1228
      %v1230 = vsel %vm1160, %v1159, 0.0
      %v1231 = vadd.f32 %v1229, %v1230
      %1232 = vadd.xlane.f32.xlu0 %v1231
      %v1233 = vpop.xlane.xlu0 %1232
      %v1234 = vrot.slane %v1233, 4
      %v1235 = vadd.f32 %v1233, %v1234
      %v1236 = vrot.slane %v1235, 2
      %v1237 = vadd.f32 %v1235, %v1236
      %v1238 = vrot.slane %v1237, 1
      %v1239 = vadd.f32 %v1237, %v1238
      %s1240 = vtos %v1239
      %vm1241 = vcmp.eq.s32.totalorder %v999, 0
      %vm1242 = vcmp.eq.s32.totalorder %v999, 1
      %v1243 = vstv %s1240
      %v1244 = vsel %vm1242, %v1243, 0.0
      %v1245 = vstv %s1200
      %v1246 = vsel %vm1241, %v1245, %v1244
      %1247 = vst [vmem:[#allocation5] sm:$0xff] %v1246
    $region41: #{tpu_custom_call.1} parent=1 // pred_fallthru
      _
    // Predicated region
    $region42: #{tpu_custom_call.1} parent=1 // pred_check
      _
    $region43: #{tpu_custom_call.1} parent=1 // pred_check_branch
      %1249 = sbr.rel (0) target = $region45
    $region44: #{tpu_custom_call.1} parent=1 // pred_region
      %s1251 = ssub.s32 128, 128
      %1252 = vsyncadd [#allocation6], %s1251
      %s1254 = sshll.u32 [#allocation5], 4
      %s1255 = int_to_ptr.vmem [resolvable:$true] %s1254
      %1257 = dma.vmem_to_hbm [thread:$0]  %s1255, 128, %s6, [#allocation6]
    $region45: #{tpu_custom_call.1} parent=1 // pred_fallthru
      _
    // Predicated region
    $region46: #{tpu_custom_call.1} parent=1 // pred_check
      _
    $region47: #{tpu_custom_call.1} parent=1 // pred_check_branch
      %1259 = sbr.rel (0) target = $region49
    $region48: #{tpu_custom_call.1} parent=1 // pred_region
      %1260 = dma.done [#allocation6], 128
    $region49: #{tpu_custom_call.1} parent=1 // pred_fallthru
      _
    %1261 = vsyncpa [#allocation6], 1

</llo_original>
